<compile_context>
chip_gen: v7x
topology: tpu7x:2x2x1
jax: 0.10.0
libtpu: 0.0.40
codegen_flags: <defaults>
</compile_context>

<pallas_src>
import math
import functools

import jax
import jax.numpy as jnp
from jax.experimental import pallas as pl
from jax.experimental.pallas import tpu as pltpu


def _block_kernel(num_head, use_tpu_roll,
                  x_ref, cosq_ref, sinq_ref, cosk_ref, sink_ref, maskadd_ref,
                  ln1w_ref, ln1b_ref, wqkv_ref, bqkv_ref, wo_ref, bo_ref,
                  ln2w_ref, ln2b_ref, w1_ref, b1_ref, w2_ref, b2_ref,
                  y_ref, kv_ref):
    G, S, D = x_ref.shape
    H = num_head
    hs = D // H
    R = G * S
    eps = 1e-12
    bf = lambda t: t.astype(jnp.bfloat16)

    x = x_ref[...].reshape(R, D)                       # (R, D) f32

    def layer_norm(v, w, b):
        m = jnp.mean(v, axis=-1, keepdims=True)
        var = jnp.mean((v - m) ** 2, axis=-1, keepdims=True)
        # NOTE: the reference module divides by (variance + eps) with NO sqrt.
        return w * (v - m) / (var + eps) + b

    h = layer_norm(x, ln1w_ref[...], ln1b_ref[...])

    # QKV projection: bf16 MXU operands, f32 accumulation.
    qkv = jnp.dot(bf(h), wqkv_ref[...],
                  preferred_element_type=jnp.float32) + bqkv_ref[...]   # (R, 3D)

    # Lane-dense pre-rotary k/v cache: one contiguous slab store.
    kv_ref[...] = qkv[:, D:3 * D].reshape(G, S, 2 * D)

    # Interleaved-pair RoPE (== complex multiply by freq_cis) with no MXU work:
    #   out = x * cos + pair_swap(x) * sin_signed
    # pair_swap = two lane rolls + lane-parity select (XLU/VPU slots only).
    lane = jax.lax.broadcasted_iota(jnp.int32, (1, 1, D), 2)
    even_lane = (lane % 2) == 0

    def shift_lanes(t, shift):                         # out[..., i] = t[..., i - shift]
        if use_tpu_roll:
            return pltpu.roll(t, shift % D, axis=2)
        return jnp.roll(t, shift, axis=2)              # conservative fallback

    def rope(t2d, cos, sin_signed):
        t = t2d.reshape(G, S, D)
        swapped = jnp.where(even_lane, shift_lanes(t, -1), shift_lanes(t, 1))
        return (t * cos[None] + swapped * sin_signed[None]).reshape(R, D)

    q_r = rope(qkv[:, :D], cosq_ref[...], sinq_ref[...])
    k_r = rope(qkv[:, D:2 * D], cosk_ref[...], sink_ref[...])

    inv_scale = 1.0 / math.sqrt(hs)
    mask_add = maskadd_ref[...]                        # (S, S), 0 / -1e30 additive

    q_rb = bf(q_r)
    k_rb = bf(k_r)
    v_b = bf(qkv[:, 2 * D:3 * D])

    # TODO(synk): for production S tile the key axis with online softmax; for
    #             large H move this loop to an "arbitrary" grid axis or
    #             lax.fori_loop to bound vreg live ranges (with hs >= 128 the
    #             head slices also become 128-lane aligned).
    head_outs = []
    for hd in range(H):
        sl = slice(hd * hs, (hd + 1) * hs)
        q_h = q_rb[:, sl].reshape(G, S, hs)            # (G, S, hs) bf16
        k_h = k_rb[:, sl].reshape(G, S, hs)
        v_h = v_b[:, sl].reshape(G, S, hs)
        s_h = jnp.einsum('gqd,gkd->gqk', q_h, k_h,
                         preferred_element_type=jnp.float32) * inv_scale
        s_h = s_h + mask_add[None]
        s_h = s_h - jnp.max(s_h, axis=-1, keepdims=True)
        e = jnp.exp(s_h)
        probs = e * pl.reciprocal(jnp.sum(e, axis=-1, keepdims=True), approx=True)
        # TODO(synk): attention dropout omitted (eval-mode identity).
        o_h = jnp.einsum('gqk,gkd->gqd', bf(probs), v_h,
                         preferred_element_type=jnp.float32)
        head_outs.append(bf(o_h).reshape(R, hs))

    # Assemble head outputs in registers (no f32 VMEM scratch round-trip).
    attn_heads = jnp.concatenate(head_outs, axis=-1)   # (R, D) bf16
    attn_o = jnp.dot(attn_heads, wo_ref[...],
                     preferred_element_type=jnp.float32) + bo_ref[...]
    x2 = x + attn_o

    h2 = layer_norm(x2, ln2w_ref[...], ln2b_ref[...])
    m1 = jnp.dot(bf(h2), w1_ref[...], preferred_element_type=jnp.float32) + b1_ref[...]
    # tanh-approximation GELU (EUP tanh); reference uses exact erf (~1e-3 dev).
    c = math.sqrt(2.0 / math.pi)
    g = 0.5 * m1 * (1.0 + jnp.tanh(c * (m1 + 0.044715 * m1 * m1 * m1)))
    mlp_o = jnp.dot(bf(g), w2_ref[...], preferred_element_type=jnp.float32) + b2_ref[...]

    y_ref[...] = (x2 + mlp_o).reshape(G, S, D)


def _choose_group(batch, seq, target_rows=512):
    """Divisor G of `batch`: ~target_rows rows (G*S) per step, >=2 grid steps."""
    divisors = [g for g in range(1, batch + 1) if batch % g == 0]
    fitting = [g for g in divisors if g * seq <= target_rows] or [1]
    g = max(fitting)
    if batch // g < 2:                       # keep the "parallel" axis splittable
        smaller = [d for d in divisors if batch // d >= 2]
        if smaller:
            g = max(smaller)
    return g


def _vmem_limit_bytes(G, S, D):
    """Rough VMEM budget: weights/constants (x2 buffers) + activation working set."""
    f32, bf16 = 4, 2
    weights = (D * 3 * D + D * D + D * 4 * D + 4 * D * D) * bf16
    biases = (3 * D + D + 4 * D + D + 4 * D) * f32
    tables = (4 * S * D + S * S) * f32
    io_tiles = (G * S * D + G * S * D + G * S * 2 * D) * f32
    acts = G * S * (16 * D) * f32
    scores = 4 * G * S * S * f32
    est = 2 * (weights + biases + tables + io_tiles) + acts + scores + (4 << 20)
    return int(min(max(est, 32 << 20), 128 << 20))


def _expand_tables(fc, num_head):
    """(S, hs//2) complex -> (S, D) cos and sign-folded sin tables."""
    cos_half = jnp.real(fc).astype(jnp.float32)
    sin_half = jnp.imag(fc).astype(jnp.float32)
    hs = 2 * cos_half.shape[-1]
    cos = jnp.repeat(cos_half, 2, axis=-1)                                   # (S, hs)
    sign = jnp.tile(jnp.array([-1.0, 1.0], jnp.float32), hs // 2)
    sin = jnp.repeat(sin_half, 2, axis=-1) * sign                            # (S, hs)
    return jnp.tile(cos, (1, num_head)), jnp.tile(sin, (1, num_head))        # (S, D)


def rope_block_forward(x, freq_cis_q, freq_cis_k, mask, params, num_head,
                       *, conservative=False):
    """x: (B,S,D) f32; freq_cis_*: (S, head//2) complex64; mask: (S,S) 1/0 causal."""
    B, S, D = x.shape
    H = num_head
    hs = D // H
    G = _choose_group(B, S)

    cos_q, sin_q = _expand_tables(freq_cis_q, H)
    cos_k, sin_k = _expand_tables(freq_cis_k, H)
    mask_add = jnp.where(mask == 0, -1e30, 0.0).astype(jnp.float32)

    row = lambda v: v.reshape(1, -1).astype(jnp.float32)
    wbf = lambda v: v.astype(jnp.bfloat16)

    def batched(shape):
        return pl.BlockSpec(shape, lambda b, _n=len(shape): (b,) + (0,) * (_n - 1))

    def const(shape):
        kw = {}
        if not conservative:
            # grid-invariant input: single buffer (index_map is constant).
            kw["pipeline_mode"] = pl.Buffered(buffer_count=1)
        return pl.BlockSpec(shape, lambda b, _n=len(shape): (0,) * _n, **kw)

    in_specs = [
        batched((G, S, D)),
        const((S, D)), const((S, D)), const((S, D)), const((S, D)),
        const((S, S)),
        const((1, D)), const((1, D)),
        const((D, 3 * D)), const((1, 3 * D)),
        const((D, D)), const((1, D)),
        const((1, D)), const((1, D)),
        const((D, 4 * D)), const((1, 4 * D)),
        const((4 * D, D)), const((1, D)),
    ]
    out_specs = [batched((G, S, D)), batched((G, S, 2 * D))]
    out_shape = (jax.ShapeDtypeStruct((B, S, D), jnp.float32),
                 jax.ShapeDtypeStruct((B, S, 2 * D), jnp.float32))

    kernel = functools.partial(_block_kernel, H, not conservative)
    y, kv = pl.pallas_call(
        kernel,
        grid=(B // G,),
        in_specs=in_specs,
        out_specs=out_specs,
        out_shape=out_shape,
        compiler_params=pltpu.CompilerParams(
            dimension_semantics=("parallel",),
            vmem_limit_bytes=_vmem_limit_bytes(G, S, D)),
    )(
        x.astype(jnp.float32), cos_q, sin_q, cos_k, sin_k, mask_add,
        row(params["ln1_w"]), row(params["ln1_b"]),
        wbf(params["w_qkv"]), row(params["b_qkv"]),
        wbf(params["w_o"]), row(params["b_o"]),
        row(params["ln2_w"]), row(params["ln2_b"]),
        wbf(params["w1"]), row(params["b1"]),
        wbf(params["w2"]), row(params["b2"]),
    )
    # (B, S, 2D) lane-dense slab -> (2, B, H, S, hs), like torch.stack((k, v)).
    prefix_kv = kv.reshape(B, S, 2, H, hs).transpose(2, 0, 3, 1, 4)
    return y, prefix_kv


def rope_block(x, freq_cis_q, freq_cis_k, mask, params, num_head):
    try:
        out = rope_block_forward(x, freq_cis_q, freq_cis_k, mask, params,
                                 num_head, conservative=False)
        jax.block_until_ready(out)
        return out
    except Exception:
        # TODO(synk): pl.Buffered(1) / pltpu.roll rejected by this jax build;
        #             fall back to default double-buffering + jnp.roll swap.
        return rope_block_forward(x, freq_cis_q, freq_cis_k, mask, params,
                                  num_head, conservative=True)


def reference_block(x, freq_cis_q, freq_cis_k, mask, params, num_head):
    """Pure-JAX mirror of the PyTorch module (for verification)."""
    B, S, D = x.shape
    H = num_head
    hs = D // H
    eps = 1e-12

    def layer_norm(v, w, b):
        m = v.mean(-1, keepdims=True)
        var = ((v - m) ** 2).mean(-1, keepdims=True)
        return w * (v - m) / (var + eps) + b

    def rotary(t, fc):                               # t: (B,H,S,hs), fc: (S, hs//2) complex
        tp = t.reshape(t.shape[:-1] + (hs // 2, 2))
        tr, ti = tp[..., 0], tp[..., 1]
        c = jnp.real(fc)[None, None].astype(jnp.float32)
        s = jnp.imag(fc)[None, None].astype(jnp.float32)
        out_r = c * tr - s * ti
        out_i = c * ti + s * tr
        return jnp.stack([out_r, out_i], axis=-1).reshape(t.shape)

    h = layer_norm(x, params["ln1_w"], params["ln1_b"])
    qkv = h @ params["w_qkv"] + params["b_qkv"]
    qkv = qkv.reshape(B, S, 3, H, hs).transpose(2, 0, 3, 1, 4)   # (3, B, H, S, hs)
    q, k, v = qkv[0], qkv[1], qkv[2]
    prefix_kv = jnp.stack([k, v])
    q = rotary(q, freq_cis_q)
    k = rotary(k, freq_cis_k)
    scores = q @ jnp.swapaxes(k, -1, -2) / math.sqrt(hs)
    scores = jnp.where(mask[None, None] == 0, -jnp.finfo(jnp.float32).max, scores)
    probs = jax.nn.softmax(scores, axis=-1)
    attn = jnp.swapaxes(probs @ v, 1, 2).reshape(B, S, D)
    x2 = x + attn @ params["w_o"] + params["b_o"]
    h2 = layer_norm(x2, params["ln2_w"], params["ln2_b"])
    mlp = jax.nn.gelu(h2 @ params["w1"] + params["b1"], approximate=False) @ params["w2"] + params["b2"]
    return x2 + mlp, prefix_kv


if __name__ == "__main__":
    B, S, D, H = 2, 8, 32, 4
    hs = D // H

    key = jax.random.PRNGKey(0)
    ks = jax.random.split(key, 8)
    x = jax.random.normal(ks[0], (B, S, D), jnp.float32)

    params = {
        "ln1_w": jnp.ones((D,), jnp.float32),
        "ln1_b": jnp.zeros((D,), jnp.float32),
        "w_qkv": 0.05 * jax.random.normal(ks[1], (D, 3 * D), jnp.float32),
        "b_qkv": 0.01 * jax.random.normal(ks[2], (3 * D,), jnp.float32),
        "w_o":   0.05 * jax.random.normal(ks[3], (D, D), jnp.float32),
        "b_o":   0.01 * jax.random.normal(ks[4], (D,), jnp.float32),
        "ln2_w": jnp.ones((D,), jnp.float32),
        "ln2_b": jnp.zeros((D,), jnp.float32),
        "w1":    0.05 * jax.random.normal(ks[5], (D, 4 * D), jnp.float32),
        "b1":    0.01 * jax.random.normal(ks[6], (4 * D,), jnp.float32),
        "w2":    0.05 * jax.random.normal(ks[7], (4 * D, D), jnp.float32),
        "b2":    jnp.zeros((D,), jnp.float32),
    }

    # RoPE frequencies: freq_cis[s, j] = exp(i * s * theta_j), theta_j = 10000^(-2j/hs)
    inv_freq = 1.0 / (10000.0 ** (jnp.arange(0, hs, 2, dtype=jnp.float32) / hs))   # (hs//2,)
    angles = jnp.arange(S, dtype=jnp.float32)[:, None] * inv_freq[None, :]         # (S, hs//2)
    freq_cis_q = jnp.cos(angles) + 1j * jnp.sin(angles)
    freq_cis_k = freq_cis_q

    mask = jnp.tril(jnp.ones((S, S), jnp.float32))   # causal mask (mask==0 -> -inf fill)

    y, prefix_kv = rope_block(x, freq_cis_q, freq_cis_k, mask, params, H)
    jax.block_until_ready((y, prefix_kv))

    y_ref, kv_ref = reference_block(x, freq_cis_q, freq_cis_k, mask, params, H)
    assert y.shape == (B, S, D)
    assert prefix_kv.shape == (2, B, H, S, hs)
    assert float(jnp.max(jnp.abs(y - y_ref))) < 5e-2
    assert float(jnp.max(jnp.abs(prefix_kv - kv_ref))) < 5e-2
    print("KERNEL_OK")
</pallas_src>

<mosaic_0001>
module attributes {stable_mosaic.version = 11 : i64} {
  func.func @_block_kernel(%arg0: i32, %arg1: memref<1x8x32xf32, #tpu.memory_space<vmem>>, %arg2: memref<8x32xf32, #tpu.memory_space<vmem>>, %arg3: memref<8x32xf32, #tpu.memory_space<vmem>>, %arg4: memref<8x32xf32, #tpu.memory_space<vmem>>, %arg5: memref<8x32xf32, #tpu.memory_space<vmem>>, %arg6: memref<8x8xf32, #tpu.memory_space<vmem>>, %arg7: memref<1x32xf32, #tpu.memory_space<vmem>>, %arg8: memref<1x32xf32, #tpu.memory_space<vmem>>, %arg9: memref<32x96xbf16, #tpu.memory_space<vmem>>, %arg10: memref<1x96xf32, #tpu.memory_space<vmem>>, %arg11: memref<32x32xbf16, #tpu.memory_space<vmem>>, %arg12: memref<1x32xf32, #tpu.memory_space<vmem>>, %arg13: memref<1x32xf32, #tpu.memory_space<vmem>>, %arg14: memref<1x32xf32, #tpu.memory_space<vmem>>, %arg15: memref<32x128xbf16, #tpu.memory_space<vmem>>, %arg16: memref<1x128xf32, #tpu.memory_space<vmem>>, %arg17: memref<128x32xbf16, #tpu.memory_space<vmem>>, %arg18: memref<1x32xf32, #tpu.memory_space<vmem>>, %arg19: memref<1x8x32xf32, #tpu.memory_space<vmem>>, %arg20: memref<1x8x64xf32, #tpu.memory_space<vmem>>) attributes {dimension_semantics = [#tpu.dimension_semantics<parallel>], iteration_bounds = array<i64: 2>, scalar_prefetch = 0 : i64, scratch_operands = 0 : i64, tpu.core_type = #tpu.core_type<tc>, window_params = [{transform_indices = @transform_0, window_bounds = array<i64: 1, 8, 32>}, {pipeline_mode = #tpu.pipeline_mode<synchronous>, transform_indices = @transform_1, window_bounds = array<i64: 8, 32>}, {pipeline_mode = #tpu.pipeline_mode<synchronous>, transform_indices = @transform_2, window_bounds = array<i64: 8, 32>}, {pipeline_mode = #tpu.pipeline_mode<synchronous>, transform_indices = @transform_3, window_bounds = array<i64: 8, 32>}, {pipeline_mode = #tpu.pipeline_mode<synchronous>, transform_indices = @transform_4, window_bounds = array<i64: 8, 32>}, {pipeline_mode = #tpu.pipeline_mode<synchronous>, transform_indices = @transform_5, window_bounds = array<i64: 8, 8>}, {pipeline_mode = #tpu.pipeline_mode<synchronous>, transform_indices = @transform_6, window_bounds = array<i64: 1, 32>}, {pipeline_mode = #tpu.pipeline_mode<synchronous>, transform_indices = @transform_7, window_bounds = array<i64: 1, 32>}, {pipeline_mode = #tpu.pipeline_mode<synchronous>, transform_indices = @transform_8, window_bounds = array<i64: 32, 96>}, {pipeline_mode = #tpu.pipeline_mode<synchronous>, transform_indices = @transform_9, window_bounds = array<i64: 1, 96>}, {pipeline_mode = #tpu.pipeline_mode<synchronous>, transform_indices = @transform_10, window_bounds = array<i64: 32, 32>}, {pipeline_mode = #tpu.pipeline_mode<synchronous>, transform_indices = @transform_11, window_bounds = array<i64: 1, 32>}, {pipeline_mode = #tpu.pipeline_mode<synchronous>, transform_indices = @transform_12, window_bounds = array<i64: 1, 32>}, {pipeline_mode = #tpu.pipeline_mode<synchronous>, transform_indices = @transform_13, window_bounds = array<i64: 1, 32>}, {pipeline_mode = #tpu.pipeline_mode<synchronous>, transform_indices = @transform_14, window_bounds = array<i64: 32, 128>}, {pipeline_mode = #tpu.pipeline_mode<synchronous>, transform_indices = @transform_15, window_bounds = array<i64: 1, 128>}, {pipeline_mode = #tpu.pipeline_mode<synchronous>, transform_indices = @transform_16, window_bounds = array<i64: 128, 32>}, {pipeline_mode = #tpu.pipeline_mode<synchronous>, transform_indices = @transform_17, window_bounds = array<i64: 1, 32>}, {transform_indices = @transform_18, window_bounds = array<i64: 1, 8, 32>}, {transform_indices = @transform_19, window_bounds = array<i64: 1, 8, 64>}]} {
    %c0 = arith.constant 0 : index
    %c0_0 = arith.constant 0 : index
    %c0_1 = arith.constant 0 : index
    %0 = vector.load %arg1[%c0, %c0_0, %c0_1] : memref<1x8x32xf32, #tpu.memory_space<vmem>>, vector<1x8x32xf32>
    %1 = vector.shape_cast %0 : vector<1x8x32xf32> to vector<8x32xf32>
    %c0_2 = arith.constant 0 : index
    %c0_3 = arith.constant 0 : index
    %2 = vector.load %arg7[%c0_2, %c0_3] : memref<1x32xf32, #tpu.memory_space<vmem>>, vector<1x32xf32>
    %c0_4 = arith.constant 0 : index
    %c0_5 = arith.constant 0 : index
    %3 = vector.load %arg8[%c0_4, %c0_5] : memref<1x32xf32, #tpu.memory_space<vmem>>, vector<1x32xf32>
    %cst = arith.constant dense<0.000000e+00> : vector<8xf32>
    %4 = vector.multi_reduction <add>, %1, %cst [1] : vector<8x32xf32> to vector<8xf32>
    %5 = vector.shape_cast %4 : vector<8xf32> to vector<8x1xf32>
    %cst_6 = arith.constant 3.200000e+01 : f32
    %6 = vector.broadcast %cst_6 : f32 to vector<8x1xf32>
    %7 = arith.divf %5, %6 : vector<8x1xf32>
    %8 = vector.broadcast %7 : vector<8x1xf32> to vector<8x32xf32>
    %9 = arith.subf %1, %8 : vector<8x32xf32>
    %10 = arith.mulf %9, %9 : vector<8x32xf32>
    %cst_7 = arith.constant dense<0.000000e+00> : vector<8xf32>
    %11 = vector.multi_reduction <add>, %10, %cst_7 [1] : vector<8x32xf32> to vector<8xf32>
    %12 = vector.shape_cast %11 : vector<8xf32> to vector<8x1xf32>
    %cst_8 = arith.constant 3.200000e+01 : f32
    %13 = vector.broadcast %cst_8 : f32 to vector<8x1xf32>
    %14 = arith.divf %12, %13 : vector<8x1xf32>
    %15 = vector.broadcast %7 : vector<8x1xf32> to vector<8x32xf32>
    %16 = arith.subf %1, %15 : vector<8x32xf32>
    %17 = vector.broadcast %2 : vector<1x32xf32> to vector<8x32xf32>
    %18 = arith.mulf %17, %16 : vector<8x32xf32>
    %cst_9 = arith.constant 9.99999996E-13 : f32
    %19 = vector.broadcast %cst_9 : f32 to vector<8x1xf32>
    %20 = arith.addf %14, %19 : vector<8x1xf32>
    %21 = vector.broadcast %20 : vector<8x1xf32> to vector<8x32xf32>
    %22 = arith.divf %18, %21 : vector<8x32xf32>
    %23 = vector.broadcast %3 : vector<1x32xf32> to vector<8x32xf32>
    %24 = arith.addf %22, %23 : vector<8x32xf32>
    %25 = arith.truncf %24 : vector<8x32xf32> to vector<8x32xbf16>
    %c0_10 = arith.constant 0 : index
    %c0_11 = arith.constant 0 : index
    %26 = vector.load %arg9[%c0_10, %c0_11] : memref<32x96xbf16, #tpu.memory_space<vmem>>, vector<32x96xbf16>
    %cst_12 = arith.constant dense<0.000000e+00> : vector<8x96xf32>
    %27 = tpu.matmul %25, %26, %cst_12 {dimension_numbers = #tpu.dot_dimension_numbers<[1], [0], [0], [1], [0, 0, 1, 1], [], []>} : vector<8x32xbf16>, vector<32x96xbf16>, vector<8x96xf32> -> vector<8x96xf32>
    %c0_13 = arith.constant 0 : index
    %c0_14 = arith.constant 0 : index
    %28 = vector.load %arg10[%c0_13, %c0_14] : memref<1x96xf32, #tpu.memory_space<vmem>>, vector<1x96xf32>
    %29 = vector.broadcast %28 : vector<1x96xf32> to vector<8x96xf32>
    %30 = arith.addf %27, %29 : vector<8x96xf32>
    %31 = vector.extract_strided_slice %30 {offsets = [0, 32], sizes = [8, 64], strides = [1, 1]} : vector<8x96xf32> to vector<8x64xf32>
    %32 = vector.shape_cast %31 : vector<8x64xf32> to vector<1x8x64xf32>
    %c0_15 = arith.constant 0 : index
    %c0_16 = arith.constant 0 : index
    %c0_17 = arith.constant 0 : index
    %33 = vector.load %arg20[%c0_15, %c0_16, %c0_17] : memref<1x8x64xf32, #tpu.memory_space<vmem>>, vector<1x8x64xf32>
    tpu.vector_store %arg20[%c0_15, %c0_16, %c0_17], %32 {strides = array<i32>} : memref<1x8x64xf32, #tpu.memory_space<vmem>>, vector<1x8x64xf32>,
    %34 = tpu.iota {dimensions = array<i32: 2>} : vector<1x1x32xi32>
    %c2_i32 = arith.constant 2 : i32
    %c0_i32 = arith.constant 0 : i32
    %35 = arith.cmpi eq, %c2_i32, %c0_i32 : i32
    %c1_i32 = arith.constant 1 : i32
    %36 = arith.select %35, %c1_i32, %c2_i32 : i32
    %37 = vector.broadcast %36 : i32 to vector<1x1x32xi32>
    %38 = arith.remsi %34, %37 : vector<1x1x32xi32>
    %c0_i32_18 = arith.constant 0 : i32
    %39 = vector.broadcast %c0_i32_18 : i32 to vector<1x1x32xi32>
    %40 = arith.cmpi ne, %38, %39 : vector<1x1x32xi32>
    %c0_i32_19 = arith.constant 0 : i32
    %41 = vector.broadcast %c0_i32_19 : i32 to vector<1x1x32xi32>
    %42 = arith.cmpi slt, %38, %41 : vector<1x1x32xi32>
    %c0_i32_20 = arith.constant 0 : i32
    %43 = arith.cmpi slt, %36, %c0_i32_20 : i32
    %44 = vector.broadcast %43 : i1 to vector<1x1x32xi1>
    %45 = vector.broadcast %44 : vector<1x1x32xi1> to vector<1x1x32xi1>
    %46 = arith.xori %42, %45 : vector<1x1x32xi1>
    %47 = arith.andi %46, %40 : vector<1x1x32xi1>
    %48 = vector.broadcast %36 : i32 to vector<1x1x32xi32>
    %49 = arith.addi %38, %48 : vector<1x1x32xi32>
    %50 = arith.select %47, %49, %38 : vector<1x1x32xi1>, vector<1x1x32xi32>
    %c0_i32_21 = arith.constant 0 : i32
    %51 = vector.broadcast %c0_i32_21 : i32 to vector<1x1x32xi32>
    %52 = arith.cmpi eq, %50, %51 : vector<1x1x32xi32>
    %53 = vector.extract_strided_slice %30 {offsets = [0, 0], sizes = [8, 32], strides = [1, 1]} : vector<8x96xf32> to vector<8x32xf32>
    %c0_22 = arith.constant 0 : index
    %c0_23 = arith.constant 0 : index
    %54 = vector.load %arg2[%c0_22, %c0_23] : memref<8x32xf32, #tpu.memory_space<vmem>>, vector<8x32xf32>
    %c0_24 = arith.constant 0 : index
    %c0_25 = arith.constant 0 : index
    %55 = vector.load %arg3[%c0_24, %c0_25] : memref<8x32xf32, #tpu.memory_space<vmem>>, vector<8x32xf32>
    %56 = vector.shape_cast %53 : vector<8x32xf32> to vector<1x8x32xf32>
    %c31_i32 = arith.constant 31 : i32
    %57 = tpu.dynamic_rotate %56 by %c31_i32 dim 2 : vector<1x8x32xf32>, i32 -> vector<1x8x32xf32>
    %c1_i32_26 = arith.constant 1 : i32
    %58 = tpu.dynamic_rotate %56 by %c1_i32_26 dim 2 : vector<1x8x32xf32>, i32 -> vector<1x8x32xf32>
    %59 = vector.shape_cast %52 : vector<1x1x32xi1> to vector<1x1x32xi1>
    %60 = vector.broadcast %59 : vector<1x1x32xi1> to vector<1x8x32xi1>
    %61 = arith.select %60, %57, %58 : vector<1x8x32xi1>, vector<1x8x32xf32>
    %62 = vector.shape_cast %54 : vector<8x32xf32> to vector<1x8x32xf32>
    %63 = arith.mulf %56, %62 : vector<1x8x32xf32>
    %64 = vector.shape_cast %55 : vector<8x32xf32> to vector<1x8x32xf32>
    %65 = arith.mulf %61, %64 : vector<1x8x32xf32>
    %66 = arith.addf %63, %65 : vector<1x8x32xf32>
    %67 = vector.shape_cast %66 : vector<1x8x32xf32> to vector<8x32xf32>
    %68 = vector.extract_strided_slice %30 {offsets = [0, 32], sizes = [8, 32], strides = [1, 1]} : vector<8x96xf32> to vector<8x32xf32>
    %c0_27 = arith.constant 0 : index
    %c0_28 = arith.constant 0 : index
    %69 = vector.load %arg4[%c0_27, %c0_28] : memref<8x32xf32, #tpu.memory_space<vmem>>, vector<8x32xf32>
    %c0_29 = arith.constant 0 : index
    %c0_30 = arith.constant 0 : index
    %70 = vector.load %arg5[%c0_29, %c0_30] : memref<8x32xf32, #tpu.memory_space<vmem>>, vector<8x32xf32>
    %71 = vector.shape_cast %68 : vector<8x32xf32> to vector<1x8x32xf32>
    %c31_i32_31 = arith.constant 31 : i32
    %72 = tpu.dynamic_rotate %71 by %c31_i32_31 dim 2 : vector<1x8x32xf32>, i32 -> vector<1x8x32xf32>
    %c1_i32_32 = arith.constant 1 : i32
    %73 = tpu.dynamic_rotate %71 by %c1_i32_32 dim 2 : vector<1x8x32xf32>, i32 -> vector<1x8x32xf32>
    %74 = vector.shape_cast %52 : vector<1x1x32xi1> to vector<1x1x32xi1>
    %75 = vector.broadcast %74 : vector<1x1x32xi1> to vector<1x8x32xi1>
    %76 = arith.select %75, %72, %73 : vector<1x8x32xi1>, vector<1x8x32xf32>
    %77 = vector.shape_cast %69 : vector<8x32xf32> to vector<1x8x32xf32>
    %78 = arith.mulf %71, %77 : vector<1x8x32xf32>
    %79 = vector.shape_cast %70 : vector<8x32xf32> to vector<1x8x32xf32>
    %80 = arith.mulf %76, %79 : vector<1x8x32xf32>
    %81 = arith.addf %78, %80 : vector<1x8x32xf32>
    %82 = vector.shape_cast %81 : vector<1x8x32xf32> to vector<8x32xf32>
    %c0_33 = arith.constant 0 : index
    %c0_34 = arith.constant 0 : index
    %83 = vector.load %arg6[%c0_33, %c0_34] : memref<8x8xf32, #tpu.memory_space<vmem>>, vector<8x8xf32>
    %84 = arith.truncf %67 : vector<8x32xf32> to vector<8x32xbf16>
    %85 = arith.truncf %82 : vector<8x32xf32> to vector<8x32xbf16>
    %86 = vector.extract_strided_slice %30 {offsets = [0, 64], sizes = [8, 32], strides = [1, 1]} : vector<8x96xf32> to vector<8x32xf32>
    %87 = arith.truncf %86 : vector<8x32xf32> to vector<8x32xbf16>
    %88 = vector.extract_strided_slice %84 {offsets = [0, 0], sizes = [8, 8], strides = [1, 1]} : vector<8x32xbf16> to vector<8x8xbf16>
    %89 = vector.shape_cast %88 : vector<8x8xbf16> to vector<1x8x8xbf16>
    %90 = vector.extract_strided_slice %85 {offsets = [0, 0], sizes = [8, 8], strides = [1, 1]} : vector<8x32xbf16> to vector<8x8xbf16>
    %91 = vector.shape_cast %90 : vector<8x8xbf16> to vector<1x8x8xbf16>
    %92 = vector.extract_strided_slice %87 {offsets = [0, 0], sizes = [8, 8], strides = [1, 1]} : vector<8x32xbf16> to vector<8x8xbf16>
    %93 = vector.shape_cast %92 : vector<8x8xbf16> to vector<1x8x8xbf16>
    "tpu.trace_start"() <{level = 10 : i32, message = "gqd,gkd->gqk"}> : () -> ()
    %cst_35 = arith.constant dense<0.000000e+00> : vector<1x8x8xf32>
    %94 = tpu.matmul %89, %91, %cst_35 {dimension_numbers = #tpu.dot_dimension_numbers<[2], [2], [1], [1], [0, 0, 0, 1, 1, 1], [0], [0]>} : vector<1x8x8xbf16>, vector<1x8x8xbf16>, vector<1x8x8xf32> -> vector<1x8x8xf32>
    "tpu.trace_stop"() : () -> ()
    %cst_36 = arith.constant 0.353553385 : f32
    %95 = vector.broadcast %cst_36 : f32 to vector<1x8x8xf32>
    %96 = arith.mulf %94, %95 : vector<1x8x8xf32>
    %97 = vector.shape_cast %83 : vector<8x8xf32> to vector<1x8x8xf32>
    %98 = arith.addf %96, %97 : vector<1x8x8xf32>
    %cst_37 = arith.constant dense<0xFF800000> : vector<1x8xf32>
    %99 = vector.multi_reduction <maximumf>, %98, %cst_37 [2] : vector<1x8x8xf32> to vector<1x8xf32>
    %100 = vector.shape_cast %99 : vector<1x8xf32> to vector<1x8x1xf32>
    %101 = vector.broadcast %100 : vector<1x8x1xf32> to vector<1x8x8xf32>
    %102 = arith.subf %98, %101 : vector<1x8x8xf32>
    %103 = math.exp %102 : vector<1x8x8xf32>
    %cst_38 = arith.constant dense<0.000000e+00> : vector<1x8xf32>
    %104 = vector.multi_reduction <add>, %103, %cst_38 [2] : vector<1x8x8xf32> to vector<1x8xf32>
    %105 = vector.shape_cast %104 : vector<1x8xf32> to vector<1x8x1xf32>
    %106 = tpu.reciprocal %105 {approx = true} : vector<1x8x1xf32> -> vector<1x8x1xf32>
    %107 = vector.broadcast %106 : vector<1x8x1xf32> to vector<1x8x8xf32>
    %108 = arith.mulf %103, %107 : vector<1x8x8xf32>
    %109 = arith.truncf %108 : vector<1x8x8xf32> to vector<1x8x8xbf16>
    "tpu.trace_start"() <{level = 10 : i32, message = "gqk,gkd->gqd"}> : () -> ()
    %cst_39 = arith.constant dense<0.000000e+00> : vector<1x8x8xf32>
    %110 = tpu.matmul %109, %93, %cst_39 {dimension_numbers = #tpu.dot_dimension_numbers<[2], [1], [1], [2], [0, 0, 0, 1, 1, 2], [0], [0]>} : vector<1x8x8xbf16>, vector<1x8x8xbf16>, vector<1x8x8xf32> -> vector<1x8x8xf32>
    "tpu.trace_stop"() : () -> ()
    %111 = arith.truncf %110 : vector<1x8x8xf32> to vector<1x8x8xbf16>
    %112 = vector.shape_cast %111 : vector<1x8x8xbf16> to vector<8x8xbf16>
    %113 = vector.extract_strided_slice %84 {offsets = [0, 8], sizes = [8, 8], strides = [1, 1]} : vector<8x32xbf16> to vector<8x8xbf16>
    %114 = vector.shape_cast %113 : vector<8x8xbf16> to vector<1x8x8xbf16>
    %115 = vector.extract_strided_slice %85 {offsets = [0, 8], sizes = [8, 8], strides = [1, 1]} : vector<8x32xbf16> to vector<8x8xbf16>
    %116 = vector.shape_cast %115 : vector<8x8xbf16> to vector<1x8x8xbf16>
    %117 = vector.extract_strided_slice %87 {offsets = [0, 8], sizes = [8, 8], strides = [1, 1]} : vector<8x32xbf16> to vector<8x8xbf16>
    %118 = vector.shape_cast %117 : vector<8x8xbf16> to vector<1x8x8xbf16>
    "tpu.trace_start"() <{level = 10 : i32, message = "gqd,gkd->gqk"}> : () -> ()
    %cst_40 = arith.constant dense<0.000000e+00> : vector<1x8x8xf32>
    %119 = tpu.matmul %114, %116, %cst_40 {dimension_numbers = #tpu.dot_dimension_numbers<[2], [2], [1], [1], [0, 0, 0, 1, 1, 1], [0], [0]>} : vector<1x8x8xbf16>, vector<1x8x8xbf16>, vector<1x8x8xf32> -> vector<1x8x8xf32>
    "tpu.trace_stop"() : () -> ()
    %cst_41 = arith.constant 0.353553385 : f32
    %120 = vector.broadcast %cst_41 : f32 to vector<1x8x8xf32>
    %121 = arith.mulf %119, %120 : vector<1x8x8xf32>
    %122 = vector.shape_cast %83 : vector<8x8xf32> to vector<1x8x8xf32>
    %123 = arith.addf %121, %122 : vector<1x8x8xf32>
    %cst_42 = arith.constant dense<0xFF800000> : vector<1x8xf32>
    %124 = vector.multi_reduction <maximumf>, %123, %cst_42 [2] : vector<1x8x8xf32> to vector<1x8xf32>
    %125 = vector.shape_cast %124 : vector<1x8xf32> to vector<1x8x1xf32>
    %126 = vector.broadcast %125 : vector<1x8x1xf32> to vector<1x8x8xf32>
    %127 = arith.subf %123, %126 : vector<1x8x8xf32>
    %128 = math.exp %127 : vector<1x8x8xf32>
    %cst_43 = arith.constant dense<0.000000e+00> : vector<1x8xf32>
    %129 = vector.multi_reduction <add>, %128, %cst_43 [2] : vector<1x8x8xf32> to vector<1x8xf32>
    %130 = vector.shape_cast %129 : vector<1x8xf32> to vector<1x8x1xf32>
    %131 = tpu.reciprocal %130 {approx = true} : vector<1x8x1xf32> -> vector<1x8x1xf32>
    %132 = vector.broadcast %131 : vector<1x8x1xf32> to vector<1x8x8xf32>
    %133 = arith.mulf %128, %132 : vector<1x8x8xf32>
    %134 = arith.truncf %133 : vector<1x8x8xf32> to vector<1x8x8xbf16>
    "tpu.trace_start"() <{level = 10 : i32, message = "gqk,gkd->gqd"}> : () -> ()
    %cst_44 = arith.constant dense<0.000000e+00> : vector<1x8x8xf32>
    %135 = tpu.matmul %134, %118, %cst_44 {dimension_numbers = #tpu.dot_dimension_numbers<[2], [1], [1], [2], [0, 0, 0, 1, 1, 2], [0], [0]>} : vector<1x8x8xbf16>, vector<1x8x8xbf16>, vector<1x8x8xf32> -> vector<1x8x8xf32>
    "tpu.trace_stop"() : () -> ()
    %136 = arith.truncf %135 : vector<1x8x8xf32> to vector<1x8x8xbf16>
    %137 = vector.shape_cast %136 : vector<1x8x8xbf16> to vector<8x8xbf16>
    %138 = vector.extract_strided_slice %84 {offsets = [0, 16], sizes = [8, 8], strides = [1, 1]} : vector<8x32xbf16> to vector<8x8xbf16>
    %139 = vector.shape_cast %138 : vector<8x8xbf16> to vector<1x8x8xbf16>
    %140 = vector.extract_strided_slice %85 {offsets = [0, 16], sizes = [8, 8], strides = [1, 1]} : vector<8x32xbf16> to vector<8x8xbf16>
    %141 = vector.shape_cast %140 : vector<8x8xbf16> to vector<1x8x8xbf16>
    %142 = vector.extract_strided_slice %87 {offsets = [0, 16], sizes = [8, 8], strides = [1, 1]} : vector<8x32xbf16> to vector<8x8xbf16>
    %143 = vector.shape_cast %142 : vector<8x8xbf16> to vector<1x8x8xbf16>
    "tpu.trace_start"() <{level = 10 : i32, message = "gqd,gkd->gqk"}> : () -> ()
    %cst_45 = arith.constant dense<0.000000e+00> : vector<1x8x8xf32>
    %144 = tpu.matmul %139, %141, %cst_45 {dimension_numbers = #tpu.dot_dimension_numbers<[2], [2], [1], [1], [0, 0, 0, 1, 1, 1], [0], [0]>} : vector<1x8x8xbf16>, vector<1x8x8xbf16>, vector<1x8x8xf32> -> vector<1x8x8xf32>
    "tpu.trace_stop"() : () -> ()
    %cst_46 = arith.constant 0.353553385 : f32
    %145 = vector.broadcast %cst_46 : f32 to vector<1x8x8xf32>
    %146 = arith.mulf %144, %145 : vector<1x8x8xf32>
    %147 = vector.shape_cast %83 : vector<8x8xf32> to vector<1x8x8xf32>
    %148 = arith.addf %146, %147 : vector<1x8x8xf32>
    %cst_47 = arith.constant dense<0xFF800000> : vector<1x8xf32>
    %149 = vector.multi_reduction <maximumf>, %148, %cst_47 [2] : vector<1x8x8xf32> to vector<1x8xf32>
    %150 = vector.shape_cast %149 : vector<1x8xf32> to vector<1x8x1xf32>
    %151 = vector.broadcast %150 : vector<1x8x1xf32> to vector<1x8x8xf32>
    %152 = arith.subf %148, %151 : vector<1x8x8xf32>
    %153 = math.exp %152 : vector<1x8x8xf32>
    %cst_48 = arith.constant dense<0.000000e+00> : vector<1x8xf32>
    %154 = vector.multi_reduction <add>, %153, %cst_48 [2] : vector<1x8x8xf32> to vector<1x8xf32>
    %155 = vector.shape_cast %154 : vector<1x8xf32> to vector<1x8x1xf32>
    %156 = tpu.reciprocal %155 {approx = true} : vector<1x8x1xf32> -> vector<1x8x1xf32>
    %157 = vector.broadcast %156 : vector<1x8x1xf32> to vector<1x8x8xf32>
    %158 = arith.mulf %153, %157 : vector<1x8x8xf32>
    %159 = arith.truncf %158 : vector<1x8x8xf32> to vector<1x8x8xbf16>
    "tpu.trace_start"() <{level = 10 : i32, message = "gqk,gkd->gqd"}> : () -> ()
    %cst_49 = arith.constant dense<0.000000e+00> : vector<1x8x8xf32>
    %160 = tpu.matmul %159, %143, %cst_49 {dimension_numbers = #tpu.dot_dimension_numbers<[2], [1], [1], [2], [0, 0, 0, 1, 1, 2], [0], [0]>} : vector<1x8x8xbf16>, vector<1x8x8xbf16>, vector<1x8x8xf32> -> vector<1x8x8xf32>
    "tpu.trace_stop"() : () -> ()
    %161 = arith.truncf %160 : vector<1x8x8xf32> to vector<1x8x8xbf16>
    %162 = vector.shape_cast %161 : vector<1x8x8xbf16> to vector<8x8xbf16>
    %163 = vector.extract_strided_slice %84 {offsets = [0, 24], sizes = [8, 8], strides = [1, 1]} : vector<8x32xbf16> to vector<8x8xbf16>
    %164 = vector.shape_cast %163 : vector<8x8xbf16> to vector<1x8x8xbf16>
    %165 = vector.extract_strided_slice %85 {offsets = [0, 24], sizes = [8, 8], strides = [1, 1]} : vector<8x32xbf16> to vector<8x8xbf16>
    %166 = vector.shape_cast %165 : vector<8x8xbf16> to vector<1x8x8xbf16>
    %167 = vector.extract_strided_slice %87 {offsets = [0, 24], sizes = [8, 8], strides = [1, 1]} : vector<8x32xbf16> to vector<8x8xbf16>
    %168 = vector.shape_cast %167 : vector<8x8xbf16> to vector<1x8x8xbf16>
    "tpu.trace_start"() <{level = 10 : i32, message = "gqd,gkd->gqk"}> : () -> ()
    %cst_50 = arith.constant dense<0.000000e+00> : vector<1x8x8xf32>
    %169 = tpu.matmul %164, %166, %cst_50 {dimension_numbers = #tpu.dot_dimension_numbers<[2], [2], [1], [1], [0, 0, 0, 1, 1, 1], [0], [0]>} : vector<1x8x8xbf16>, vector<1x8x8xbf16>, vector<1x8x8xf32> -> vector<1x8x8xf32>
    "tpu.trace_stop"() : () -> ()
    %cst_51 = arith.constant 0.353553385 : f32
    %170 = vector.broadcast %cst_51 : f32 to vector<1x8x8xf32>
    %171 = arith.mulf %169, %170 : vector<1x8x8xf32>
    %172 = vector.shape_cast %83 : vector<8x8xf32> to vector<1x8x8xf32>
    %173 = arith.addf %171, %172 : vector<1x8x8xf32>
    %cst_52 = arith.constant dense<0xFF800000> : vector<1x8xf32>
    %174 = vector.multi_reduction <maximumf>, %173, %cst_52 [2] : vector<1x8x8xf32> to vector<1x8xf32>
    %175 = vector.shape_cast %174 : vector<1x8xf32> to vector<1x8x1xf32>
    %176 = vector.broadcast %175 : vector<1x8x1xf32> to vector<1x8x8xf32>
    %177 = arith.subf %173, %176 : vector<1x8x8xf32>
    %178 = math.exp %177 : vector<1x8x8xf32>
    %cst_53 = arith.constant dense<0.000000e+00> : vector<1x8xf32>
    %179 = vector.multi_reduction <add>, %178, %cst_53 [2] : vector<1x8x8xf32> to vector<1x8xf32>
    %180 = vector.shape_cast %179 : vector<1x8xf32> to vector<1x8x1xf32>
    %181 = tpu.reciprocal %180 {approx = true} : vector<1x8x1xf32> -> vector<1x8x1xf32>
    %182 = vector.broadcast %181 : vector<1x8x1xf32> to vector<1x8x8xf32>
    %183 = arith.mulf %178, %182 : vector<1x8x8xf32>
    %184 = arith.truncf %183 : vector<1x8x8xf32> to vector<1x8x8xbf16>
    "tpu.trace_start"() <{level = 10 : i32, message = "gqk,gkd->gqd"}> : () -> ()
    %cst_54 = arith.constant dense<0.000000e+00> : vector<1x8x8xf32>
    %185 = tpu.matmul %184, %168, %cst_54 {dimension_numbers = #tpu.dot_dimension_numbers<[2], [1], [1], [2], [0, 0, 0, 1, 1, 2], [0], [0]>} : vector<1x8x8xbf16>, vector<1x8x8xbf16>, vector<1x8x8xf32> -> vector<1x8x8xf32>
    "tpu.trace_stop"() : () -> ()
    %186 = arith.truncf %185 : vector<1x8x8xf32> to vector<1x8x8xbf16>
    %187 = vector.shape_cast %186 : vector<1x8x8xbf16> to vector<8x8xbf16>
    %188 = tpu.concatenate %112, %137, %162, %187 in 1 : vector<8x8xbf16>, vector<8x8xbf16>, vector<8x8xbf16>, vector<8x8xbf16> -> vector<8x32xbf16>
    %c0_55 = arith.constant 0 : index
    %c0_56 = arith.constant 0 : index
    %189 = vector.load %arg11[%c0_55, %c0_56] : memref<32x32xbf16, #tpu.memory_space<vmem>>, vector<32x32xbf16>
    %cst_57 = arith.constant dense<0.000000e+00> : vector<8x32xf32>
    %190 = tpu.matmul %188, %189, %cst_57 {dimension_numbers = #tpu.dot_dimension_numbers<[1], [0], [0], [1], [0, 0, 1, 1], [], []>} : vector<8x32xbf16>, vector<32x32xbf16>, vector<8x32xf32> -> vector<8x32xf32>
    %c0_58 = arith.constant 0 : index
    %c0_59 = arith.constant 0 : index
    %191 = vector.load %arg12[%c0_58, %c0_59] : memref<1x32xf32, #tpu.memory_space<vmem>>, vector<1x32xf32>
    %192 = vector.broadcast %191 : vector<1x32xf32> to vector<8x32xf32>
    %193 = arith.addf %190, %192 : vector<8x32xf32>
    %194 = arith.addf %1, %193 : vector<8x32xf32>
    %c0_60 = arith.constant 0 : index
    %c0_61 = arith.constant 0 : index
    %195 = vector.load %arg13[%c0_60, %c0_61] : memref<1x32xf32, #tpu.memory_space<vmem>>, vector<1x32xf32>
    %c0_62 = arith.constant 0 : index
    %c0_63 = arith.constant 0 : index
    %196 = vector.load %arg14[%c0_62, %c0_63] : memref<1x32xf32, #tpu.memory_space<vmem>>, vector<1x32xf32>
    %cst_64 = arith.constant dense<0.000000e+00> : vector<8xf32>
    %197 = vector.multi_reduction <add>, %194, %cst_64 [1] : vector<8x32xf32> to vector<8xf32>
    %198 = vector.shape_cast %197 : vector<8xf32> to vector<8x1xf32>
    %cst_65 = arith.constant 3.200000e+01 : f32
    %199 = vector.broadcast %cst_65 : f32 to vector<8x1xf32>
    %200 = arith.divf %198, %199 : vector<8x1xf32>
    %201 = vector.broadcast %200 : vector<8x1xf32> to vector<8x32xf32>
    %202 = arith.subf %194, %201 : vector<8x32xf32>
    %203 = arith.mulf %202, %202 : vector<8x32xf32>
    %cst_66 = arith.constant dense<0.000000e+00> : vector<8xf32>
    %204 = vector.multi_reduction <add>, %203, %cst_66 [1] : vector<8x32xf32> to vector<8xf32>
    %205 = vector.shape_cast %204 : vector<8xf32> to vector<8x1xf32>
    %cst_67 = arith.constant 3.200000e+01 : f32
    %206 = vector.broadcast %cst_67 : f32 to vector<8x1xf32>
    %207 = arith.divf %205, %206 : vector<8x1xf32>
    %208 = vector.broadcast %200 : vector<8x1xf32> to vector<8x32xf32>
    %209 = arith.subf %194, %208 : vector<8x32xf32>
    %210 = vector.broadcast %195 : vector<1x32xf32> to vector<8x32xf32>
    %211 = arith.mulf %210, %209 : vector<8x32xf32>
    %cst_68 = arith.constant 9.99999996E-13 : f32
    %212 = vector.broadcast %cst_68 : f32 to vector<8x1xf32>
    %213 = arith.addf %207, %212 : vector<8x1xf32>
    %214 = vector.broadcast %213 : vector<8x1xf32> to vector<8x32xf32>
    %215 = arith.divf %211, %214 : vector<8x32xf32>
    %216 = vector.broadcast %196 : vector<1x32xf32> to vector<8x32xf32>
    %217 = arith.addf %215, %216 : vector<8x32xf32>
    %218 = arith.truncf %217 : vector<8x32xf32> to vector<8x32xbf16>
    %c0_69 = arith.constant 0 : index
    %c0_70 = arith.constant 0 : index
    %219 = vector.load %arg15[%c0_69, %c0_70] : memref<32x128xbf16, #tpu.memory_space<vmem>>, vector<32x128xbf16>
    %cst_71 = arith.constant dense<0.000000e+00> : vector<8x128xf32>
    %220 = tpu.matmul %218, %219, %cst_71 {dimension_numbers = #tpu.dot_dimension_numbers<[1], [0], [0], [1], [0, 0, 1, 1], [], []>} : vector<8x32xbf16>, vector<32x128xbf16>, vector<8x128xf32> -> vector<8x128xf32>
    %c0_72 = arith.constant 0 : index
    %c0_73 = arith.constant 0 : index
    %221 = vector.load %arg16[%c0_72, %c0_73] : memref<1x128xf32, #tpu.memory_space<vmem>>, vector<1x128xf32>
    %222 = vector.broadcast %221 : vector<1x128xf32> to vector<8x128xf32>
    %223 = arith.addf %220, %222 : vector<8x128xf32>
    %cst_74 = arith.constant 5.000000e-01 : f32
    %224 = vector.broadcast %cst_74 : f32 to vector<8x128xf32>
    %225 = arith.mulf %224, %223 : vector<8x128xf32>
    %cst_75 = arith.constant 4.471500e-02 : f32
    %226 = vector.broadcast %cst_75 : f32 to vector<8x128xf32>
    %227 = arith.mulf %226, %223 : vector<8x128xf32>
    %228 = arith.mulf %227, %223 : vector<8x128xf32>
    %229 = arith.mulf %228, %223 : vector<8x128xf32>
    %230 = arith.addf %223, %229 : vector<8x128xf32>
    %cst_76 = arith.constant 0.797884583 : f32
    %231 = vector.broadcast %cst_76 : f32 to vector<8x128xf32>
    %232 = arith.mulf %231, %230 : vector<8x128xf32>
    %233 = math.tanh %232 : vector<8x128xf32>
    %cst_77 = arith.constant 1.000000e+00 : f32
    %234 = vector.broadcast %cst_77 : f32 to vector<8x128xf32>
    %235 = arith.addf %234, %233 : vector<8x128xf32>
    %236 = arith.mulf %225, %235 : vector<8x128xf32>
    %237 = arith.truncf %236 : vector<8x128xf32> to vector<8x128xbf16>
    %c0_78 = arith.constant 0 : index
    %c0_79 = arith.constant 0 : index
    %238 = vector.load %arg17[%c0_78, %c0_79] : memref<128x32xbf16, #tpu.memory_space<vmem>>, vector<128x32xbf16>
    %cst_80 = arith.constant dense<0.000000e+00> : vector<8x32xf32>
    %239 = tpu.matmul %237, %238, %cst_80 {dimension_numbers = #tpu.dot_dimension_numbers<[1], [0], [0], [1], [0, 0, 1, 1], [], []>} : vector<8x128xbf16>, vector<128x32xbf16>, vector<8x32xf32> -> vector<8x32xf32>
    %c0_81 = arith.constant 0 : index
    %c0_82 = arith.constant 0 : index
    %240 = vector.load %arg18[%c0_81, %c0_82] : memref<1x32xf32, #tpu.memory_space<vmem>>, vector<1x32xf32>
    %241 = vector.broadcast %240 : vector<1x32xf32> to vector<8x32xf32>
    %242 = arith.addf %239, %241 : vector<8x32xf32>
    %243 = arith.addf %194, %242 : vector<8x32xf32>
    %244 = vector.shape_cast %243 : vector<8x32xf32> to vector<1x8x32xf32>
    %c0_83 = arith.constant 0 : index
    %c0_84 = arith.constant 0 : index
    %c0_85 = arith.constant 0 : index
    %245 = vector.load %arg19[%c0_83, %c0_84, %c0_85] : memref<1x8x32xf32, #tpu.memory_space<vmem>>, vector<1x8x32xf32>
    tpu.vector_store %arg19[%c0_83, %c0_84, %c0_85], %244 {strides = array<i32>} : memref<1x8x32xf32, #tpu.memory_space<vmem>>, vector<1x8x32xf32>,
    return
  }
  func.func @transform_0(%arg0: i32) -> (i32, i32, i32) {
    %c0_i32 = arith.constant 0 : i32
    %c0_i32_0 = arith.constant 0 : i32
    %c0_i32_1 = arith.constant 0 : i32
    return %arg0, %c0_i32, %c0_i32_0 : i32, i32, i32
  }
  func.func @transform_1(%arg0: i32) -> (i32, i32) {
    %c0_i32 = arith.constant 0 : i32
    %c0_i32_0 = arith.constant 0 : i32
    %c0_i32_1 = arith.constant 0 : i32
    return %c0_i32, %c0_i32_0 : i32, i32
  }
  func.func @transform_2(%arg0: i32) -> (i32, i32) {
    %c0_i32 = arith.constant 0 : i32
    %c0_i32_0 = arith.constant 0 : i32
    %c0_i32_1 = arith.constant 0 : i32
    return %c0_i32, %c0_i32_0 : i32, i32
  }
  func.func @transform_3(%arg0: i32) -> (i32, i32) {
    %c0_i32 = arith.constant 0 : i32
    %c0_i32_0 = arith.constant 0 : i32
    %c0_i32_1 = arith.constant 0 : i32
    return %c0_i32, %c0_i32_0 : i32, i32
  }
  func.func @transform_4(%arg0: i32) -> (i32, i32) {
    %c0_i32 = arith.constant 0 : i32
    %c0_i32_0 = arith.constant 0 : i32
    %c0_i32_1 = arith.constant 0 : i32
    return %c0_i32, %c0_i32_0 : i32, i32
  }
  func.func @transform_5(%arg0: i32) -> (i32, i32) {
    %c0_i32 = arith.constant 0 : i32
    %c0_i32_0 = arith.constant 0 : i32
    %c0_i32_1 = arith.constant 0 : i32
    return %c0_i32, %c0_i32_0 : i32, i32
  }
  func.func @transform_6(%arg0: i32) -> (i32, i32) {
    %c0_i32 = arith.constant 0 : i32
    %c0_i32_0 = arith.constant 0 : i32
    %c0_i32_1 = arith.constant 0 : i32
    return %c0_i32, %c0_i32_0 : i32, i32
  }
  func.func @transform_7(%arg0: i32) -> (i32, i32) {
    %c0_i32 = arith.constant 0 : i32
    %c0_i32_0 = arith.constant 0 : i32
    %c0_i32_1 = arith.constant 0 : i32
    return %c0_i32, %c0_i32_0 : i32, i32
  }
  func.func @transform_8(%arg0: i32) -> (i32, i32) {
    %c0_i32 = arith.constant 0 : i32
    %c0_i32_0 = arith.constant 0 : i32
    %c0_i32_1 = arith.constant 0 : i32
    return %c0_i32, %c0_i32_0 : i32, i32
  }
  func.func @transform_9(%arg0: i32) -> (i32, i32) {
    %c0_i32 = arith.constant 0 : i32
    %c0_i32_0 = arith.constant 0 : i32
    %c0_i32_1 = arith.constant 0 : i32
    return %c0_i32, %c0_i32_0 : i32, i32
  }
  func.func @transform_10(%arg0: i32) -> (i32, i32) {
    %c0_i32 = arith.constant 0 : i32
    %c0_i32_0 = arith.constant 0 : i32
    %c0_i32_1 = arith.constant 0 : i32
    return %c0_i32, %c0_i32_0 : i32, i32
  }
  func.func @transform_11(%arg0: i32) -> (i32, i32) {
    %c0_i32 = arith.constant 0 : i32
    %c0_i32_0 = arith.constant 0 : i32
    %c0_i32_1 = arith.constant 0 : i32
    return %c0_i32, %c0_i32_0 : i32, i32
  }
  func.func @transform_12(%arg0: i32) -> (i32, i32) {
    %c0_i32 = arith.constant 0 : i32
    %c0_i32_0 = arith.constant 0 : i32
    %c0_i32_1 = arith.constant 0 : i32
    return %c0_i32, %c0_i32_0 : i32, i32
  }
  func.func @transform_13(%arg0: i32) -> (i32, i32) {
    %c0_i32 = arith.constant 0 : i32
    %c0_i32_0 = arith.constant 0 : i32
    %c0_i32_1 = arith.constant 0 : i32
    return %c0_i32, %c0_i32_0 : i32, i32
  }
  func.func @transform_14(%arg0: i32) -> (i32, i32) {
    %c0_i32 = arith.constant 0 : i32
    %c0_i32_0 = arith.constant 0 : i32
    %c0_i32_1 = arith.constant 0 : i32
    return %c0_i32, %c0_i32_0 : i32, i32
  }
  func.func @transform_15(%arg0: i32) -> (i32, i32) {
    %c0_i32 = arith.constant 0 : i32
    %c0_i32_0 = arith.constant 0 : i32
    %c0_i32_1 = arith.constant 0 : i32
    return %c0_i32, %c0_i32_0 : i32, i32
  }
  func.func @transform_16(%arg0: i32) -> (i32, i32) {
    %c0_i32 = arith.constant 0 : i32
    %c0_i32_0 = arith.constant 0 : i32
    %c0_i32_1 = arith.constant 0 : i32
    return %c0_i32, %c0_i32_0 : i32, i32
  }
  func.func @transform_17(%arg0: i32) -> (i32, i32) {
    %c0_i32 = arith.constant 0 : i32
    %c0_i32_0 = arith.constant 0 : i32
    %c0_i32_1 = arith.constant 0 : i32
    return %c0_i32, %c0_i32_0 : i32, i32
  }
  func.func @transform_18(%arg0: i32) -> (i32, i32, i32) {
    %c0_i32 = arith.constant 0 : i32
    %c0_i32_0 = arith.constant 0 : i32
    %c0_i32_1 = arith.constant 0 : i32
    return %arg0, %c0_i32, %c0_i32_0 : i32, i32, i32
  }
  func.func @transform_19(%arg0: i32) -> (i32, i32, i32) {
    %c0_i32 = arith.constant 0 : i32
    %c0_i32_0 = arith.constant 0 : i32
    %c0_i32_1 = arith.constant 0 : i32
    return %arg0, %c0_i32, %c0_i32_0 : i32, i32, i32
  }
}

module attributes {stable_mosaic.version = 11 : i64} {
  func.func @_block_kernel(%arg0: i32, %arg1: memref<1x8x32xf32, #tpu.memory_space<vmem>>, %arg2: memref<8x32xf32, #tpu.memory_space<vmem>>, %arg3: memref<8x32xf32, #tpu.memory_space<vmem>>, %arg4: memref<8x32xf32, #tpu.memory_space<vmem>>, %arg5: memref<8x32xf32, #tpu.memory_space<vmem>>, %arg6: memref<8x8xf32, #tpu.memory_space<vmem>>, %arg7: memref<1x32xf32, #tpu.memory_space<vmem>>, %arg8: memref<1x32xf32, #tpu.memory_space<vmem>>, %arg9: memref<32x96xbf16, #tpu.memory_space<vmem>>, %arg10: memref<1x96xf32, #tpu.memory_space<vmem>>, %arg11: memref<32x32xbf16, #tpu.memory_space<vmem>>, %arg12: memref<1x32xf32, #tpu.memory_space<vmem>>, %arg13: memref<1x32xf32, #tpu.memory_space<vmem>>, %arg14: memref<1x32xf32, #tpu.memory_space<vmem>>, %arg15: memref<32x128xbf16, #tpu.memory_space<vmem>>, %arg16: memref<1x128xf32, #tpu.memory_space<vmem>>, %arg17: memref<128x32xbf16, #tpu.memory_space<vmem>>, %arg18: memref<1x32xf32, #tpu.memory_space<vmem>>, %arg19: memref<1x8x32xf32, #tpu.memory_space<vmem>>, %arg20: memref<1x8x64xf32, #tpu.memory_space<vmem>>) attributes {dimension_semantics = [#tpu.dimension_semantics<parallel>], iteration_bounds = array<i64: 2>, scalar_prefetch = 0 : i64, scratch_operands = 0 : i64, tpu.core_type = #tpu.core_type<tc>, window_params = [{transform_indices = @transform_0, window_bounds = array<i64: 1, 8, 32>}, {pipeline_mode = #tpu.pipeline_mode<synchronous>, transform_indices = @transform_1, window_bounds = array<i64: 8, 32>}, {pipeline_mode = #tpu.pipeline_mode<synchronous>, transform_indices = @transform_2, window_bounds = array<i64: 8, 32>}, {pipeline_mode = #tpu.pipeline_mode<synchronous>, transform_indices = @transform_3, window_bounds = array<i64: 8, 32>}, {pipeline_mode = #tpu.pipeline_mode<synchronous>, transform_indices = @transform_4, window_bounds = array<i64: 8, 32>}, {pipeline_mode = #tpu.pipeline_mode<synchronous>, transform_indices = @transform_5, window_bounds = array<i64: 8, 8>}, {pipeline_mode = #tpu.pipeline_mode<synchronous>, transform_indices = @transform_6, window_bounds = array<i64: 1, 32>}, {pipeline_mode = #tpu.pipeline_mode<synchronous>, transform_indices = @transform_7, window_bounds = array<i64: 1, 32>}, {pipeline_mode = #tpu.pipeline_mode<synchronous>, transform_indices = @transform_8, window_bounds = array<i64: 32, 96>}, {pipeline_mode = #tpu.pipeline_mode<synchronous>, transform_indices = @transform_9, window_bounds = array<i64: 1, 96>}, {pipeline_mode = #tpu.pipeline_mode<synchronous>, transform_indices = @transform_10, window_bounds = array<i64: 32, 32>}, {pipeline_mode = #tpu.pipeline_mode<synchronous>, transform_indices = @transform_11, window_bounds = array<i64: 1, 32>}, {pipeline_mode = #tpu.pipeline_mode<synchronous>, transform_indices = @transform_12, window_bounds = array<i64: 1, 32>}, {pipeline_mode = #tpu.pipeline_mode<synchronous>, transform_indices = @transform_13, window_bounds = array<i64: 1, 32>}, {pipeline_mode = #tpu.pipeline_mode<synchronous>, transform_indices = @transform_14, window_bounds = array<i64: 32, 128>}, {pipeline_mode = #tpu.pipeline_mode<synchronous>, transform_indices = @transform_15, window_bounds = array<i64: 1, 128>}, {pipeline_mode = #tpu.pipeline_mode<synchronous>, transform_indices = @transform_16, window_bounds = array<i64: 128, 32>}, {pipeline_mode = #tpu.pipeline_mode<synchronous>, transform_indices = @transform_17, window_bounds = array<i64: 1, 32>}, {transform_indices = @transform_18, window_bounds = array<i64: 1, 8, 32>}, {transform_indices = @transform_19, window_bounds = array<i64: 1, 8, 64>}]} {
    %c0 = arith.constant 0 : index
    %c0_0 = arith.constant 0 : index
    %c0_1 = arith.constant 0 : index
    %0 = vector.load %arg1[%c0, %c0_0, %c0_1] : memref<1x8x32xf32, #tpu.memory_space<vmem>>, vector<1x8x32xf32>
    %1 = vector.shape_cast %0 : vector<1x8x32xf32> to vector<8x32xf32>
    %c0_2 = arith.constant 0 : index
    %c0_3 = arith.constant 0 : index
    %2 = vector.load %arg7[%c0_2, %c0_3] : memref<1x32xf32, #tpu.memory_space<vmem>>, vector<1x32xf32>
    %c0_4 = arith.constant 0 : index
    %c0_5 = arith.constant 0 : index
    %3 = vector.load %arg8[%c0_4, %c0_5] : memref<1x32xf32, #tpu.memory_space<vmem>>, vector<1x32xf32>
    %cst = arith.constant dense<0.000000e+00> : vector<8xf32>
    %4 = vector.multi_reduction <add>, %1, %cst [1] : vector<8x32xf32> to vector<8xf32>
    %5 = vector.shape_cast %4 : vector<8xf32> to vector<8x1xf32>
    %cst_6 = arith.constant 3.200000e+01 : f32
    %6 = vector.broadcast %cst_6 : f32 to vector<8x1xf32>
    %7 = arith.divf %5, %6 : vector<8x1xf32>
    %8 = vector.broadcast %7 : vector<8x1xf32> to vector<8x32xf32>
    %9 = arith.subf %1, %8 : vector<8x32xf32>
    %10 = arith.mulf %9, %9 : vector<8x32xf32>
    %cst_7 = arith.constant dense<0.000000e+00> : vector<8xf32>
    %11 = vector.multi_reduction <add>, %10, %cst_7 [1] : vector<8x32xf32> to vector<8xf32>
    %12 = vector.shape_cast %11 : vector<8xf32> to vector<8x1xf32>
    %cst_8 = arith.constant 3.200000e+01 : f32
    %13 = vector.broadcast %cst_8 : f32 to vector<8x1xf32>
    %14 = arith.divf %12, %13 : vector<8x1xf32>
    %15 = vector.broadcast %7 : vector<8x1xf32> to vector<8x32xf32>
    %16 = arith.subf %1, %15 : vector<8x32xf32>
    %17 = vector.broadcast %2 : vector<1x32xf32> to vector<8x32xf32>
    %18 = arith.mulf %17, %16 : vector<8x32xf32>
    %cst_9 = arith.constant 9.99999996E-13 : f32
    %19 = vector.broadcast %cst_9 : f32 to vector<8x1xf32>
    %20 = arith.addf %14, %19 : vector<8x1xf32>
    %21 = vector.broadcast %20 : vector<8x1xf32> to vector<8x32xf32>
    %22 = arith.divf %18, %21 : vector<8x32xf32>
    %23 = vector.broadcast %3 : vector<1x32xf32> to vector<8x32xf32>
    %24 = arith.addf %22, %23 : vector<8x32xf32>
    %25 = arith.truncf %24 : vector<8x32xf32> to vector<8x32xbf16>
    %c0_10 = arith.constant 0 : index
    %c0_11 = arith.constant 0 : index
    %26 = vector.load %arg9[%c0_10, %c0_11] : memref<32x96xbf16, #tpu.memory_space<vmem>>, vector<32x96xbf16>
    %cst_12 = arith.constant dense<0.000000e+00> : vector<8x96xf32>
    %27 = tpu.matmul %25, %26, %cst_12 {dimension_numbers = #tpu.dot_dimension_numbers<[1], [0], [0], [1], [0, 0, 1, 1], [], []>} : vector<8x32xbf16>, vector<32x96xbf16>, vector<8x96xf32> -> vector<8x96xf32>
    %c0_13 = arith.constant 0 : index
    %c0_14 = arith.constant 0 : index
    %28 = vector.load %arg10[%c0_13, %c0_14] : memref<1x96xf32, #tpu.memory_space<vmem>>, vector<1x96xf32>
    %29 = vector.broadcast %28 : vector<1x96xf32> to vector<8x96xf32>
    %30 = arith.addf %27, %29 : vector<8x96xf32>
    %31 = vector.extract_strided_slice %30 {offsets = [0, 32], sizes = [8, 64], strides = [1, 1]} : vector<8x96xf32> to vector<8x64xf32>
    %32 = vector.shape_cast %31 : vector<8x64xf32> to vector<1x8x64xf32>
    %c0_15 = arith.constant 0 : index
    %c0_16 = arith.constant 0 : index
    %c0_17 = arith.constant 0 : index
    %33 = vector.load %arg20[%c0_15, %c0_16, %c0_17] : memref<1x8x64xf32, #tpu.memory_space<vmem>>, vector<1x8x64xf32>
    tpu.vector_store %arg20[%c0_15, %c0_16, %c0_17], %32 {strides = array<i32>} : memref<1x8x64xf32, #tpu.memory_space<vmem>>, vector<1x8x64xf32>,
    %34 = tpu.iota {dimensions = array<i32: 2>} : vector<1x1x32xi32>
    %c2_i32 = arith.constant 2 : i32
    %c0_i32 = arith.constant 0 : i32
    %35 = arith.cmpi eq, %c2_i32, %c0_i32 : i32
    %c1_i32 = arith.constant 1 : i32
    %36 = arith.select %35, %c1_i32, %c2_i32 : i32
    %37 = vector.broadcast %36 : i32 to vector<1x1x32xi32>
    %38 = arith.remsi %34, %37 : vector<1x1x32xi32>
    %c0_i32_18 = arith.constant 0 : i32
    %39 = vector.broadcast %c0_i32_18 : i32 to vector<1x1x32xi32>
    %40 = arith.cmpi ne, %38, %39 : vector<1x1x32xi32>
    %c0_i32_19 = arith.constant 0 : i32
    %41 = vector.broadcast %c0_i32_19 : i32 to vector<1x1x32xi32>
    %42 = arith.cmpi slt, %38, %41 : vector<1x1x32xi32>
    %c0_i32_20 = arith.constant 0 : i32
    %43 = arith.cmpi slt, %36, %c0_i32_20 : i32
    %44 = vector.broadcast %43 : i1 to vector<1x1x32xi1>
    %45 = vector.broadcast %44 : vector<1x1x32xi1> to vector<1x1x32xi1>
    %46 = arith.xori %42, %45 : vector<1x1x32xi1>
    %47 = arith.andi %46, %40 : vector<1x1x32xi1>
    %48 = vector.broadcast %36 : i32 to vector<1x1x32xi32>
    %49 = arith.addi %38, %48 : vector<1x1x32xi32>
    %50 = arith.select %47, %49, %38 : vector<1x1x32xi1>, vector<1x1x32xi32>
    %c0_i32_21 = arith.constant 0 : i32
    %51 = vector.broadcast %c0_i32_21 : i32 to vector<1x1x32xi32>
    %52 = arith.cmpi eq, %50, %51 : vector<1x1x32xi32>
    %53 = vector.extract_strided_slice %30 {offsets = [0, 0], sizes = [8, 32], strides = [1, 1]} : vector<8x96xf32> to vector<8x32xf32>
    %c0_22 = arith.constant 0 : index
    %c0_23 = arith.constant 0 : index
    %54 = vector.load %arg2[%c0_22, %c0_23] : memref<8x32xf32, #tpu.memory_space<vmem>>, vector<8x32xf32>
    %c0_24 = arith.constant 0 : index
    %c0_25 = arith.constant 0 : index
    %55 = vector.load %arg3[%c0_24, %c0_25] : memref<8x32xf32, #tpu.memory_space<vmem>>, vector<8x32xf32>
    %56 = vector.shape_cast %53 : vector<8x32xf32> to vector<1x8x32xf32>
    %57 = vector.extract_strided_slice %56 {offsets = [0, 0, 1], sizes = [1, 8, 31], strides = [1, 1, 1]} : vector<1x8x32xf32> to vector<1x8x31xf32>
    %58 = vector.extract_strided_slice %56 {offsets = [0, 0, 0], sizes = [1, 8, 1], strides = [1, 1, 1]} : vector<1x8x32xf32> to vector<1x8x1xf32>
    %59 = tpu.concatenate %57, %58 in 2 : vector<1x8x31xf32>, vector<1x8x1xf32> -> vector<1x8x32xf32>
    %60 = vector.extract_strided_slice %56 {offsets = [0, 0, 31], sizes = [1, 8, 1], strides = [1, 1, 1]} : vector<1x8x32xf32> to vector<1x8x1xf32>
    %61 = vector.extract_strided_slice %56 {offsets = [0, 0, 0], sizes = [1, 8, 31], strides = [1, 1, 1]} : vector<1x8x32xf32> to vector<1x8x31xf32>
    %62 = tpu.concatenate %60, %61 in 2 : vector<1x8x1xf32>, vector<1x8x31xf32> -> vector<1x8x32xf32>
    %63 = vector.shape_cast %52 : vector<1x1x32xi1> to vector<1x1x32xi1>
    %64 = vector.broadcast %63 : vector<1x1x32xi1> to vector<1x8x32xi1>
    %65 = arith.select %64, %59, %62 : vector<1x8x32xi1>, vector<1x8x32xf32>
    %66 = vector.shape_cast %54 : vector<8x32xf32> to vector<1x8x32xf32>
    %67 = arith.mulf %56, %66 : vector<1x8x32xf32>
    %68 = vector.shape_cast %55 : vector<8x32xf32> to vector<1x8x32xf32>
    %69 = arith.mulf %65, %68 : vector<1x8x32xf32>
    %70 = arith.addf %67, %69 : vector<1x8x32xf32>
    %71 = vector.shape_cast %70 : vector<1x8x32xf32> to vector<8x32xf32>
    %72 = vector.extract_strided_slice %30 {offsets = [0, 32], sizes = [8, 32], strides = [1, 1]} : vector<8x96xf32> to vector<8x32xf32>
    %c0_26 = arith.constant 0 : index
    %c0_27 = arith.constant 0 : index
    %73 = vector.load %arg4[%c0_26, %c0_27] : memref<8x32xf32, #tpu.memory_space<vmem>>, vector<8x32xf32>
    %c0_28 = arith.constant 0 : index
    %c0_29 = arith.constant 0 : index
    %74 = vector.load %arg5[%c0_28, %c0_29] : memref<8x32xf32, #tpu.memory_space<vmem>>, vector<8x32xf32>
    %75 = vector.shape_cast %72 : vector<8x32xf32> to vector<1x8x32xf32>
    %76 = vector.extract_strided_slice %75 {offsets = [0, 0, 1], sizes = [1, 8, 31], strides = [1, 1, 1]} : vector<1x8x32xf32> to vector<1x8x31xf32>
    %77 = vector.extract_strided_slice %75 {offsets = [0, 0, 0], sizes = [1, 8, 1], strides = [1, 1, 1]} : vector<1x8x32xf32> to vector<1x8x1xf32>
    %78 = tpu.concatenate %76, %77 in 2 : vector<1x8x31xf32>, vector<1x8x1xf32> -> vector<1x8x32xf32>
    %79 = vector.extract_strided_slice %75 {offsets = [0, 0, 31], sizes = [1, 8, 1], strides = [1, 1, 1]} : vector<1x8x32xf32> to vector<1x8x1xf32>
    %80 = vector.extract_strided_slice %75 {offsets = [0, 0, 0], sizes = [1, 8, 31], strides = [1, 1, 1]} : vector<1x8x32xf32> to vector<1x8x31xf32>
    %81 = tpu.concatenate %79, %80 in 2 : vector<1x8x1xf32>, vector<1x8x31xf32> -> vector<1x8x32xf32>
    %82 = vector.shape_cast %52 : vector<1x1x32xi1> to vector<1x1x32xi1>
    %83 = vector.broadcast %82 : vector<1x1x32xi1> to vector<1x8x32xi1>
    %84 = arith.select %83, %78, %81 : vector<1x8x32xi1>, vector<1x8x32xf32>
    %85 = vector.shape_cast %73 : vector<8x32xf32> to vector<1x8x32xf32>
    %86 = arith.mulf %75, %85 : vector<1x8x32xf32>
    %87 = vector.shape_cast %74 : vector<8x32xf32> to vector<1x8x32xf32>
    %88 = arith.mulf %84, %87 : vector<1x8x32xf32>
    %89 = arith.addf %86, %88 : vector<1x8x32xf32>
    %90 = vector.shape_cast %89 : vector<1x8x32xf32> to vector<8x32xf32>
    %c0_30 = arith.constant 0 : index
    %c0_31 = arith.constant 0 : index
    %91 = vector.load %arg6[%c0_30, %c0_31] : memref<8x8xf32, #tpu.memory_space<vmem>>, vector<8x8xf32>
    %92 = arith.truncf %71 : vector<8x32xf32> to vector<8x32xbf16>
    %93 = arith.truncf %90 : vector<8x32xf32> to vector<8x32xbf16>
    %94 = vector.extract_strided_slice %30 {offsets = [0, 64], sizes = [8, 32], strides = [1, 1]} : vector<8x96xf32> to vector<8x32xf32>
    %95 = arith.truncf %94 : vector<8x32xf32> to vector<8x32xbf16>
    %96 = vector.extract_strided_slice %92 {offsets = [0, 0], sizes = [8, 8], strides = [1, 1]} : vector<8x32xbf16> to vector<8x8xbf16>
    %97 = vector.shape_cast %96 : vector<8x8xbf16> to vector<1x8x8xbf16>
    %98 = vector.extract_strided_slice %93 {offsets = [0, 0], sizes = [8, 8], strides = [1, 1]} : vector<8x32xbf16> to vector<8x8xbf16>
    %99 = vector.shape_cast %98 : vector<8x8xbf16> to vector<1x8x8xbf16>
    %100 = vector.extract_strided_slice %95 {offsets = [0, 0], sizes = [8, 8], strides = [1, 1]} : vector<8x32xbf16> to vector<8x8xbf16>
    %101 = vector.shape_cast %100 : vector<8x8xbf16> to vector<1x8x8xbf16>
    "tpu.trace_start"() <{level = 10 : i32, message = "gqd,gkd->gqk"}> : () -> ()
    %cst_32 = arith.constant dense<0.000000e+00> : vector<1x8x8xf32>
    %102 = tpu.matmul %97, %99, %cst_32 {dimension_numbers = #tpu.dot_dimension_numbers<[2], [2], [1], [1], [0, 0, 0, 1, 1, 1], [0], [0]>} : vector<1x8x8xbf16>, vector<1x8x8xbf16>, vector<1x8x8xf32> -> vector<1x8x8xf32>
    "tpu.trace_stop"() : () -> ()
    %cst_33 = arith.constant 0.353553385 : f32
    %103 = vector.broadcast %cst_33 : f32 to vector<1x8x8xf32>
    %104 = arith.mulf %102, %103 : vector<1x8x8xf32>
    %105 = vector.shape_cast %91 : vector<8x8xf32> to vector<1x8x8xf32>
    %106 = arith.addf %104, %105 : vector<1x8x8xf32>
    %cst_34 = arith.constant dense<0xFF800000> : vector<1x8xf32>
    %107 = vector.multi_reduction <maximumf>, %106, %cst_34 [2] : vector<1x8x8xf32> to vector<1x8xf32>
    %108 = vector.shape_cast %107 : vector<1x8xf32> to vector<1x8x1xf32>
    %109 = vector.broadcast %108 : vector<1x8x1xf32> to vector<1x8x8xf32>
    %110 = arith.subf %106, %109 : vector<1x8x8xf32>
    %111 = math.exp %110 : vector<1x8x8xf32>
    %cst_35 = arith.constant dense<0.000000e+00> : vector<1x8xf32>
    %112 = vector.multi_reduction <add>, %111, %cst_35 [2] : vector<1x8x8xf32> to vector<1x8xf32>
    %113 = vector.shape_cast %112 : vector<1x8xf32> to vector<1x8x1xf32>
    %114 = tpu.reciprocal %113 {approx = true} : vector<1x8x1xf32> -> vector<1x8x1xf32>
    %115 = vector.broadcast %114 : vector<1x8x1xf32> to vector<1x8x8xf32>
    %116 = arith.mulf %111, %115 : vector<1x8x8xf32>
    %117 = arith.truncf %116 : vector<1x8x8xf32> to vector<1x8x8xbf16>
    "tpu.trace_start"() <{level = 10 : i32, message = "gqk,gkd->gqd"}> : () -> ()
    %cst_36 = arith.constant dense<0.000000e+00> : vector<1x8x8xf32>
    %118 = tpu.matmul %117, %101, %cst_36 {dimension_numbers = #tpu.dot_dimension_numbers<[2], [1], [1], [2], [0, 0, 0, 1, 1, 2], [0], [0]>} : vector<1x8x8xbf16>, vector<1x8x8xbf16>, vector<1x8x8xf32> -> vector<1x8x8xf32>
    "tpu.trace_stop"() : () -> ()
    %119 = arith.truncf %118 : vector<1x8x8xf32> to vector<1x8x8xbf16>
    %120 = vector.shape_cast %119 : vector<1x8x8xbf16> to vector<8x8xbf16>
    %121 = vector.extract_strided_slice %92 {offsets = [0, 8], sizes = [8, 8], strides = [1, 1]} : vector<8x32xbf16> to vector<8x8xbf16>
    %122 = vector.shape_cast %121 : vector<8x8xbf16> to vector<1x8x8xbf16>
    %123 = vector.extract_strided_slice %93 {offsets = [0, 8], sizes = [8, 8], strides = [1, 1]} : vector<8x32xbf16> to vector<8x8xbf16>
    %124 = vector.shape_cast %123 : vector<8x8xbf16> to vector<1x8x8xbf16>
    %125 = vector.extract_strided_slice %95 {offsets = [0, 8], sizes = [8, 8], strides = [1, 1]} : vector<8x32xbf16> to vector<8x8xbf16>
    %126 = vector.shape_cast %125 : vector<8x8xbf16> to vector<1x8x8xbf16>
    "tpu.trace_start"() <{level = 10 : i32, message = "gqd,gkd->gqk"}> : () -> ()
    %cst_37 = arith.constant dense<0.000000e+00> : vector<1x8x8xf32>
    %127 = tpu.matmul %122, %124, %cst_37 {dimension_numbers = #tpu.dot_dimension_numbers<[2], [2], [1], [1], [0, 0, 0, 1, 1, 1], [0], [0]>} : vector<1x8x8xbf16>, vector<1x8x8xbf16>, vector<1x8x8xf32> -> vector<1x8x8xf32>
    "tpu.trace_stop"() : () -> ()
    %cst_38 = arith.constant 0.353553385 : f32
    %128 = vector.broadcast %cst_38 : f32 to vector<1x8x8xf32>
    %129 = arith.mulf %127, %128 : vector<1x8x8xf32>
    %130 = vector.shape_cast %91 : vector<8x8xf32> to vector<1x8x8xf32>
    %131 = arith.addf %129, %130 : vector<1x8x8xf32>
    %cst_39 = arith.constant dense<0xFF800000> : vector<1x8xf32>
    %132 = vector.multi_reduction <maximumf>, %131, %cst_39 [2] : vector<1x8x8xf32> to vector<1x8xf32>
    %133 = vector.shape_cast %132 : vector<1x8xf32> to vector<1x8x1xf32>
    %134 = vector.broadcast %133 : vector<1x8x1xf32> to vector<1x8x8xf32>
    %135 = arith.subf %131, %134 : vector<1x8x8xf32>
    %136 = math.exp %135 : vector<1x8x8xf32>
    %cst_40 = arith.constant dense<0.000000e+00> : vector<1x8xf32>
    %137 = vector.multi_reduction <add>, %136, %cst_40 [2] : vector<1x8x8xf32> to vector<1x8xf32>
    %138 = vector.shape_cast %137 : vector<1x8xf32> to vector<1x8x1xf32>
    %139 = tpu.reciprocal %138 {approx = true} : vector<1x8x1xf32> -> vector<1x8x1xf32>
    %140 = vector.broadcast %139 : vector<1x8x1xf32> to vector<1x8x8xf32>
    %141 = arith.mulf %136, %140 : vector<1x8x8xf32>
    %142 = arith.truncf %141 : vector<1x8x8xf32> to vector<1x8x8xbf16>
    "tpu.trace_start"() <{level = 10 : i32, message = "gqk,gkd->gqd"}> : () -> ()
    %cst_41 = arith.constant dense<0.000000e+00> : vector<1x8x8xf32>
    %143 = tpu.matmul %142, %126, %cst_41 {dimension_numbers = #tpu.dot_dimension_numbers<[2], [1], [1], [2], [0, 0, 0, 1, 1, 2], [0], [0]>} : vector<1x8x8xbf16>, vector<1x8x8xbf16>, vector<1x8x8xf32> -> vector<1x8x8xf32>
    "tpu.trace_stop"() : () -> ()
    %144 = arith.truncf %143 : vector<1x8x8xf32> to vector<1x8x8xbf16>
    %145 = vector.shape_cast %144 : vector<1x8x8xbf16> to vector<8x8xbf16>
    %146 = vector.extract_strided_slice %92 {offsets = [0, 16], sizes = [8, 8], strides = [1, 1]} : vector<8x32xbf16> to vector<8x8xbf16>
    %147 = vector.shape_cast %146 : vector<8x8xbf16> to vector<1x8x8xbf16>
    %148 = vector.extract_strided_slice %93 {offsets = [0, 16], sizes = [8, 8], strides = [1, 1]} : vector<8x32xbf16> to vector<8x8xbf16>
    %149 = vector.shape_cast %148 : vector<8x8xbf16> to vector<1x8x8xbf16>
    %150 = vector.extract_strided_slice %95 {offsets = [0, 16], sizes = [8, 8], strides = [1, 1]} : vector<8x32xbf16> to vector<8x8xbf16>
    %151 = vector.shape_cast %150 : vector<8x8xbf16> to vector<1x8x8xbf16>
    "tpu.trace_start"() <{level = 10 : i32, message = "gqd,gkd->gqk"}> : () -> ()
    %cst_42 = arith.constant dense<0.000000e+00> : vector<1x8x8xf32>
    %152 = tpu.matmul %147, %149, %cst_42 {dimension_numbers = #tpu.dot_dimension_numbers<[2], [2], [1], [1], [0, 0, 0, 1, 1, 1], [0], [0]>} : vector<1x8x8xbf16>, vector<1x8x8xbf16>, vector<1x8x8xf32> -> vector<1x8x8xf32>
    "tpu.trace_stop"() : () -> ()
    %cst_43 = arith.constant 0.353553385 : f32
    %153 = vector.broadcast %cst_43 : f32 to vector<1x8x8xf32>
    %154 = arith.mulf %152, %153 : vector<1x8x8xf32>
    %155 = vector.shape_cast %91 : vector<8x8xf32> to vector<1x8x8xf32>
    %156 = arith.addf %154, %155 : vector<1x8x8xf32>
    %cst_44 = arith.constant dense<0xFF800000> : vector<1x8xf32>
    %157 = vector.multi_reduction <maximumf>, %156, %cst_44 [2] : vector<1x8x8xf32> to vector<1x8xf32>
    %158 = vector.shape_cast %157 : vector<1x8xf32> to vector<1x8x1xf32>
    %159 = vector.broadcast %158 : vector<1x8x1xf32> to vector<1x8x8xf32>
    %160 = arith.subf %156, %159 : vector<1x8x8xf32>
    %161 = math.exp %160 : vector<1x8x8xf32>
    %cst_45 = arith.constant dense<0.000000e+00> : vector<1x8xf32>
    %162 = vector.multi_reduction <add>, %161, %cst_45 [2] : vector<1x8x8xf32> to vector<1x8xf32>
    %163 = vector.shape_cast %162 : vector<1x8xf32> to vector<1x8x1xf32>
    %164 = tpu.reciprocal %163 {approx = true} : vector<1x8x1xf32> -> vector<1x8x1xf32>
    %165 = vector.broadcast %164 : vector<1x8x1xf32> to vector<1x8x8xf32>
    %166 = arith.mulf %161, %165 : vector<1x8x8xf32>
    %167 = arith.truncf %166 : vector<1x8x8xf32> to vector<1x8x8xbf16>
    "tpu.trace_start"() <{level = 10 : i32, message = "gqk,gkd->gqd"}> : () -> ()
    %cst_46 = arith.constant dense<0.000000e+00> : vector<1x8x8xf32>
    %168 = tpu.matmul %167, %151, %cst_46 {dimension_numbers = #tpu.dot_dimension_numbers<[2], [1], [1], [2], [0, 0, 0, 1, 1, 2], [0], [0]>} : vector<1x8x8xbf16>, vector<1x8x8xbf16>, vector<1x8x8xf32> -> vector<1x8x8xf32>
    "tpu.trace_stop"() : () -> ()
    %169 = arith.truncf %168 : vector<1x8x8xf32> to vector<1x8x8xbf16>
    %170 = vector.shape_cast %169 : vector<1x8x8xbf16> to vector<8x8xbf16>
    %171 = vector.extract_strided_slice %92 {offsets = [0, 24], sizes = [8, 8], strides = [1, 1]} : vector<8x32xbf16> to vector<8x8xbf16>
    %172 = vector.shape_cast %171 : vector<8x8xbf16> to vector<1x8x8xbf16>
    %173 = vector.extract_strided_slice %93 {offsets = [0, 24], sizes = [8, 8], strides = [1, 1]} : vector<8x32xbf16> to vector<8x8xbf16>
    %174 = vector.shape_cast %173 : vector<8x8xbf16> to vector<1x8x8xbf16>
    %175 = vector.extract_strided_slice %95 {offsets = [0, 24], sizes = [8, 8], strides = [1, 1]} : vector<8x32xbf16> to vector<8x8xbf16>
    %176 = vector.shape_cast %175 : vector<8x8xbf16> to vector<1x8x8xbf16>
    "tpu.trace_start"() <{level = 10 : i32, message = "gqd,gkd->gqk"}> : () -> ()
    %cst_47 = arith.constant dense<0.000000e+00> : vector<1x8x8xf32>
    %177 = tpu.matmul %172, %174, %cst_47 {dimension_numbers = #tpu.dot_dimension_numbers<[2], [2], [1], [1], [0, 0, 0, 1, 1, 1], [0], [0]>} : vector<1x8x8xbf16>, vector<1x8x8xbf16>, vector<1x8x8xf32> -> vector<1x8x8xf32>
    "tpu.trace_stop"() : () -> ()
    %cst_48 = arith.constant 0.353553385 : f32
    %178 = vector.broadcast %cst_48 : f32 to vector<1x8x8xf32>
    %179 = arith.mulf %177, %178 : vector<1x8x8xf32>
    %180 = vector.shape_cast %91 : vector<8x8xf32> to vector<1x8x8xf32>
    %181 = arith.addf %179, %180 : vector<1x8x8xf32>
    %cst_49 = arith.constant dense<0xFF800000> : vector<1x8xf32>
    %182 = vector.multi_reduction <maximumf>, %181, %cst_49 [2] : vector<1x8x8xf32> to vector<1x8xf32>
    %183 = vector.shape_cast %182 : vector<1x8xf32> to vector<1x8x1xf32>
    %184 = vector.broadcast %183 : vector<1x8x1xf32> to vector<1x8x8xf32>
    %185 = arith.subf %181, %184 : vector<1x8x8xf32>
    %186 = math.exp %185 : vector<1x8x8xf32>
    %cst_50 = arith.constant dense<0.000000e+00> : vector<1x8xf32>
    %187 = vector.multi_reduction <add>, %186, %cst_50 [2] : vector<1x8x8xf32> to vector<1x8xf32>
    %188 = vector.shape_cast %187 : vector<1x8xf32> to vector<1x8x1xf32>
    %189 = tpu.reciprocal %188 {approx = true} : vector<1x8x1xf32> -> vector<1x8x1xf32>
    %190 = vector.broadcast %189 : vector<1x8x1xf32> to vector<1x8x8xf32>
    %191 = arith.mulf %186, %190 : vector<1x8x8xf32>
    %192 = arith.truncf %191 : vector<1x8x8xf32> to vector<1x8x8xbf16>
    "tpu.trace_start"() <{level = 10 : i32, message = "gqk,gkd->gqd"}> : () -> ()
    %cst_51 = arith.constant dense<0.000000e+00> : vector<1x8x8xf32>
    %193 = tpu.matmul %192, %176, %cst_51 {dimension_numbers = #tpu.dot_dimension_numbers<[2], [1], [1], [2], [0, 0, 0, 1, 1, 2], [0], [0]>} : vector<1x8x8xbf16>, vector<1x8x8xbf16>, vector<1x8x8xf32> -> vector<1x8x8xf32>
    "tpu.trace_stop"() : () -> ()
    %194 = arith.truncf %193 : vector<1x8x8xf32> to vector<1x8x8xbf16>
    %195 = vector.shape_cast %194 : vector<1x8x8xbf16> to vector<8x8xbf16>
    %196 = tpu.concatenate %120, %145, %170, %195 in 1 : vector<8x8xbf16>, vector<8x8xbf16>, vector<8x8xbf16>, vector<8x8xbf16> -> vector<8x32xbf16>
    %c0_52 = arith.constant 0 : index
    %c0_53 = arith.constant 0 : index
    %197 = vector.load %arg11[%c0_52, %c0_53] : memref<32x32xbf16, #tpu.memory_space<vmem>>, vector<32x32xbf16>
    %cst_54 = arith.constant dense<0.000000e+00> : vector<8x32xf32>
    %198 = tpu.matmul %196, %197, %cst_54 {dimension_numbers = #tpu.dot_dimension_numbers<[1], [0], [0], [1], [0, 0, 1, 1], [], []>} : vector<8x32xbf16>, vector<32x32xbf16>, vector<8x32xf32> -> vector<8x32xf32>
    %c0_55 = arith.constant 0 : index
    %c0_56 = arith.constant 0 : index
    %199 = vector.load %arg12[%c0_55, %c0_56] : memref<1x32xf32, #tpu.memory_space<vmem>>, vector<1x32xf32>
    %200 = vector.broadcast %199 : vector<1x32xf32> to vector<8x32xf32>
    %201 = arith.addf %198, %200 : vector<8x32xf32>
    %202 = arith.addf %1, %201 : vector<8x32xf32>
    %c0_57 = arith.constant 0 : index
    %c0_58 = arith.constant 0 : index
    %203 = vector.load %arg13[%c0_57, %c0_58] : memref<1x32xf32, #tpu.memory_space<vmem>>, vector<1x32xf32>
    %c0_59 = arith.constant 0 : index
    %c0_60 = arith.constant 0 : index
    %204 = vector.load %arg14[%c0_59, %c0_60] : memref<1x32xf32, #tpu.memory_space<vmem>>, vector<1x32xf32>
    %cst_61 = arith.constant dense<0.000000e+00> : vector<8xf32>
    %205 = vector.multi_reduction <add>, %202, %cst_61 [1] : vector<8x32xf32> to vector<8xf32>
    %206 = vector.shape_cast %205 : vector<8xf32> to vector<8x1xf32>
    %cst_62 = arith.constant 3.200000e+01 : f32
    %207 = vector.broadcast %cst_62 : f32 to vector<8x1xf32>
    %208 = arith.divf %206, %207 : vector<8x1xf32>
    %209 = vector.broadcast %208 : vector<8x1xf32> to vector<8x32xf32>
    %210 = arith.subf %202, %209 : vector<8x32xf32>
    %211 = arith.mulf %210, %210 : vector<8x32xf32>
    %cst_63 = arith.constant dense<0.000000e+00> : vector<8xf32>
    %212 = vector.multi_reduction <add>, %211, %cst_63 [1] : vector<8x32xf32> to vector<8xf32>
    %213 = vector.shape_cast %212 : vector<8xf32> to vector<8x1xf32>
    %cst_64 = arith.constant 3.200000e+01 : f32
    %214 = vector.broadcast %cst_64 : f32 to vector<8x1xf32>
    %215 = arith.divf %213, %214 : vector<8x1xf32>
    %216 = vector.broadcast %208 : vector<8x1xf32> to vector<8x32xf32>
    %217 = arith.subf %202, %216 : vector<8x32xf32>
    %218 = vector.broadcast %203 : vector<1x32xf32> to vector<8x32xf32>
    %219 = arith.mulf %218, %217 : vector<8x32xf32>
    %cst_65 = arith.constant 9.99999996E-13 : f32
    %220 = vector.broadcast %cst_65 : f32 to vector<8x1xf32>
    %221 = arith.addf %215, %220 : vector<8x1xf32>
    %222 = vector.broadcast %221 : vector<8x1xf32> to vector<8x32xf32>
    %223 = arith.divf %219, %222 : vector<8x32xf32>
    %224 = vector.broadcast %204 : vector<1x32xf32> to vector<8x32xf32>
    %225 = arith.addf %223, %224 : vector<8x32xf32>
    %226 = arith.truncf %225 : vector<8x32xf32> to vector<8x32xbf16>
    %c0_66 = arith.constant 0 : index
    %c0_67 = arith.constant 0 : index
    %227 = vector.load %arg15[%c0_66, %c0_67] : memref<32x128xbf16, #tpu.memory_space<vmem>>, vector<32x128xbf16>
    %cst_68 = arith.constant dense<0.000000e+00> : vector<8x128xf32>
    %228 = tpu.matmul %226, %227, %cst_68 {dimension_numbers = #tpu.dot_dimension_numbers<[1], [0], [0], [1], [0, 0, 1, 1], [], []>} : vector<8x32xbf16>, vector<32x128xbf16>, vector<8x128xf32> -> vector<8x128xf32>
    %c0_69 = arith.constant 0 : index
    %c0_70 = arith.constant 0 : index
    %229 = vector.load %arg16[%c0_69, %c0_70] : memref<1x128xf32, #tpu.memory_space<vmem>>, vector<1x128xf32>
    %230 = vector.broadcast %229 : vector<1x128xf32> to vector<8x128xf32>
    %231 = arith.addf %228, %230 : vector<8x128xf32>
    %cst_71 = arith.constant 5.000000e-01 : f32
    %232 = vector.broadcast %cst_71 : f32 to vector<8x128xf32>
    %233 = arith.mulf %232, %231 : vector<8x128xf32>
    %cst_72 = arith.constant 4.471500e-02 : f32
    %234 = vector.broadcast %cst_72 : f32 to vector<8x128xf32>
    %235 = arith.mulf %234, %231 : vector<8x128xf32>
    %236 = arith.mulf %235, %231 : vector<8x128xf32>
    %237 = arith.mulf %236, %231 : vector<8x128xf32>
    %238 = arith.addf %231, %237 : vector<8x128xf32>
    %cst_73 = arith.constant 0.797884583 : f32
    %239 = vector.broadcast %cst_73 : f32 to vector<8x128xf32>
    %240 = arith.mulf %239, %238 : vector<8x128xf32>
    %241 = math.tanh %240 : vector<8x128xf32>
    %cst_74 = arith.constant 1.000000e+00 : f32
    %242 = vector.broadcast %cst_74 : f32 to vector<8x128xf32>
    %243 = arith.addf %242, %241 : vector<8x128xf32>
    %244 = arith.mulf %233, %243 : vector<8x128xf32>
    %245 = arith.truncf %244 : vector<8x128xf32> to vector<8x128xbf16>
    %c0_75 = arith.constant 0 : index
    %c0_76 = arith.constant 0 : index
    %246 = vector.load %arg17[%c0_75, %c0_76] : memref<128x32xbf16, #tpu.memory_space<vmem>>, vector<128x32xbf16>
    %cst_77 = arith.constant dense<0.000000e+00> : vector<8x32xf32>
    %247 = tpu.matmul %245, %246, %cst_77 {dimension_numbers = #tpu.dot_dimension_numbers<[1], [0], [0], [1], [0, 0, 1, 1], [], []>} : vector<8x128xbf16>, vector<128x32xbf16>, vector<8x32xf32> -> vector<8x32xf32>
    %c0_78 = arith.constant 0 : index
    %c0_79 = arith.constant 0 : index
    %248 = vector.load %arg18[%c0_78, %c0_79] : memref<1x32xf32, #tpu.memory_space<vmem>>, vector<1x32xf32>
    %249 = vector.broadcast %248 : vector<1x32xf32> to vector<8x32xf32>
    %250 = arith.addf %247, %249 : vector<8x32xf32>
    %251 = arith.addf %202, %250 : vector<8x32xf32>
    %252 = vector.shape_cast %251 : vector<8x32xf32> to vector<1x8x32xf32>
    %c0_80 = arith.constant 0 : index
    %c0_81 = arith.constant 0 : index
    %c0_82 = arith.constant 0 : index
    %253 = vector.load %arg19[%c0_80, %c0_81, %c0_82] : memref<1x8x32xf32, #tpu.memory_space<vmem>>, vector<1x8x32xf32>
    tpu.vector_store %arg19[%c0_80, %c0_81, %c0_82], %252 {strides = array<i32>} : memref<1x8x32xf32, #tpu.memory_space<vmem>>, vector<1x8x32xf32>,
    return
  }
  func.func @transform_0(%arg0: i32) -> (i32, i32, i32) {
    %c0_i32 = arith.constant 0 : i32
    %c0_i32_0 = arith.constant 0 : i32
    %c0_i32_1 = arith.constant 0 : i32
    return %arg0, %c0_i32, %c0_i32_0 : i32, i32, i32
  }
  func.func @transform_1(%arg0: i32) -> (i32, i32) {
    %c0_i32 = arith.constant 0 : i32
    %c0_i32_0 = arith.constant 0 : i32
    %c0_i32_1 = arith.constant 0 : i32
    return %c0_i32, %c0_i32_0 : i32, i32
  }
  func.func @transform_2(%arg0: i32) -> (i32, i32) {
    %c0_i32 = arith.constant 0 : i32
    %c0_i32_0 = arith.constant 0 : i32
    %c0_i32_1 = arith.constant 0 : i32
    return %c0_i32, %c0_i32_0 : i32, i32
  }
  func.func @transform_3(%arg0: i32) -> (i32, i32) {
    %c0_i32 = arith.constant 0 : i32
    %c0_i32_0 = arith.constant 0 : i32
    %c0_i32_1 = arith.constant 0 : i32
    return %c0_i32, %c0_i32_0 : i32, i32
  }
  func.func @transform_4(%arg0: i32) -> (i32, i32) {
    %c0_i32 = arith.constant 0 : i32
    %c0_i32_0 = arith.constant 0 : i32
    %c0_i32_1 = arith.constant 0 : i32
    return %c0_i32, %c0_i32_0 : i32, i32
  }
  func.func @transform_5(%arg0: i32) -> (i32, i32) {
    %c0_i32 = arith.constant 0 : i32
    %c0_i32_0 = arith.constant 0 : i32
    %c0_i32_1 = arith.constant 0 : i32
    return %c0_i32, %c0_i32_0 : i32, i32
  }
  func.func @transform_6(%arg0: i32) -> (i32, i32) {
    %c0_i32 = arith.constant 0 : i32
    %c0_i32_0 = arith.constant 0 : i32
    %c0_i32_1 = arith.constant 0 : i32
    return %c0_i32, %c0_i32_0 : i32, i32
  }
  func.func @transform_7(%arg0: i32) -> (i32, i32) {
    %c0_i32 = arith.constant 0 : i32
    %c0_i32_0 = arith.constant 0 : i32
    %c0_i32_1 = arith.constant 0 : i32
    return %c0_i32, %c0_i32_0 : i32, i32
  }
  func.func @transform_8(%arg0: i32) -> (i32, i32) {
    %c0_i32 = arith.constant 0 : i32
    %c0_i32_0 = arith.constant 0 : i32
    %c0_i32_1 = arith.constant 0 : i32
    return %c0_i32, %c0_i32_0 : i32, i32
  }
  func.func @transform_9(%arg0: i32) -> (i32, i32) {
    %c0_i32 = arith.constant 0 : i32
    %c0_i32_0 = arith.constant 0 : i32
    %c0_i32_1 = arith.constant 0 : i32
    return %c0_i32, %c0_i32_0 : i32, i32
  }
  func.func @transform_10(%arg0: i32) -> (i32, i32) {
    %c0_i32 = arith.constant 0 : i32
    %c0_i32_0 = arith.constant 0 : i32
    %c0_i32_1 = arith.constant 0 : i32
    return %c0_i32, %c0_i32_0 : i32, i32
  }
  func.func @transform_11(%arg0: i32) -> (i32, i32) {
    %c0_i32 = arith.constant 0 : i32
    %c0_i32_0 = arith.constant 0 : i32
    %c0_i32_1 = arith.constant 0 : i32
    return %c0_i32, %c0_i32_0 : i32, i32
  }
  func.func @transform_12(%arg0: i32) -> (i32, i32) {
    %c0_i32 = arith.constant 0 : i32
    %c0_i32_0 = arith.constant 0 : i32
    %c0_i32_1 = arith.constant 0 : i32
    return %c0_i32, %c0_i32_0 : i32, i32
  }
  func.func @transform_13(%arg0: i32) -> (i32, i32) {
    %c0_i32 = arith.constant 0 : i32
    %c0_i32_0 = arith.constant 0 : i32
    %c0_i32_1 = arith.constant 0 : i32
    return %c0_i32, %c0_i32_0 : i32, i32
  }
  func.func @transform_14(%arg0: i32) -> (i32, i32) {
    %c0_i32 = arith.constant 0 : i32
    %c0_i32_0 = arith.constant 0 : i32
    %c0_i32_1 = arith.constant 0 : i32
    return %c0_i32, %c0_i32_0 : i32, i32
  }
  func.func @transform_15(%arg0: i32) -> (i32, i32) {
    %c0_i32 = arith.constant 0 : i32
    %c0_i32_0 = arith.constant 0 : i32
    %c0_i32_1 = arith.constant 0 : i32
    return %c0_i32, %c0_i32_0 : i32, i32
  }
  func.func @transform_16(%arg0: i32) -> (i32, i32) {
    %c0_i32 = arith.constant 0 : i32
    %c0_i32_0 = arith.constant 0 : i32
    %c0_i32_1 = arith.constant 0 : i32
    return %c0_i32, %c0_i32_0 : i32, i32
  }
  func.func @transform_17(%arg0: i32) -> (i32, i32) {
    %c0_i32 = arith.constant 0 : i32
    %c0_i32_0 = arith.constant 0 : i32
    %c0_i32_1 = arith.constant 0 : i32
    return %c0_i32, %c0_i32_0 : i32, i32
  }
  func.func @transform_18(%arg0: i32) -> (i32, i32, i32) {
    %c0_i32 = arith.constant 0 : i32
    %c0_i32_0 = arith.constant 0 : i32
    %c0_i32_1 = arith.constant 0 : i32
    return %arg0, %c0_i32, %c0_i32_0 : i32, i32, i32
  }
  func.func @transform_19(%arg0: i32) -> (i32, i32, i32) {
    %c0_i32 = arith.constant 0 : i32
    %c0_i32_0 = arith.constant 0 : i32
    %c0_i32_1 = arith.constant 0 : i32
    return %arg0, %c0_i32, %c0_i32_0 : i32, i32, i32
  }
}

</mosaic_0001>

<llo_original>
// kernel: tpu_custom_call.1
$region0: #{tpu_custom_call.1}
  #allocation0 [shape = 'u32[]', space=smem, size = 0x4, offset = 0x4, fixed_abs, tag = 'smem constant byte address 0x4 - core index']
  #allocation1 [shape = 'u32[144,128]{1,0:T(1,128)}', space=vmem, size = 0x12000, scoped, tag = 'internal scratch']
  %s0 = inlined_call_operand.vmem [shape: f32[2,8,32], index: 0, kind: input, shape index: {}]
  %s1 = inlined_call_operand.vmem [shape: f32[8,32], index: 1, kind: input, shape index: {}]
  %s2 = inlined_call_operand.vmem [shape: f32[8,32], index: 2, kind: input, shape index: {}]
  %s3 = inlined_call_operand.vmem [shape: f32[8,32], index: 3, kind: input, shape index: {}]
  %s4 = inlined_call_operand.hbm [shape: f32[8,32], index: 4, kind: input, shape index: {}]
  %s5 = inlined_call_operand.hbm [shape: f32[8,8], index: 5, kind: input, shape index: {}]
  %s6 = inlined_call_operand.vmem [shape: f32[1,32], index: 6, kind: input, shape index: {}]
  %s7 = inlined_call_operand.vmem [shape: f32[1,32], index: 7, kind: input, shape index: {}]
  %s8 = inlined_call_operand.vmem [shape: bf16[32,96], index: 8, kind: input, shape index: {}]
  %s9 = inlined_call_operand.vmem [shape: f32[1,96], index: 9, kind: input, shape index: {}]
  %s10 = inlined_call_operand.vmem [shape: bf16[32,32], index: 10, kind: input, shape index: {}]
  %s11 = inlined_call_operand.vmem [shape: f32[1,32], index: 11, kind: input, shape index: {}]
  %s12 = inlined_call_operand.vmem [shape: f32[1,32], index: 12, kind: input, shape index: {}]
  %s13 = inlined_call_operand.vmem [shape: f32[1,32], index: 13, kind: input, shape index: {}]
  %s14 = inlined_call_operand.vmem [shape: bf16[32,128], index: 14, kind: input, shape index: {}]
  %s15 = inlined_call_operand.vmem [shape: f32[1,128], index: 15, kind: input, shape index: {}]
  %s16 = inlined_call_operand.vmem [shape: bf16[128,32], index: 16, kind: input, shape index: {}]
  %s17 = inlined_call_operand.vmem [shape: f32[1,32], index: 17, kind: input, shape index: {}]
  %s18 = inlined_call_operand.hbm [shape: f32[2,8,32], index: 18, kind: output, shape index: {0}]
  %s19 = inlined_call_operand.hbm [shape: f32[2,8,64], index: 19, kind: output, shape index: {1}]
  %20 = xla_tuple %s18, %s19
  %s21 = sld [smem:[#allocation0]]
  $region121: #{tpu_custom_call.1} parent=0
    _
  %s23 = ssub.s32 1, %s21
  %s24 = scalar_select 0, %s23, %s21
  $region1: #{tpu_custom_call.1} parent=0
    #allocation2 [shape = 'u8[4096]{0}', space=vmem, size = 0x1000, scoped, tag = 'input window, operand 4, single buffered']
    #allocation3 [shape = 's32[2]{0}', space=sflag, size = 0x8, scoped, tag = 'scoped memory for tpu_custom_call.1']
    #allocation4 [shape = 's32[2]{0}', space=sflag, size = 0x8, scoped, tag = 'scoped memory for tpu_custom_call.1']
    #allocation5 [shape = 'u8[4096]{0}', space=vmem, size = 0x1000, scoped, tag = 'input window, operand 5, single buffered']
    #allocation6 [shape = 's32[1]{0}', space=sflag, size = 0x4, scoped, tag = 'scoped memory for tpu_custom_call.1']
    #allocation7 [shape = 'u8[8192]{0}', space=vmem, size = 0x2000, scoped, tag = 'output window, operand 0']
    #allocation8 [shape = 'u8[8192]{0}', space=vmem, size = 0x2000, scoped, tag = 'output window, operand 1']
    #allocation9 [shape = 's32[2]{0}', space=sflag, size = 0x8, scoped, tag = 'scoped memory for tpu_custom_call.1']
    %25 = vsyncpa [#allocation3], 0
    %26 = vsyncpa [#allocation6], 0
    %27 = vsyncpa [#allocation4], 0
    %s28 = scalar_lea.sflag [#allocation4], 1
    %29 = vsyncpa %s28, 0
    %30 = vsyncpa [#allocation9], 0
    %s31 = scalar_lea.sflag [#allocation9], 1
    %32 = vsyncpa %s31, 0
    loop: start=0, step=1, limit=4
    $region2: #{tpu_custom_call.1} parent=1 // loop_pre_header
      _
    $region3: #{tpu_custom_call.1} parent=1 // loop_header
      %s34 = sphi 0, %s38
      %p35 = scmp.ge.s32.totalorder %s34, 4
      %s44 = sphi 0, %s46
      %s47 = sphi 0, %s44
      %s48 = sphi 0, %s47
      %s64 = sphi 0, %s48
      %s68 = sphi 0, %s68
      %s70 = sphi 0, %s68
      %s71 = sphi 0, %s70
      %s85 = sphi 0, %s71
      %s89 = sphi 0, %s89
      %s91 = sphi 0, %s89
      %s92 = sphi 0, %s91
      %s106 = sphi 0, %s92
      %s110 = sphi 0, %s110
      %s112 = sphi 0, %s110
      %s113 = sphi 0, %s112
      %s127 = sphi 0, %s113
      %s131 = sphi 0, %s131
      %s133 = sphi 0, %s131
      %s134 = sphi 0, %s133
      %s148 = sphi 0, %s134
      %s152 = sphi 0, %s152
      %s154 = sphi 0, %s152
      %s155 = sphi 0, %s154
      %s169 = sphi 0, %s155
      %s173 = sphi 0, %s173
      %s175 = sphi 0, %s173
      %s176 = sphi 0, %s175
      %s190 = sphi 0, %s176
      %s194 = sphi 0, %s194
      %s196 = sphi 0, %s194
      %s197 = sphi 0, %s196
      %s211 = sphi 0, %s197
      %s215 = sphi 0, %s215
      %s217 = sphi 0, %s215
      %s218 = sphi 0, %s217
      %s232 = sphi 0, %s218
      %s236 = sphi 0, %s236
      %s238 = sphi 0, %s236
      %s239 = sphi 0, %s238
      %s253 = sphi 0, %s239
      %s257 = sphi 0, %s257
      %s259 = sphi 0, %s257
      %s260 = sphi 0, %s259
      %s274 = sphi 0, %s260
      %s278 = sphi 0, %s278
      %s280 = sphi 0, %s278
      %s281 = sphi 0, %s280
      %s295 = sphi 0, %s281
      %s299 = sphi 0, %s299
      %s301 = sphi 0, %s299
      %s302 = sphi 0, %s301
      %s316 = sphi 0, %s302
      %s320 = sphi 0, %s320
      %s322 = sphi 0, %s320
      %s323 = sphi 0, %s322
      %s337 = sphi 0, %s323
      %s341 = sphi 0, %s341
      %s343 = sphi 0, %s341
      %s344 = sphi 0, %s343
      %s358 = sphi 0, %s344
      %s362 = sphi 0, %s362
      %s364 = sphi 0, %s362
      %s365 = sphi 0, %s364
      %s379 = sphi 0, %s365
      %s383 = sphi 0, %s383
      %s385 = sphi 0, %s383
      %s386 = sphi 0, %s385
      %s400 = sphi 0, %s386
      %s404 = sphi 0, %s404
      %s406 = sphi 0, %s404
      %s407 = sphi 0, %s406
      %s421 = sphi 0, %s407
      %s427 = sphi 0, %s429
      %s430 = sphi 0, %s427
      %s431 = sphi 0, %s430
      %s447 = sphi 0, %s431
      %s453 = sphi 0, %s455
      %s456 = sphi 0, %s453
      %s457 = sphi 0, %s456
      %s473 = sphi 0, %s457
    $region4: #{tpu_custom_call.1} parent=1 // loop_header_branch
      %37 = sbr.rel (%p35) target = $region8
    $region5: #{tpu_custom_call.1} parent=1 // loop_body
      %s39 = ssub.s32 %s34, 1
      %s40 = ssub.s32 %s34, 2
      %s41 = sadd.s32 %s34, 1
      %s42 = ssub.s32 %s34, %s41
      %p43 = scmp.eq.s32.totalorder %s42, 0
      %s45 = sadd.s32 %s44, 1
      %s46 = scalar_select %p43, %s44, %s45
      %p49 = pneg %p43
      %p50 = scmp.eq.s32.totalorder %s34, 1
      %p51 = por %p49, %p50
      %p52 = scmp.ne.s32.totalorder %s44, %s47
      %p53 = scmp.eq.s32.totalorder %s34, 0
      %p54 = por %p52, %p53
      %p55 = scmp.ne.s32.totalorder %s44, %s47
      %p56 = scmp.eq.s32.totalorder %s39, 1
      %p57 = por %p55, %p56
      %p58 = scmp.ne.s32.totalorder %s47, %s48
      %p59 = scmp.eq.s32.totalorder %s39, 0
      %p60 = por %p58, %p59
      %p61 = scmp.ne.s32.totalorder %s47, %s48
      %p62 = scmp.eq.s32.totalorder %s40, 1
      %p63 = por %p61, %p62
      %p65 = scmp.ne.s32.totalorder %s48, %s64
      %p66 = scmp.eq.s32.totalorder %s40, 0
      %p67 = por %p65, %p66
      %s69 = sadd.s32 %s68, 1
      %p72 = scmp.eq.s32.totalorder %s34, 1
      %p73 = scmp.ne.s32.totalorder %s68, %s70
      %p74 = scmp.eq.s32.totalorder %s34, 0
      %p75 = por %p73, %p74
      %p76 = scmp.ne.s32.totalorder %s68, %s70
      %p77 = scmp.eq.s32.totalorder %s39, 1
      %p78 = por %p76, %p77
      %p79 = scmp.ne.s32.totalorder %s70, %s71
      %p80 = scmp.eq.s32.totalorder %s39, 0
      %p81 = por %p79, %p80
      %p82 = scmp.ne.s32.totalorder %s70, %s71
      %p83 = scmp.eq.s32.totalorder %s40, 1
      %p84 = por %p82, %p83
      %p86 = scmp.ne.s32.totalorder %s71, %s85
      %p87 = scmp.eq.s32.totalorder %s40, 0
      %p88 = por %p86, %p87
      %s90 = sadd.s32 %s89, 1
      %p93 = scmp.eq.s32.totalorder %s34, 1
      %p94 = scmp.ne.s32.totalorder %s89, %s91
      %p95 = scmp.eq.s32.totalorder %s34, 0
      %p96 = por %p94, %p95
      %p97 = scmp.ne.s32.totalorder %s89, %s91
      %p98 = scmp.eq.s32.totalorder %s39, 1
      %p99 = por %p97, %p98
      %p100 = scmp.ne.s32.totalorder %s91, %s92
      %p101 = scmp.eq.s32.totalorder %s39, 0
      %p102 = por %p100, %p101
      %p103 = scmp.ne.s32.totalorder %s91, %s92
      %p104 = scmp.eq.s32.totalorder %s40, 1
      %p105 = por %p103, %p104
      %p107 = scmp.ne.s32.totalorder %s92, %s106
      %p108 = scmp.eq.s32.totalorder %s40, 0
      %p109 = por %p107, %p108
      %s111 = sadd.s32 %s110, 1
      %p114 = scmp.eq.s32.totalorder %s34, 1
      %p115 = scmp.ne.s32.totalorder %s110, %s112
      %p116 = scmp.eq.s32.totalorder %s34, 0
      %p117 = por %p115, %p116
      %p118 = scmp.ne.s32.totalorder %s110, %s112
      %p119 = scmp.eq.s32.totalorder %s39, 1
      %p120 = por %p118, %p119
      %p121 = scmp.ne.s32.totalorder %s112, %s113
      %p122 = scmp.eq.s32.totalorder %s39, 0
      %p123 = por %p121, %p122
      %p124 = scmp.ne.s32.totalorder %s112, %s113
      %p125 = scmp.eq.s32.totalorder %s40, 1
      %p126 = por %p124, %p125
      %p128 = scmp.ne.s32.totalorder %s113, %s127
      %p129 = scmp.eq.s32.totalorder %s40, 0
      %p130 = por %p128, %p129
      %s132 = sadd.s32 %s131, 1
      %p135 = scmp.eq.s32.totalorder %s34, 1
      %p136 = scmp.ne.s32.totalorder %s131, %s133
      %p137 = scmp.eq.s32.totalorder %s34, 0
      %p138 = por %p136, %p137
      %p139 = scmp.ne.s32.totalorder %s131, %s133
      %p140 = scmp.eq.s32.totalorder %s39, 1
      %p141 = por %p139, %p140
      %p142 = scmp.ne.s32.totalorder %s133, %s134
      %p143 = scmp.eq.s32.totalorder %s39, 0
      %p144 = por %p142, %p143
      %p145 = scmp.ne.s32.totalorder %s133, %s134
      %p146 = scmp.eq.s32.totalorder %s40, 1
      %p147 = por %p145, %p146
      %p149 = scmp.ne.s32.totalorder %s134, %s148
      %p150 = scmp.eq.s32.totalorder %s40, 0
      %p151 = por %p149, %p150
      %s153 = sadd.s32 %s152, 1
      %p156 = scmp.eq.s32.totalorder %s34, 1
      %p157 = scmp.ne.s32.totalorder %s152, %s154
      %p158 = scmp.eq.s32.totalorder %s34, 0
      %p159 = por %p157, %p158
      %p160 = scmp.ne.s32.totalorder %s152, %s154
      %p161 = scmp.eq.s32.totalorder %s39, 1
      %p162 = por %p160, %p161
      %p163 = scmp.ne.s32.totalorder %s154, %s155
      %p164 = scmp.eq.s32.totalorder %s39, 0
      %p165 = por %p163, %p164
      %p166 = scmp.ne.s32.totalorder %s154, %s155
      %p167 = scmp.eq.s32.totalorder %s40, 1
      %p168 = por %p166, %p167
      %p170 = scmp.ne.s32.totalorder %s155, %s169
      %p171 = scmp.eq.s32.totalorder %s40, 0
      %p172 = por %p170, %p171
      %s174 = sadd.s32 %s173, 1
      %p177 = scmp.eq.s32.totalorder %s34, 1
      %p178 = scmp.ne.s32.totalorder %s173, %s175
      %p179 = scmp.eq.s32.totalorder %s34, 0
      %p180 = por %p178, %p179
      %p181 = scmp.ne.s32.totalorder %s173, %s175
      %p182 = scmp.eq.s32.totalorder %s39, 1
      %p183 = por %p181, %p182
      %p184 = scmp.ne.s32.totalorder %s175, %s176
      %p185 = scmp.eq.s32.totalorder %s39, 0
      %p186 = por %p184, %p185
      %p187 = scmp.ne.s32.totalorder %s175, %s176
      %p188 = scmp.eq.s32.totalorder %s40, 1
      %p189 = por %p187, %p188
      %p191 = scmp.ne.s32.totalorder %s176, %s190
      %p192 = scmp.eq.s32.totalorder %s40, 0
      %p193 = por %p191, %p192
      %s195 = sadd.s32 %s194, 1
      %p198 = scmp.eq.s32.totalorder %s34, 1
      %p199 = scmp.ne.s32.totalorder %s194, %s196
      %p200 = scmp.eq.s32.totalorder %s34, 0
      %p201 = por %p199, %p200
      %p202 = scmp.ne.s32.totalorder %s194, %s196
      %p203 = scmp.eq.s32.totalorder %s39, 1
      %p204 = por %p202, %p203
      %p205 = scmp.ne.s32.totalorder %s196, %s197
      %p206 = scmp.eq.s32.totalorder %s39, 0
      %p207 = por %p205, %p206
      %p208 = scmp.ne.s32.totalorder %s196, %s197
      %p209 = scmp.eq.s32.totalorder %s40, 1
      %p210 = por %p208, %p209
      %p212 = scmp.ne.s32.totalorder %s197, %s211
      %p213 = scmp.eq.s32.totalorder %s40, 0
      %p214 = por %p212, %p213
      %s216 = sadd.s32 %s215, 1
      %p219 = scmp.eq.s32.totalorder %s34, 1
      %p220 = scmp.ne.s32.totalorder %s215, %s217
      %p221 = scmp.eq.s32.totalorder %s34, 0
      %p222 = por %p220, %p221
      %p223 = scmp.ne.s32.totalorder %s215, %s217
      %p224 = scmp.eq.s32.totalorder %s39, 1
      %p225 = por %p223, %p224
      %p226 = scmp.ne.s32.totalorder %s217, %s218
      %p227 = scmp.eq.s32.totalorder %s39, 0
      %p228 = por %p226, %p227
      %p229 = scmp.ne.s32.totalorder %s217, %s218
      %p230 = scmp.eq.s32.totalorder %s40, 1
      %p231 = por %p229, %p230
      %p233 = scmp.ne.s32.totalorder %s218, %s232
      %p234 = scmp.eq.s32.totalorder %s40, 0
      %p235 = por %p233, %p234
      %s237 = sadd.s32 %s236, 1
      %p240 = scmp.eq.s32.totalorder %s34, 1
      %p241 = scmp.ne.s32.totalorder %s236, %s238
      %p242 = scmp.eq.s32.totalorder %s34, 0
      %p243 = por %p241, %p242
      %p244 = scmp.ne.s32.totalorder %s236, %s238
      %p245 = scmp.eq.s32.totalorder %s39, 1
      %p246 = por %p244, %p245
      %p247 = scmp.ne.s32.totalorder %s238, %s239
      %p248 = scmp.eq.s32.totalorder %s39, 0
      %p249 = por %p247, %p248
      %p250 = scmp.ne.s32.totalorder %s238, %s239
      %p251 = scmp.eq.s32.totalorder %s40, 1
      %p252 = por %p250, %p251
      %p254 = scmp.ne.s32.totalorder %s239, %s253
      %p255 = scmp.eq.s32.totalorder %s40, 0
      %p256 = por %p254, %p255
      %s258 = sadd.s32 %s257, 1
      %p261 = scmp.eq.s32.totalorder %s34, 1
      %p262 = scmp.ne.s32.totalorder %s257, %s259
      %p263 = scmp.eq.s32.totalorder %s34, 0
      %p264 = por %p262, %p263
      %p265 = scmp.ne.s32.totalorder %s257, %s259
      %p266 = scmp.eq.s32.totalorder %s39, 1
      %p267 = por %p265, %p266
      %p268 = scmp.ne.s32.totalorder %s259, %s260
      %p269 = scmp.eq.s32.totalorder %s39, 0
      %p270 = por %p268, %p269
      %p271 = scmp.ne.s32.totalorder %s259, %s260
      %p272 = scmp.eq.s32.totalorder %s40, 1
      %p273 = por %p271, %p272
      %p275 = scmp.ne.s32.totalorder %s260, %s274
      %p276 = scmp.eq.s32.totalorder %s40, 0
      %p277 = por %p275, %p276
      %s279 = sadd.s32 %s278, 1
      %p282 = scmp.eq.s32.totalorder %s34, 1
      %p283 = scmp.ne.s32.totalorder %s278, %s280
      %p284 = scmp.eq.s32.totalorder %s34, 0
      %p285 = por %p283, %p284
      %p286 = scmp.ne.s32.totalorder %s278, %s280
      %p287 = scmp.eq.s32.totalorder %s39, 1
      %p288 = por %p286, %p287
      %p289 = scmp.ne.s32.totalorder %s280, %s281
      %p290 = scmp.eq.s32.totalorder %s39, 0
      %p291 = por %p289, %p290
      %p292 = scmp.ne.s32.totalorder %s280, %s281
      %p293 = scmp.eq.s32.totalorder %s40, 1
      %p294 = por %p292, %p293
      %p296 = scmp.ne.s32.totalorder %s281, %s295
      %p297 = scmp.eq.s32.totalorder %s40, 0
      %p298 = por %p296, %p297
      %s300 = sadd.s32 %s299, 1
      %p303 = scmp.eq.s32.totalorder %s34, 1
      %p304 = scmp.ne.s32.totalorder %s299, %s301
      %p305 = scmp.eq.s32.totalorder %s34, 0
      %p306 = por %p304, %p305
      %p307 = scmp.ne.s32.totalorder %s299, %s301
      %p308 = scmp.eq.s32.totalorder %s39, 1
      %p309 = por %p307, %p308
      %p310 = scmp.ne.s32.totalorder %s301, %s302
      %p311 = scmp.eq.s32.totalorder %s39, 0
      %p312 = por %p310, %p311
      %p313 = scmp.ne.s32.totalorder %s301, %s302
      %p314 = scmp.eq.s32.totalorder %s40, 1
      %p315 = por %p313, %p314
      %p317 = scmp.ne.s32.totalorder %s302, %s316
      %p318 = scmp.eq.s32.totalorder %s40, 0
      %p319 = por %p317, %p318
      %s321 = sadd.s32 %s320, 1
      %p324 = scmp.eq.s32.totalorder %s34, 1
      %p325 = scmp.ne.s32.totalorder %s320, %s322
      %p326 = scmp.eq.s32.totalorder %s34, 0
      %p327 = por %p325, %p326
      %p328 = scmp.ne.s32.totalorder %s320, %s322
      %p329 = scmp.eq.s32.totalorder %s39, 1
      %p330 = por %p328, %p329
      %p331 = scmp.ne.s32.totalorder %s322, %s323
      %p332 = scmp.eq.s32.totalorder %s39, 0
      %p333 = por %p331, %p332
      %p334 = scmp.ne.s32.totalorder %s322, %s323
      %p335 = scmp.eq.s32.totalorder %s40, 1
      %p336 = por %p334, %p335
      %p338 = scmp.ne.s32.totalorder %s323, %s337
      %p339 = scmp.eq.s32.totalorder %s40, 0
      %p340 = por %p338, %p339
      %s342 = sadd.s32 %s341, 1
      %p345 = scmp.eq.s32.totalorder %s34, 1
      %p346 = scmp.ne.s32.totalorder %s341, %s343
      %p347 = scmp.eq.s32.totalorder %s34, 0
      %p348 = por %p346, %p347
      %p349 = scmp.ne.s32.totalorder %s341, %s343
      %p350 = scmp.eq.s32.totalorder %s39, 1
      %p351 = por %p349, %p350
      %p352 = scmp.ne.s32.totalorder %s343, %s344
      %p353 = scmp.eq.s32.totalorder %s39, 0
      %p354 = por %p352, %p353
      %p355 = scmp.ne.s32.totalorder %s343, %s344
      %p356 = scmp.eq.s32.totalorder %s40, 1
      %p357 = por %p355, %p356
      %p359 = scmp.ne.s32.totalorder %s344, %s358
      %p360 = scmp.eq.s32.totalorder %s40, 0
      %p361 = por %p359, %p360
      %s363 = sadd.s32 %s362, 1
      %p366 = scmp.eq.s32.totalorder %s34, 1
      %p367 = scmp.ne.s32.totalorder %s362, %s364
      %p368 = scmp.eq.s32.totalorder %s34, 0
      %p369 = por %p367, %p368
      %p370 = scmp.ne.s32.totalorder %s362, %s364
      %p371 = scmp.eq.s32.totalorder %s39, 1
      %p372 = por %p370, %p371
      %p373 = scmp.ne.s32.totalorder %s364, %s365
      %p374 = scmp.eq.s32.totalorder %s39, 0
      %p375 = por %p373, %p374
      %p376 = scmp.ne.s32.totalorder %s364, %s365
      %p377 = scmp.eq.s32.totalorder %s40, 1
      %p378 = por %p376, %p377
      %p380 = scmp.ne.s32.totalorder %s365, %s379
      %p381 = scmp.eq.s32.totalorder %s40, 0
      %p382 = por %p380, %p381
      %s384 = sadd.s32 %s383, 1
      %p387 = scmp.eq.s32.totalorder %s34, 1
      %p388 = scmp.ne.s32.totalorder %s383, %s385
      %p389 = scmp.eq.s32.totalorder %s34, 0
      %p390 = por %p388, %p389
      %p391 = scmp.ne.s32.totalorder %s383, %s385
      %p392 = scmp.eq.s32.totalorder %s39, 1
      %p393 = por %p391, %p392
      %p394 = scmp.ne.s32.totalorder %s385, %s386
      %p395 = scmp.eq.s32.totalorder %s39, 0
      %p396 = por %p394, %p395
      %p397 = scmp.ne.s32.totalorder %s385, %s386
      %p398 = scmp.eq.s32.totalorder %s40, 1
      %p399 = por %p397, %p398
      %p401 = scmp.ne.s32.totalorder %s386, %s400
      %p402 = scmp.eq.s32.totalorder %s40, 0
      %p403 = por %p401, %p402
      %s405 = sadd.s32 %s404, 1
      %p408 = scmp.eq.s32.totalorder %s34, 1
      %p409 = scmp.ne.s32.totalorder %s404, %s406
      %p410 = scmp.eq.s32.totalorder %s34, 0
      %p411 = por %p409, %p410
      %p412 = scmp.ne.s32.totalorder %s404, %s406
      %p413 = scmp.eq.s32.totalorder %s39, 1
      %p414 = por %p412, %p413
      %p415 = scmp.ne.s32.totalorder %s406, %s407
      %p416 = scmp.eq.s32.totalorder %s39, 0
      %p417 = por %p415, %p416
      %p418 = scmp.ne.s32.totalorder %s406, %s407
      %p419 = scmp.eq.s32.totalorder %s40, 1
      %p420 = por %p418, %p419
      %p422 = scmp.ne.s32.totalorder %s407, %s421
      %p423 = scmp.eq.s32.totalorder %s40, 0
      %p424 = por %p422, %p423
      %s425 = ssub.s32 %s34, %s41
      %p426 = scmp.eq.s32.totalorder %s425, 0
      %s428 = sadd.s32 %s427, 1
      %s429 = scalar_select %p426, %s427, %s428
      %p432 = pneg %p426
      %p433 = scmp.eq.s32.totalorder %s34, 1
      %p434 = por %p432, %p433
      %p435 = scmp.ne.s32.totalorder %s427, %s430
      %p436 = scmp.eq.s32.totalorder %s34, 0
      %p437 = por %p435, %p436
      %p438 = scmp.ne.s32.totalorder %s427, %s430
      %p439 = scmp.eq.s32.totalorder %s39, 1
      %p440 = por %p438, %p439
      %p441 = scmp.ne.s32.totalorder %s430, %s431
      %p442 = scmp.eq.s32.totalorder %s39, 0
      %p443 = por %p441, %p442
      %p444 = scmp.ne.s32.totalorder %s430, %s431
      %p445 = scmp.eq.s32.totalorder %s40, 1
      %p446 = por %p444, %p445
      %p448 = scmp.ne.s32.totalorder %s431, %s447
      %p449 = scmp.eq.s32.totalorder %s40, 0
      %p450 = por %p448, %p449
      %s451 = ssub.s32 %s34, %s41
      %p452 = scmp.eq.s32.totalorder %s451, 0
      %s454 = sadd.s32 %s453, 1
      %s455 = scalar_select %p452, %s453, %s454
      %p458 = pneg %p452
      %p459 = scmp.eq.s32.totalorder %s34, 1
      %p460 = por %p458, %p459
      %p461 = scmp.ne.s32.totalorder %s453, %s456
      %p462 = scmp.eq.s32.totalorder %s34, 0
      %p463 = por %p461, %p462
      %p464 = scmp.ne.s32.totalorder %s453, %s456
      %p465 = scmp.eq.s32.totalorder %s39, 1
      %p466 = por %p464, %p465
      %p467 = scmp.ne.s32.totalorder %s456, %s457
      %p468 = scmp.eq.s32.totalorder %s39, 0
      %p469 = por %p467, %p468
      %p470 = scmp.ne.s32.totalorder %s456, %s457
      %p471 = scmp.eq.s32.totalorder %s40, 1
      %p472 = por %p470, %p471
      %p474 = scmp.ne.s32.totalorder %s457, %s473
      %p475 = scmp.eq.s32.totalorder %s40, 0
      %p476 = por %p474, %p475
      %p477 = scmp.le.s32.totalorder 1, %s34
      %p478 = scmp.lt.s32.totalorder %s34, 3
      %p479 = pnand %p477, %p478
      %p480 = pneg %p479
      // Predicated region
      $region9: #{tpu_custom_call.1} parent=5 // pred_check
        _
      $region10: #{tpu_custom_call.1} parent=5 // pred_check_branch
        %482 = sbr.rel (%p479) target = $region12
      $region11: #{tpu_custom_call.1} parent=5 // pred_region
        %s483 = ssub.s32 %s34, 1
        // Predicated region
        $region13: #{tpu_custom_call.1} parent=11 // pred_check
          %p484 = pneg %p81
        $region14: #{tpu_custom_call.1} parent=11 // pred_check_branch
          %486 = sbr.rel (%p484) target = $region16
        $region15: #{tpu_custom_call.1} parent=11 // pred_region
          _
        $region16: #{tpu_custom_call.1} parent=11 // pred_fallthru
          _
        // Predicated region
        $region17: #{tpu_custom_call.1} parent=11 // pred_check
          %p487 = pneg %p102
        $region18: #{tpu_custom_call.1} parent=11 // pred_check_branch
          %489 = sbr.rel (%p487) target = $region20
        $region19: #{tpu_custom_call.1} parent=11 // pred_region
          _
        $region20: #{tpu_custom_call.1} parent=11 // pred_fallthru
          _
        // Predicated region
        $region21: #{tpu_custom_call.1} parent=11 // pred_check
          %p490 = pneg %p123
        $region22: #{tpu_custom_call.1} parent=11 // pred_check_branch
          %492 = sbr.rel (%p490) target = $region24
        $region23: #{tpu_custom_call.1} parent=11 // pred_region
          _
        $region24: #{tpu_custom_call.1} parent=11 // pred_fallthru
          _
        // Predicated region
        $region25: #{tpu_custom_call.1} parent=11 // pred_check
          %p493 = pneg %p144
        $region26: #{tpu_custom_call.1} parent=11 // pred_check_branch
          %495 = sbr.rel (%p493) target = $region28
        $region27: #{tpu_custom_call.1} parent=11 // pred_region
          %s497 = ssub.s32 128, 128
          %498 = vsyncadd [#allocation3], %s497
          %s500 = sshll.u32 [#allocation2], 4
          %s501 = int_to_ptr.vmem [resolvable:$true] %s500
          %503 = dma.hbm_to_vmem [thread:$0]  %s4, 128, %s501, [#allocation3]
        $region28: #{tpu_custom_call.1} parent=11 // pred_fallthru
          _
        // Predicated region
        $region29: #{tpu_custom_call.1} parent=11 // pred_check
          %p504 = pneg %p165
        $region30: #{tpu_custom_call.1} parent=11 // pred_check_branch
          %506 = sbr.rel (%p504) target = $region32
        $region31: #{tpu_custom_call.1} parent=11 // pred_region
          %s508 = ssub.s32 128, 128
          %509 = vsyncadd [#allocation6], %s508
          %s511 = sshll.u32 [#allocation5], 4
          %s512 = int_to_ptr.vmem [resolvable:$true] %s511
          %514 = dma.hbm_to_vmem [thread:$0]  %s5, 128, %s512, [#allocation6]
        $region32: #{tpu_custom_call.1} parent=11 // pred_fallthru
          _
        // Predicated region
        $region33: #{tpu_custom_call.1} parent=11 // pred_check
          %p515 = pneg %p186
        $region34: #{tpu_custom_call.1} parent=11 // pred_check_branch
          %517 = sbr.rel (%p515) target = $region36
        $region35: #{tpu_custom_call.1} parent=11 // pred_region
          _
        $region36: #{tpu_custom_call.1} parent=11 // pred_fallthru
          _
        // Predicated region
        $region37: #{tpu_custom_call.1} parent=11 // pred_check
          %p518 = pneg %p207
        $region38: #{tpu_custom_call.1} parent=11 // pred_check_branch
          %520 = sbr.rel (%p518) target = $region40
        $region39: #{tpu_custom_call.1} parent=11 // pred_region
          _
        $region40: #{tpu_custom_call.1} parent=11 // pred_fallthru
          _
        // Predicated region
        $region41: #{tpu_custom_call.1} parent=11 // pred_check
          %p521 = pneg %p228
        $region42: #{tpu_custom_call.1} parent=11 // pred_check_branch
          %523 = sbr.rel (%p521) target = $region44
        $region43: #{tpu_custom_call.1} parent=11 // pred_region
          _
        $region44: #{tpu_custom_call.1} parent=11 // pred_fallthru
          _
        // Predicated region
        $region45: #{tpu_custom_call.1} parent=11 // pred_check
          %p524 = pneg %p249
        $region46: #{tpu_custom_call.1} parent=11 // pred_check_branch
          %526 = sbr.rel (%p524) target = $region48
        $region47: #{tpu_custom_call.1} parent=11 // pred_region
          _
        $region48: #{tpu_custom_call.1} parent=11 // pred_fallthru
          _
        // Predicated region
        $region49: #{tpu_custom_call.1} parent=11 // pred_check
          %p527 = pneg %p270
        $region50: #{tpu_custom_call.1} parent=11 // pred_check_branch
          %529 = sbr.rel (%p527) target = $region52
        $region51: #{tpu_custom_call.1} parent=11 // pred_region
          _
        $region52: #{tpu_custom_call.1} parent=11 // pred_fallthru
          _
        // Predicated region
        $region53: #{tpu_custom_call.1} parent=11 // pred_check
          %p530 = pneg %p291
        $region54: #{tpu_custom_call.1} parent=11 // pred_check_branch
          %532 = sbr.rel (%p530) target = $region56
        $region55: #{tpu_custom_call.1} parent=11 // pred_region
          _
        $region56: #{tpu_custom_call.1} parent=11 // pred_fallthru
          _
        // Predicated region
        $region57: #{tpu_custom_call.1} parent=11 // pred_check
          %p533 = pneg %p312
        $region58: #{tpu_custom_call.1} parent=11 // pred_check_branch
          %535 = sbr.rel (%p533) target = $region60
        $region59: #{tpu_custom_call.1} parent=11 // pred_region
          _
        $region60: #{tpu_custom_call.1} parent=11 // pred_fallthru
          _
        // Predicated region
        $region61: #{tpu_custom_call.1} parent=11 // pred_check
          %p536 = pneg %p333
        $region62: #{tpu_custom_call.1} parent=11 // pred_check_branch
          %538 = sbr.rel (%p536) target = $region64
        $region63: #{tpu_custom_call.1} parent=11 // pred_region
          _
        $region64: #{tpu_custom_call.1} parent=11 // pred_fallthru
          _
        // Predicated region
        $region65: #{tpu_custom_call.1} parent=11 // pred_check
          %p539 = pneg %p354
        $region66: #{tpu_custom_call.1} parent=11 // pred_check_branch
          %541 = sbr.rel (%p539) target = $region68
        $region67: #{tpu_custom_call.1} parent=11 // pred_region
          _
        $region68: #{tpu_custom_call.1} parent=11 // pred_fallthru
          _
        // Predicated region
        $region69: #{tpu_custom_call.1} parent=11 // pred_check
          %p542 = pneg %p375
        $region70: #{tpu_custom_call.1} parent=11 // pred_check_branch
          %544 = sbr.rel (%p542) target = $region72
        $region71: #{tpu_custom_call.1} parent=11 // pred_region
          _
        $region72: #{tpu_custom_call.1} parent=11 // pred_fallthru
          _
        // Predicated region
        $region73: #{tpu_custom_call.1} parent=11 // pred_check
          %p545 = pneg %p396
        $region74: #{tpu_custom_call.1} parent=11 // pred_check_branch
          %547 = sbr.rel (%p545) target = $region76
        $region75: #{tpu_custom_call.1} parent=11 // pred_region
          _
        $region76: #{tpu_custom_call.1} parent=11 // pred_fallthru
          _
        // Predicated region
        $region77: #{tpu_custom_call.1} parent=11 // pred_check
          %p548 = pneg %p417
        $region78: #{tpu_custom_call.1} parent=11 // pred_check_branch
          %550 = sbr.rel (%p548) target = $region80
        $region79: #{tpu_custom_call.1} parent=11 // pred_region
          _
        $region80: #{tpu_custom_call.1} parent=11 // pred_fallthru
          _
      $region12: #{tpu_custom_call.1} parent=5 // pred_fallthru
        _
      %p551 = scmp.lt.s32.totalorder %s34, 2
      // Predicated region
      $region81: #{tpu_custom_call.1} parent=5 // pred_check
        %p552 = pneg %p551
      $region82: #{tpu_custom_call.1} parent=5 // pred_check_branch
        %554 = sbr.rel (%p552) target = $region84
      $region83: #{tpu_custom_call.1} parent=5 // pred_region
        // Predicated region
        $region85: #{tpu_custom_call.1} parent=83 // pred_check
          %p555 = pneg %p54
        $region86: #{tpu_custom_call.1} parent=83 // pred_check_branch
          %557 = sbr.rel (%p555) target = $region88
        $region87: #{tpu_custom_call.1} parent=83 // pred_region
          %p558 = scmp.lt.s32.totalorder %s34, 1
          %s559 = scalar_select %p558, %s34, 1
          %s560 = smul.addr %s559, 8
          %s561 = scalar_lea.vmem %s0, %s560
        $region88: #{tpu_custom_call.1} parent=83 // pred_fallthru
          _
      $region84: #{tpu_custom_call.1} parent=5 // pred_fallthru
        _
      %p562 = scmp.le.s32.totalorder 1, %s34
      %p563 = scmp.lt.s32.totalorder %s34, 3
      %p564 = pnand %p562, %p563
      %p565 = pneg %p564
      // Predicated region
      $region89: #{tpu_custom_call.1} parent=5 // pred_check
        _
      $region90: #{tpu_custom_call.1} parent=5 // pred_check_branch
        %567 = sbr.rel (%p564) target = $region92
      $region91: #{tpu_custom_call.1} parent=5 // pred_region
        %s568 = ssub.s32 %s34, 1
        // Predicated region
        $region93: #{tpu_custom_call.1} parent=91 // pred_check
          %p569 = pneg %p144
        $region94: #{tpu_custom_call.1} parent=91 // pred_check_branch
          %571 = sbr.rel (%p569) target = $region96
        $region95: #{tpu_custom_call.1} parent=91 // pred_region
          %572 = dma.done [#allocation3], 128
        $region96: #{tpu_custom_call.1} parent=91 // pred_fallthru
          _
        // Predicated region
        $region97: #{tpu_custom_call.1} parent=91 // pred_check
          %p573 = pneg %p165
        $region98: #{tpu_custom_call.1} parent=91 // pred_check_branch
          %575 = sbr.rel (%p573) target = $region100
        $region99: #{tpu_custom_call.1} parent=91 // pred_region
          %576 = dma.done [#allocation6], 128
        $region100: #{tpu_custom_call.1} parent=91 // pred_fallthru
          _
        %p577 = scmp.lt.s32.totalorder %s39, 1
        %s578 = scalar_select %p577, %s39, 1
        %s579 = smul.addr %s578, 8
        %s580 = scalar_lea.vmem %s0, %s579
        %p581 = pneg %p60
        %p582 = pneg %p57
        %p583 = pneg %p81
        %p584 = pneg %p78
        %p585 = pneg %p102
        %p586 = pneg %p99
        %p587 = pneg %p123
        %p588 = pneg %p120
        %p589 = pneg %p144
        %p590 = pneg %p141
        %p591 = pneg %p165
        %p592 = pneg %p162
        %p593 = pneg %p186
        %p594 = pneg %p183
        %p595 = pneg %p207
        %p596 = pneg %p204
        %p597 = pneg %p228
        %p598 = pneg %p225
        %p599 = pneg %p249
        %p600 = pneg %p246
        %p601 = pneg %p270
        %p602 = pneg %p267
        %p603 = pneg %p291
        %p604 = pneg %p288
        %p605 = pneg %p312
        %p606 = pneg %p309
        %p607 = pneg %p333
        %p608 = pneg %p330
        %p609 = pneg %p354
        %p610 = pneg %p351
        %p611 = pneg %p375
        %p612 = pneg %p372
        %p613 = pneg %p396
        %p614 = pneg %p393
        %p615 = pneg %p417
        %p616 = pneg %p414
        %p617 = pneg %p443
        %p618 = pneg %p440
        %s619 = sand.u32 %s430, 1
        %s620 = scalar_lea.sflag [#allocation4], %s619
        %s621 = sand.u32 %s430, 1
        %s622 = smul.addr %s621, 8
        %s623 = scalar_lea.vmem [#allocation7], %s622
        %p624 = pneg %p469
        %p625 = pneg %p466
        %s626 = sand.u32 %s456, 1
        %s627 = scalar_lea.sflag [#allocation9], %s626
        %s628 = sand.u32 %s456, 1
        %s629 = smul.addr %s628, 8
        %s630 = scalar_lea.vmem [#allocation8], %s629
        %p631 = scmp.lt.s32.totalorder %s39, 1
        %s632 = scalar_select %p631, %s39, 1
        %s633 = smul.addr %s632, 8
        %s634 = scalar_lea.vmem %s0, %s633
        %v636 = vld [vmem:[%s634] sm:$0xff]
        %v637 = vld [vmem:[%s6] sm:$0x1]
        %v638 = vld [vmem:[%s7] sm:$0x1]
        %vm639 = vcmask 261120
        %v640 = vsel %vm639, %v636, 0.0
        %641 = vadd.xlane.f32.xlu0 %v640
        %v642 = vpop.xlane.xlu0 %641
        %v643 = vrcp.pop 32.0
        %v644 = vmul.f32 %v642, %v643
        %v645 = vsub.f32 %v636, %v644
        %v646 = vmul.f32 %v645, %v645
        %v647 = vsel %vm639, %v646, 0.0
        %648 = vadd.xlane.f32.xlu0 %v647
        %v649 = vpop.xlane.xlu0 %648
        %v650 = vmul.f32 %v649, %v643
        %v652 = vlaneseq
        %v653 = vshrl.u32 %v652, 7
        %v654 = vsub.s32 0, %v653
        %v655 = vrot.slane %v637, %v654
        %v657 = vmul.f32 %v655, %v645
        %v658 = vadd.f32 %v650, 1e-12
        %v659 = vrcp.pop %v658
        %v660 = vmul.f32 %v657, %v659
        %v662 = vlaneseq
        %v663 = vshrl.u32 %v662, 7
        %v664 = vsub.s32 0, %v663
        %v665 = vrot.slane %v638, %v664
        %v667 = vadd.f32 %v660, %v665
        %v668 = vpack.c.bf16 %v667, %v667
        %v669 = vld [vmem:[%s8] sm:$0xf]
        %v670 = vld [vmem:[%s8 + $0x4] sm:$0xf]
        %v671 = vld [vmem:[%s8 + $0x8] sm:$0xf]
        %v672 = vld [vmem:[%s8 + $0xc] sm:$0xf]
        %v673 = vld [vmem:[%s9] sm:$0x1]
        %v675 = vlaneseq
        %v676 = vshrl.u32 %v675, 7
        %v677 = vsub.s32 0, %v676
        %v678 = vrot.slane %v673, %v677
        %v684 = vunpack.c.l.b16 %v669
        %v685 = vunpack.c.l.b16 %v670
        %v686 = vunpack.c.l.b16 %v671
        %v687 = vunpack.c.l.b16 %v672
        %v688 = vpack.c.b16 %v685, %v684
        %v689 = vpack.c.b16 %v687, %v686
        %v693 = vsel %vm639, %v668, 0
        %695 = vmatprep.subr.bf16.mxu0 0
        %696 = vmatpush1.bf16.msra.mxu0 %v688
        %697 = vmatprep.subr.bf16.mxu0 0
        %698 = vmatpush1.bf16.msra.mxu0 %v689
        %699 = vmatprep.subr.bf16.mxu0 0
        %700 = vmatpush1.bf16.msra.mxu0 0
        %701 = vmatprep.subr.bf16.mxu0 0
        %702 = vmatpush1.bf16.msra.mxu0 0
        %703 = vmatprep.subr.bf16.mxu0 0
        %704 = vmatpush1.bf16.msra.mxu0 0
        %705 = vmatprep.subr.bf16.mxu0 0
        %706 = vmatpush1.bf16.msra.mxu0 0
        %707 = vmatprep.subr.bf16.mxu0 0
        %708 = vmatpush1.bf16.msra.mxu0 0
        %709 = vmatprep.subr.bf16.mxu0 0
        %710 = vmatpush1.bf16.msra.mxu0 0
        %711 = vmatprep.subr.bf16.mxu0 0
        %712 = vmatpush1.bf16.msra.mxu0 0
        %713 = vmatprep.subr.bf16.mxu0 0
        %714 = vmatpush1.bf16.msra.mxu0 0
        %715 = vmatprep.subr.bf16.mxu0 0
        %716 = vmatpush1.bf16.msra.mxu0 0
        %717 = vmatprep.subr.bf16.mxu0 0
        %718 = vmatpush1.bf16.msra.mxu0 0
        %719 = vmatprep.subr.bf16.mxu0 0
        %720 = vmatpush1.bf16.msra.mxu0 0
        %721 = vmatprep.subr.bf16.mxu0 0
        %722 = vmatpush1.bf16.msra.mxu0 0
        %723 = vmatprep.subr.bf16.mxu0 0
        %724 = vmatpush1.bf16.msra.mxu0 0
        %725 = vmatprep.subr.bf16.mxu0 0
        %726 = vmatpush1.bf16.msra.mxu0 0
        %727 = vmatprep.mubr.bf16.mxu0 0
        %728 = vmatmul.mubr.bf16.gmra.mrb[0].mxu0 %v693
        %v729 = vpop.f32.mrb[0].mxu0
        %v730 = vadd.f32 %v678, %v729
        %v731 = vpop.f32.mrb[0].mxu0
        %v732 = vpop.f32.mrb[0].mxu0
        %v733 = vpop.f32.mrb[0].mxu0
        %734 = vdwg.mxu0
        %736 = vrot.lane.b32.xlu0 %v730, 96
        %v737 = vpop.permute.xlu0 %736
        %vm739 = vcmask 523264
        %740 = vst.msk [vmem:[%s630] sm:$0xff] %vm739, %v737
        %v741 = vlaneseq
        %v742 = vand.u32 %v741, 127
        %vm743 = vcmp.lt.s32.totalorder %v742, 0
        %v744 = vsub.s32 0, %v742
        %v745 = vsel %vm743, %v744, %v742
        %v746 = vshrl.u32 %v745, 1
        %v747 = vand.u32 %v745, 1
        %v748 = vsub.s32 0, %v747
        %v749 = vsel %vm743, %v748, %v747
        %vm750 = vcmp.ne.s32.totalorder %v749, 0
        %vm751 = vcmp.lt.s32.totalorder %v749, 0
        %vm752 = vmand %vm751, %vm750
        %v753 = vadd.s32 %v749, 2
        %v754 = vsel %vm752, %v753, %v749
        %vm755 = vcmp.eq.s32.totalorder %v754, 0
        %v756 = vld [vmem:[%s1] sm:$0xff]
        %v757 = vld [vmem:[%s2] sm:$0xff]
        %vm758 = vcmask 1047808
        %759 = vrot.lane.b32.xlu0 %v730, 32
        %v760 = vpop.permute.xlu0 %759
        %v761 = vsel %vm758, %v760, %v730
        %762 = vrot.lane.b32.xlu0 %v761, 32
        %v763 = vpop.permute.xlu0 %762
        %v764 = vsel %vm758, %v763, %v730
        %v765 = vsel %vm755, 1, 0
        %vm766 = vcmp.eq.s32.totalorder %v765, 1
        %768 = vrot.lane.b32.xlu0 %v764, 127
        %v769 = vpop.permute.xlu0 %768
        %771 = vrot.lane.b32.xlu0 %v764, 97
        %v772 = vpop.permute.xlu0 %771
        %v774 = vsel %vm766, %v769, %v772
        %v775 = vmul.f32 %v730, %v756
        %v776 = vmul.f32 %v774, %v757
        %v777 = vadd.f32 %v775, %v776
        %v778 = vld [vmem:[%s3] sm:$0xff]
        %v779 = vld [vmem:[#allocation2] sm:$0xff]
        %780 = vrot.lane.b32.xlu0 %v737, 32
        %v781 = vpop.permute.xlu0 %780
        %v782 = vsel %vm758, %v781, %v737
        %783 = vrot.lane.b32.xlu0 %v782, 32
        %v784 = vpop.permute.xlu0 %783
        %v785 = vsel %vm758, %v784, %v737
        %787 = vrot.lane.b32.xlu0 %v785, 127
        %v788 = vpop.permute.xlu0 %787
        %790 = vrot.lane.b32.xlu0 %v785, 97
        %v791 = vpop.permute.xlu0 %790
        %v793 = vsel %vm766, %v788, %v791
        %795 = vrot.lane.b32.xlu0 %v778, 32
        %v796 = vpop.permute.xlu0 %795
        %v798 = vmul.f32 %v730, %v796
        %v799 = vmul.f32 %v793, %v779
        %801 = vrot.lane.b32.xlu0 %v799, 32
        %v802 = vpop.permute.xlu0 %801
        %v804 = vadd.f32 %v798, %v802
        %v805 = vld [vmem:[#allocation5] sm:$0xff]
        %v806 = vpack.c.bf16 %v777, %v777
        %v807 = vpack.c.bf16 %v804, %v804
        %v808 = vpack.c.bf16 %v730, %v730
        %810 = vrot.lane.b32.xlu0 %v807, 96
        %v811 = vpop.permute.xlu0 %810
        %vm812 = vcmask 64512
        %v814 = vsel %vm812, %v806, 0
        %v817 = vsel %vm812, %v811, 0
        %819 = vmatprep.subr.bf16.mxu0 0
        %820 = vmatpush1.bf16.xpose.msra.mxu0 %v817
        %821 = vmatprep.subr.bf16.mxu0 0
        %822 = vmatpush1.bf16.xpose.msra.mxu0 0
        %823 = vmatprep.subr.bf16.mxu0 0
        %824 = vmatpush1.bf16.xpose.msra.mxu0 0
        %825 = vmatprep.subr.bf16.mxu0 0
        %826 = vmatpush1.bf16.xpose.msra.mxu0 0
        %827 = vmatprep.subr.bf16.mxu0 0
        %828 = vmatpush1.bf16.xpose.msra.mxu0 0
        %829 = vmatprep.subr.bf16.mxu0 0
        %830 = vmatpush1.bf16.xpose.msra.mxu0 0
        %831 = vmatprep.subr.bf16.mxu0 0
        %832 = vmatpush1.bf16.xpose.msra.mxu0 0
        %833 = vmatprep.subr.bf16.mxu0 0
        %834 = vmatpush1.bf16.xpose.msra.mxu0 0
        %835 = vmatprep.subr.bf16.mxu0 0
        %836 = vmatpush1.bf16.xpose.msra.mxu0 0
        %837 = vmatprep.subr.bf16.mxu0 0
        %838 = vmatpush1.bf16.xpose.msra.mxu0 0
        %839 = vmatprep.subr.bf16.mxu0 0
        %840 = vmatpush1.bf16.xpose.msra.mxu0 0
        %841 = vmatprep.subr.bf16.mxu0 0
        %842 = vmatpush1.bf16.xpose.msra.mxu0 0
        %843 = vmatprep.subr.bf16.mxu0 0
        %844 = vmatpush1.bf16.xpose.msra.mxu0 0
        %845 = vmatprep.subr.bf16.mxu0 0
        %846 = vmatpush1.bf16.xpose.msra.mxu0 0
        %847 = vmatprep.subr.bf16.mxu0 0
        %848 = vmatpush1.bf16.xpose.msra.mxu0 0
        %849 = vmatprep.subr.bf16.mxu0 0
        %850 = vmatpush1.bf16.xpose.msra.mxu0 0
        %851 = vmatprep.mubr.bf16.mxu0 0
        %852 = vmatmul.mubr.bf16.gmra.mrb[0].mxu0 %v814
        %v853 = vpop.f32.mrb[0].mxu0
        %v854 = vadd.f32 0.0, %v853
        %v855 = vpop.f32.mrb[0].mxu0
        %v856 = vpop.f32.mrb[0].mxu0
        %v857 = vpop.f32.mrb[0].mxu0
        %858 = vdwg.mxu0
        %v859 = vmul.f32 %v854, 0.35355338
        %v860 = vadd.f32 %v859, %v805
        %v861 = vsel %vm812, %v860, -inf
        %862 = vmax.xlane.f32.xlu0 %v861
        %v863 = vpop.xlane.xlu0 %862
        %v864 = vsub.f32 %v860, %v863
        %v865 = vmul.f32 %v864, 1.442695
        %v866 = vpow.pop %v865
        %v867 = vsel %vm812, %v866, 0.0
        %868 = vadd.xlane.f32.xlu0 %v867
        %v869 = vpop.xlane.xlu0 %868
        %v870 = vrcp.pop %v869
        %v871 = vmul.f32 %v866, %v870
        %v872 = vpack.c.bf16 %v871, %v871
        %874 = vrot.lane.b32.xlu0 %v808, 64
        %v875 = vpop.permute.xlu0 %874
        %v877 = vsel %vm812, %v872, 0
        %vm879 = vcmask 1043456
        %v881 = vsel %vm879, %v875, 0
        %883 = vmatprep.subr.bf16.mxu0 0
        %884 = vmatpush1.bf16.msra.mxu0 %v881
        %885 = vmatprep.subr.bf16.mxu0 0
        %886 = vmatpush1.bf16.msra.mxu0 0
        %887 = vmatprep.subr.bf16.mxu0 0
        %888 = vmatpush1.bf16.msra.mxu0 0
        %889 = vmatprep.subr.bf16.mxu0 0
        %890 = vmatpush1.bf16.msra.mxu0 0
        %891 = vmatprep.subr.bf16.mxu0 0
        %892 = vmatpush1.bf16.msra.mxu0 0
        %893 = vmatprep.subr.bf16.mxu0 0
        %894 = vmatpush1.bf16.msra.mxu0 0
        %895 = vmatprep.subr.bf16.mxu0 0
        %896 = vmatpush1.bf16.msra.mxu0 0
        %897 = vmatprep.subr.bf16.mxu0 0
        %898 = vmatpush1.bf16.msra.mxu0 0
        %899 = vmatprep.subr.bf16.mxu0 0
        %900 = vmatpush1.bf16.msra.mxu0 0
        %901 = vmatprep.subr.bf16.mxu0 0
        %902 = vmatpush1.bf16.msra.mxu0 0
        %903 = vmatprep.subr.bf16.mxu0 0
        %904 = vmatpush1.bf16.msra.mxu0 0
        %905 = vmatprep.subr.bf16.mxu0 0
        %906 = vmatpush1.bf16.msra.mxu0 0
        %907 = vmatprep.subr.bf16.mxu0 0
        %908 = vmatpush1.bf16.msra.mxu0 0
        %909 = vmatprep.subr.bf16.mxu0 0
        %910 = vmatpush1.bf16.msra.mxu0 0
        %911 = vmatprep.subr.bf16.mxu0 0
        %912 = vmatpush1.bf16.msra.mxu0 0
        %913 = vmatprep.subr.bf16.mxu0 0
        %914 = vmatpush1.bf16.msra.mxu0 0
        %915 = vmatprep.mubr.bf16.mxu0 0
        %916 = vmatmul.mubr.bf16.gmra.mrb[0].mxu0 %v877
        %v917 = vpop.f32.mrb[0].mxu0
        %v918 = vadd.f32 0.0, %v917
        %v919 = vpop.f32.mrb[0].mxu0
        %v920 = vpop.f32.mrb[0].mxu0
        %v921 = vpop.f32.mrb[0].mxu0
        %922 = vdwg.mxu0
        %v923 = vpack.c.bf16 %v918, %v918
        %925 = vrot.lane.b32.xlu0 %v806, 120
        %v926 = vpop.permute.xlu0 %925
        %927 = vrot.lane.b32.xlu0 %v807, 88
        %v928 = vpop.permute.xlu0 %927
        %v930 = vsel %vm812, %v926, 0
        %v933 = vsel %vm812, %v928, 0
        %935 = vmatprep.subr.bf16.mxu0 0
        %936 = vmatpush1.bf16.xpose.msra.mxu0 %v933
        %937 = vmatprep.subr.bf16.mxu0 0
        %938 = vmatpush1.bf16.xpose.msra.mxu0 0
        %939 = vmatprep.subr.bf16.mxu0 0
        %940 = vmatpush1.bf16.xpose.msra.mxu0 0
        %941 = vmatprep.subr.bf16.mxu0 0
        %942 = vmatpush1.bf16.xpose.msra.mxu0 0
        %943 = vmatprep.subr.bf16.mxu0 0
        %944 = vmatpush1.bf16.xpose.msra.mxu0 0
        %945 = vmatprep.subr.bf16.mxu0 0
        %946 = vmatpush1.bf16.xpose.msra.mxu0 0
        %947 = vmatprep.subr.bf16.mxu0 0
        %948 = vmatpush1.bf16.xpose.msra.mxu0 0
        %949 = vmatprep.subr.bf16.mxu0 0
        %950 = vmatpush1.bf16.xpose.msra.mxu0 0
        %951 = vmatprep.subr.bf16.mxu0 0
        %952 = vmatpush1.bf16.xpose.msra.mxu0 0
        %953 = vmatprep.subr.bf16.mxu0 0
        %954 = vmatpush1.bf16.xpose.msra.mxu0 0
        %955 = vmatprep.subr.bf16.mxu0 0
        %956 = vmatpush1.bf16.xpose.msra.mxu0 0
        %957 = vmatprep.subr.bf16.mxu0 0
        %958 = vmatpush1.bf16.xpose.msra.mxu0 0
        %959 = vmatprep.subr.bf16.mxu0 0
        %960 = vmatpush1.bf16.xpose.msra.mxu0 0
        %961 = vmatprep.subr.bf16.mxu0 0
        %962 = vmatpush1.bf16.xpose.msra.mxu0 0
        %963 = vmatprep.subr.bf16.mxu0 0
        %964 = vmatpush1.bf16.xpose.msra.mxu0 0
        %965 = vmatprep.subr.bf16.mxu0 0
        %966 = vmatpush1.bf16.xpose.msra.mxu0 0
        %967 = vmatprep.mubr.bf16.mxu0 0
        %968 = vmatmul.mubr.bf16.gmra.mrb[0].mxu0 %v930
        %v969 = vpop.f32.mrb[0].mxu0
        %v970 = vadd.f32 0.0, %v969
        %v971 = vpop.f32.mrb[0].mxu0
        %v972 = vpop.f32.mrb[0].mxu0
        %v973 = vpop.f32.mrb[0].mxu0
        %974 = vdwg.mxu0
        %v975 = vmul.f32 %v970, 0.35355338
        %v976 = vadd.f32 %v975, %v805
        %v977 = vsel %vm812, %v976, -inf
        %978 = vmax.xlane.f32.xlu0 %v977
        %v979 = vpop.xlane.xlu0 %978
        %v980 = vsub.f32 %v976, %v979
        %v981 = vmul.f32 %v980, 1.442695
        %v982 = vpow.pop %v981
        %v983 = vsel %vm812, %v982, 0.0
        %984 = vadd.xlane.f32.xlu0 %v983
        %v985 = vpop.xlane.xlu0 %984
        %v986 = vrcp.pop %v985
        %v987 = vmul.f32 %v982, %v986
        %v988 = vpack.c.bf16 %v987, %v987
        %989 = vrot.lane.b32.xlu0 %v808, 56
        %v990 = vpop.permute.xlu0 %989
        %v992 = vsel %vm812, %v988, 0
        %v995 = vsel %vm879, %v990, 0
        %997 = vmatprep.subr.bf16.mxu0 0
        %998 = vmatpush1.bf16.msra.mxu0 %v995
        %999 = vmatprep.subr.bf16.mxu0 0
        %1000 = vmatpush1.bf16.msra.mxu0 0
        %1001 = vmatprep.subr.bf16.mxu0 0
        %1002 = vmatpush1.bf16.msra.mxu0 0
        %1003 = vmatprep.subr.bf16.mxu0 0
        %1004 = vmatpush1.bf16.msra.mxu0 0
        %1005 = vmatprep.subr.bf16.mxu0 0
        %1006 = vmatpush1.bf16.msra.mxu0 0
        %1007 = vmatprep.subr.bf16.mxu0 0
        %1008 = vmatpush1.bf16.msra.mxu0 0
        %1009 = vmatprep.subr.bf16.mxu0 0
        %1010 = vmatpush1.bf16.msra.mxu0 0
        %1011 = vmatprep.subr.bf16.mxu0 0
        %1012 = vmatpush1.bf16.msra.mxu0 0
        %1013 = vmatprep.subr.bf16.mxu0 0
        %1014 = vmatpush1.bf16.msra.mxu0 0
        %1015 = vmatprep.subr.bf16.mxu0 0
        %1016 = vmatpush1.bf16.msra.mxu0 0
        %1017 = vmatprep.subr.bf16.mxu0 0
        %1018 = vmatpush1.bf16.msra.mxu0 0
        %1019 = vmatprep.subr.bf16.mxu0 0
        %1020 = vmatpush1.bf16.msra.mxu0 0
        %1021 = vmatprep.subr.bf16.mxu0 0
        %1022 = vmatpush1.bf16.msra.mxu0 0
        %1023 = vmatprep.subr.bf16.mxu0 0
        %1024 = vmatpush1.bf16.msra.mxu0 0
        %1025 = vmatprep.subr.bf16.mxu0 0
        %1026 = vmatpush1.bf16.msra.mxu0 0
        %1027 = vmatprep.subr.bf16.mxu0 0
        %1028 = vmatpush1.bf16.msra.mxu0 0
        %1029 = vmatprep.mubr.bf16.mxu0 0
        %1030 = vmatmul.mubr.bf16.gmra.mrb[0].mxu0 %v992
        %v1031 = vpop.f32.mrb[0].mxu0
        %v1032 = vadd.f32 0.0, %v1031
        %v1033 = vpop.f32.mrb[0].mxu0
        %v1034 = vpop.f32.mrb[0].mxu0
        %v1035 = vpop.f32.mrb[0].mxu0
        %1036 = vdwg.mxu0
        %v1037 = vpack.c.bf16 %v1032, %v1032
        %1038 = vrot.lane.b32.xlu0 %v806, 112
        %v1039 = vpop.permute.xlu0 %1038
        %1040 = vrot.lane.b32.xlu0 %v807, 80
        %v1041 = vpop.permute.xlu0 %1040
        %v1043 = vsel %vm812, %v1039, 0
        %v1046 = vsel %vm812, %v1041, 0
        %1048 = vmatprep.subr.bf16.mxu0 0
        %1049 = vmatpush1.bf16.xpose.msra.mxu0 %v1046
        %1050 = vmatprep.subr.bf16.mxu0 0
        %1051 = vmatpush1.bf16.xpose.msra.mxu0 0
        %1052 = vmatprep.subr.bf16.mxu0 0
        %1053 = vmatpush1.bf16.xpose.msra.mxu0 0
        %1054 = vmatprep.subr.bf16.mxu0 0
        %1055 = vmatpush1.bf16.xpose.msra.mxu0 0
        %1056 = vmatprep.subr.bf16.mxu0 0
        %1057 = vmatpush1.bf16.xpose.msra.mxu0 0
        %1058 = vmatprep.subr.bf16.mxu0 0
        %1059 = vmatpush1.bf16.xpose.msra.mxu0 0
        %1060 = vmatprep.subr.bf16.mxu0 0
        %1061 = vmatpush1.bf16.xpose.msra.mxu0 0
        %1062 = vmatprep.subr.bf16.mxu0 0
        %1063 = vmatpush1.bf16.xpose.msra.mxu0 0
        %1064 = vmatprep.subr.bf16.mxu0 0
        %1065 = vmatpush1.bf16.xpose.msra.mxu0 0
        %1066 = vmatprep.subr.bf16.mxu0 0
        %1067 = vmatpush1.bf16.xpose.msra.mxu0 0
        %1068 = vmatprep.subr.bf16.mxu0 0
        %1069 = vmatpush1.bf16.xpose.msra.mxu0 0
        %1070 = vmatprep.subr.bf16.mxu0 0
        %1071 = vmatpush1.bf16.xpose.msra.mxu0 0
        %1072 = vmatprep.subr.bf16.mxu0 0
        %1073 = vmatpush1.bf16.xpose.msra.mxu0 0
        %1074 = vmatprep.subr.bf16.mxu0 0
        %1075 = vmatpush1.bf16.xpose.msra.mxu0 0
        %1076 = vmatprep.subr.bf16.mxu0 0
        %1077 = vmatpush1.bf16.xpose.msra.mxu0 0
        %1078 = vmatprep.subr.bf16.mxu0 0
        %1079 = vmatpush1.bf16.xpose.msra.mxu0 0
        %1080 = vmatprep.mubr.bf16.mxu0 0
        %1081 = vmatmul.mubr.bf16.gmra.mrb[0].mxu0 %v1043
        %v1082 = vpop.f32.mrb[0].mxu0
        %v1083 = vadd.f32 0.0, %v1082
        %v1084 = vpop.f32.mrb[0].mxu0
        %v1085 = vpop.f32.mrb[0].mxu0
        %v1086 = vpop.f32.mrb[0].mxu0
        %1087 = vdwg.mxu0
        %v1088 = vmul.f32 %v1083, 0.35355338
        %v1089 = vadd.f32 %v1088, %v805
        %v1090 = vsel %vm812, %v1089, -inf
        %1091 = vmax.xlane.f32.xlu0 %v1090
        %v1092 = vpop.xlane.xlu0 %1091
        %v1093 = vsub.f32 %v1089, %v1092
        %v1094 = vmul.f32 %v1093, 1.442695
        %v1095 = vpow.pop %v1094
        %v1096 = vsel %vm812, %v1095, 0.0
        %1097 = vadd.xlane.f32.xlu0 %v1096
        %v1098 = vpop.xlane.xlu0 %1097
        %v1099 = vrcp.pop %v1098
        %v1100 = vmul.f32 %v1095, %v1099
        %v1101 = vpack.c.bf16 %v1100, %v1100
        %1102 = vrot.lane.b32.xlu0 %v808, 48
        %v1103 = vpop.permute.xlu0 %1102
        %v1105 = vsel %vm812, %v1101, 0
        %v1108 = vsel %vm879, %v1103, 0
        %1110 = vmatprep.subr.bf16.mxu0 0
        %1111 = vmatpush1.bf16.msra.mxu0 %v1108
        %1112 = vmatprep.subr.bf16.mxu0 0
        %1113 = vmatpush1.bf16.msra.mxu0 0
        %1114 = vmatprep.subr.bf16.mxu0 0
        %1115 = vmatpush1.bf16.msra.mxu0 0
        %1116 = vmatprep.subr.bf16.mxu0 0
        %1117 = vmatpush1.bf16.msra.mxu0 0
        %1118 = vmatprep.subr.bf16.mxu0 0
        %1119 = vmatpush1.bf16.msra.mxu0 0
        %1120 = vmatprep.subr.bf16.mxu0 0
        %1121 = vmatpush1.bf16.msra.mxu0 0
        %1122 = vmatprep.subr.bf16.mxu0 0
        %1123 = vmatpush1.bf16.msra.mxu0 0
        %1124 = vmatprep.subr.bf16.mxu0 0
        %1125 = vmatpush1.bf16.msra.mxu0 0
        %1126 = vmatprep.subr.bf16.mxu0 0
        %1127 = vmatpush1.bf16.msra.mxu0 0
        %1128 = vmatprep.subr.bf16.mxu0 0
        %1129 = vmatpush1.bf16.msra.mxu0 0
        %1130 = vmatprep.subr.bf16.mxu0 0
        %1131 = vmatpush1.bf16.msra.mxu0 0
        %1132 = vmatprep.subr.bf16.mxu0 0
        %1133 = vmatpush1.bf16.msra.mxu0 0
        %1134 = vmatprep.subr.bf16.mxu0 0
        %1135 = vmatpush1.bf16.msra.mxu0 0
        %1136 = vmatprep.subr.bf16.mxu0 0
        %1137 = vmatpush1.bf16.msra.mxu0 0
        %1138 = vmatprep.subr.bf16.mxu0 0
        %1139 = vmatpush1.bf16.msra.mxu0 0
        %1140 = vmatprep.subr.bf16.mxu0 0
        %1141 = vmatpush1.bf16.msra.mxu0 0
        %1142 = vmatprep.mubr.bf16.mxu0 0
        %1143 = vmatmul.mubr.bf16.gmra.mrb[0].mxu0 %v1105
        %v1144 = vpop.f32.mrb[0].mxu0
        %v1145 = vadd.f32 0.0, %v1144
        %v1146 = vpop.f32.mrb[0].mxu0
        %v1147 = vpop.f32.mrb[0].mxu0
        %v1148 = vpop.f32.mrb[0].mxu0
        %1149 = vdwg.mxu0
        %v1150 = vpack.c.bf16 %v1145, %v1145
        %1151 = vrot.lane.b32.xlu0 %v806, 104
        %v1152 = vpop.permute.xlu0 %1151
        %1153 = vrot.lane.b32.xlu0 %v807, 72
        %v1154 = vpop.permute.xlu0 %1153
        %v1156 = vsel %vm812, %v1152, 0
        %v1159 = vsel %vm812, %v1154, 0
        %1161 = vmatprep.subr.bf16.mxu0 0
        %1162 = vmatpush1.bf16.xpose.msra.mxu0 %v1159
        %1163 = vmatprep.subr.bf16.mxu0 0
        %1164 = vmatpush1.bf16.xpose.msra.mxu0 0
        %1165 = vmatprep.subr.bf16.mxu0 0
        %1166 = vmatpush1.bf16.xpose.msra.mxu0 0
        %1167 = vmatprep.subr.bf16.mxu0 0
        %1168 = vmatpush1.bf16.xpose.msra.mxu0 0
        %1169 = vmatprep.subr.bf16.mxu0 0
        %1170 = vmatpush1.bf16.xpose.msra.mxu0 0
        %1171 = vmatprep.subr.bf16.mxu0 0
        %1172 = vmatpush1.bf16.xpose.msra.mxu0 0
        %1173 = vmatprep.subr.bf16.mxu0 0
        %1174 = vmatpush1.bf16.xpose.msra.mxu0 0
        %1175 = vmatprep.subr.bf16.mxu0 0
        %1176 = vmatpush1.bf16.xpose.msra.mxu0 0
        %1177 = vmatprep.subr.bf16.mxu0 0
        %1178 = vmatpush1.bf16.xpose.msra.mxu0 0
        %1179 = vmatprep.subr.bf16.mxu0 0
        %1180 = vmatpush1.bf16.xpose.msra.mxu0 0
        %1181 = vmatprep.subr.bf16.mxu0 0
        %1182 = vmatpush1.bf16.xpose.msra.mxu0 0
        %1183 = vmatprep.subr.bf16.mxu0 0
        %1184 = vmatpush1.bf16.xpose.msra.mxu0 0
        %1185 = vmatprep.subr.bf16.mxu0 0
        %1186 = vmatpush1.bf16.xpose.msra.mxu0 0
        %1187 = vmatprep.subr.bf16.mxu0 0
        %1188 = vmatpush1.bf16.xpose.msra.mxu0 0
        %1189 = vmatprep.subr.bf16.mxu0 0
        %1190 = vmatpush1.bf16.xpose.msra.mxu0 0
        %1191 = vmatprep.subr.bf16.mxu0 0
        %1192 = vmatpush1.bf16.xpose.msra.mxu0 0
        %1193 = vmatprep.mubr.bf16.mxu0 0
        %1194 = vmatmul.mubr.bf16.gmra.mrb[0].mxu0 %v1156
        %v1195 = vpop.f32.mrb[0].mxu0
        %v1196 = vadd.f32 0.0, %v1195
        %v1197 = vpop.f32.mrb[0].mxu0
        %v1198 = vpop.f32.mrb[0].mxu0
        %v1199 = vpop.f32.mrb[0].mxu0
        %1200 = vdwg.mxu0
        %v1201 = vmul.f32 %v1196, 0.35355338
        %v1202 = vadd.f32 %v1201, %v805
        %v1203 = vsel %vm812, %v1202, -inf
        %1204 = vmax.xlane.f32.xlu0 %v1203
        %v1205 = vpop.xlane.xlu0 %1204
        %v1206 = vsub.f32 %v1202, %v1205
        %v1207 = vmul.f32 %v1206, 1.442695
        %v1208 = vpow.pop %v1207
        %v1209 = vsel %vm812, %v1208, 0.0
        %1210 = vadd.xlane.f32.xlu0 %v1209
        %v1211 = vpop.xlane.xlu0 %1210
        %v1212 = vrcp.pop %v1211
        %v1213 = vmul.f32 %v1208, %v1212
        %v1214 = vpack.c.bf16 %v1213, %v1213
        %1215 = vrot.lane.b32.xlu0 %v808, 40
        %v1216 = vpop.permute.xlu0 %1215
        %v1218 = vsel %vm812, %v1214, 0
        %v1221 = vsel %vm879, %v1216, 0
        %1223 = vmatprep.subr.bf16.mxu0 0
        %1224 = vmatpush1.bf16.msra.mxu0 %v1221
        %1225 = vmatprep.subr.bf16.mxu0 0
        %1226 = vmatpush1.bf16.msra.mxu0 0
        %1227 = vmatprep.subr.bf16.mxu0 0
        %1228 = vmatpush1.bf16.msra.mxu0 0
        %1229 = vmatprep.subr.bf16.mxu0 0
        %1230 = vmatpush1.bf16.msra.mxu0 0
        %1231 = vmatprep.subr.bf16.mxu0 0
        %1232 = vmatpush1.bf16.msra.mxu0 0
        %1233 = vmatprep.subr.bf16.mxu0 0
        %1234 = vmatpush1.bf16.msra.mxu0 0
        %1235 = vmatprep.subr.bf16.mxu0 0
        %1236 = vmatpush1.bf16.msra.mxu0 0
        %1237 = vmatprep.subr.bf16.mxu0 0
        %1238 = vmatpush1.bf16.msra.mxu0 0
        %1239 = vmatprep.subr.bf16.mxu0 0
        %1240 = vmatpush1.bf16.msra.mxu0 0
        %1241 = vmatprep.subr.bf16.mxu0 0
        %1242 = vmatpush1.bf16.msra.mxu0 0
        %1243 = vmatprep.subr.bf16.mxu0 0
        %1244 = vmatpush1.bf16.msra.mxu0 0
        %1245 = vmatprep.subr.bf16.mxu0 0
        %1246 = vmatpush1.bf16.msra.mxu0 0
        %1247 = vmatprep.subr.bf16.mxu0 0
        %1248 = vmatpush1.bf16.msra.mxu0 0
        %1249 = vmatprep.subr.bf16.mxu0 0
        %1250 = vmatpush1.bf16.msra.mxu0 0
        %1251 = vmatprep.subr.bf16.mxu0 0
        %1252 = vmatpush1.bf16.msra.mxu0 0
        %1253 = vmatprep.subr.bf16.mxu0 0
        %1254 = vmatpush1.bf16.msra.mxu0 0
        %1255 = vmatprep.mubr.bf16.mxu0 0
        %1256 = vmatmul.mubr.bf16.gmra.mrb[0].mxu0 %v1218
        %v1257 = vpop.f32.mrb[0].mxu0
        %v1258 = vadd.f32 0.0, %v1257
        %v1259 = vpop.f32.mrb[0].mxu0
        %v1260 = vpop.f32.mrb[0].mxu0
        %v1261 = vpop.f32.mrb[0].mxu0
        %1262 = vdwg.mxu0
        %v1263 = vpack.c.bf16 %v1258, %v1258
        %1265 = vrot.lane.b32.xlu0 %v1037, 8
        %v1266 = vpop.permute.xlu0 %1265
        %1268 = vrot.lane.b32.xlu0 %v1150, 16
        %v1269 = vpop.permute.xlu0 %1268
        %1271 = vrot.lane.b32.xlu0 %v1263, 24
        %v1272 = vpop.permute.xlu0 %1271
        %v1275 = vsel %vm812, %v923, %v1266
        %vm1276 = vcmask 130048
        %v1278 = vsel %vm1276, %v1275, %v1269
        %vm1279 = vcmask 195584
        %v1281 = vsel %vm1279, %v1278, %v1272
        %v1282 = vld [vmem:[%s10] sm:$0xf]
        %v1283 = vld [vmem:[%s10 + $0x4] sm:$0xf]
        %v1284 = vld [vmem:[%s10 + $0x8] sm:$0xf]
        %v1285 = vld [vmem:[%s10 + $0xc] sm:$0xf]
        %v1286 = vld [vmem:[%s11] sm:$0x1]
        %v1288 = vlaneseq
        %v1289 = vshrl.u32 %v1288, 7
        %v1290 = vsub.s32 0, %v1289
        %v1291 = vrot.slane %v1286, %v1290
        %v1297 = vunpack.c.l.b16 %v1282
        %v1298 = vunpack.c.l.b16 %v1283
        %v1299 = vunpack.c.l.b16 %v1284
        %v1300 = vunpack.c.l.b16 %v1285
        %v1301 = vpack.c.b16 %v1298, %v1297
        %v1302 = vpack.c.b16 %v1300, %v1299
        %v1305 = vsel %vm639, %v1281, 0
        %1307 = vmatprep.subr.bf16.mxu0 0
        %1308 = vmatpush1.bf16.msra.mxu0 %v1301
        %1309 = vmatprep.subr.bf16.mxu0 0
        %1310 = vmatpush1.bf16.msra.mxu0 %v1302
        %1311 = vmatprep.subr.bf16.mxu0 0
        %1312 = vmatpush1.bf16.msra.mxu0 0
        %1313 = vmatprep.subr.bf16.mxu0 0
        %1314 = vmatpush1.bf16.msra.mxu0 0
        %1315 = vmatprep.subr.bf16.mxu0 0
        %1316 = vmatpush1.bf16.msra.mxu0 0
        %1317 = vmatprep.subr.bf16.mxu0 0
        %1318 = vmatpush1.bf16.msra.mxu0 0
        %1319 = vmatprep.subr.bf16.mxu0 0
        %1320 = vmatpush1.bf16.msra.mxu0 0
        %1321 = vmatprep.subr.bf16.mxu0 0
        %1322 = vmatpush1.bf16.msra.mxu0 0
        %1323 = vmatprep.subr.bf16.mxu0 0
        %1324 = vmatpush1.bf16.msra.mxu0 0
        %1325 = vmatprep.subr.bf16.mxu0 0
        %1326 = vmatpush1.bf16.msra.mxu0 0
        %1327 = vmatprep.subr.bf16.mxu0 0
        %1328 = vmatpush1.bf16.msra.mxu0 0
        %1329 = vmatprep.subr.bf16.mxu0 0
        %1330 = vmatpush1.bf16.msra.mxu0 0
        %1331 = vmatprep.subr.bf16.mxu0 0
        %1332 = vmatpush1.bf16.msra.mxu0 0
        %1333 = vmatprep.subr.bf16.mxu0 0
        %1334 = vmatpush1.bf16.msra.mxu0 0
        %1335 = vmatprep.subr.bf16.mxu0 0
        %1336 = vmatpush1.bf16.msra.mxu0 0
        %1337 = vmatprep.subr.bf16.mxu0 0
        %1338 = vmatpush1.bf16.msra.mxu0 0
        %1339 = vmatprep.mubr.bf16.mxu0 0
        %1340 = vmatmul.mubr.bf16.gmra.mrb[0].mxu0 %v1305
        %v1341 = vpop.f32.mrb[0].mxu0
        %v1342 = vadd.f32 %v1291, %v1341
        %v1343 = vpop.f32.mrb[0].mxu0
        %v1344 = vpop.f32.mrb[0].mxu0
        %v1345 = vpop.f32.mrb[0].mxu0
        %1346 = vdwg.mxu0
        %v1347 = vadd.f32 %v636, %v1342
        %v1348 = vld [vmem:[%s12] sm:$0x1]
        %v1349 = vld [vmem:[%s13] sm:$0x1]
        %v1350 = vsel %vm639, %v1347, 0.0
        %1351 = vadd.xlane.f32.xlu0 %v1350
        %v1352 = vpop.xlane.xlu0 %1351
        %v1353 = vmul.f32 %v1352, %v643
        %v1354 = vsub.f32 %v1347, %v1353
        %v1355 = vmul.f32 %v1354, %v1354
        %v1356 = vsel %vm639, %v1355, 0.0
        %1357 = vadd.xlane.f32.xlu0 %v1356
        %v1358 = vpop.xlane.xlu0 %1357
        %v1359 = vmul.f32 %v1358, %v643
        %v1361 = vlaneseq
        %v1362 = vshrl.u32 %v1361, 7
        %v1363 = vsub.s32 0, %v1362
        %v1364 = vrot.slane %v1348, %v1363
        %v1366 = vmul.f32 %v1364, %v1354
        %v1367 = vadd.f32 %v1359, 1e-12
        %v1368 = vrcp.pop %v1367
        %v1369 = vmul.f32 %v1366, %v1368
        %v1371 = vlaneseq
        %v1372 = vshrl.u32 %v1371, 7
        %v1373 = vsub.s32 0, %v1372
        %v1374 = vrot.slane %v1349, %v1373
        %v1376 = vadd.f32 %v1369, %v1374
        %v1377 = vpack.c.bf16 %v1376, %v1376
        %v1378 = vld [vmem:[%s14] sm:$0xf]
        %v1379 = vld [vmem:[%s14 + $0x4] sm:$0xf]
        %v1380 = vld [vmem:[%s14 + $0x8] sm:$0xf]
        %v1381 = vld [vmem:[%s14 + $0xc] sm:$0xf]
        %v1382 = vld [vmem:[%s15] sm:$0x1]
        %v1384 = vlaneseq
        %v1385 = vshrl.u32 %v1384, 7
        %v1386 = vsub.s32 0, %v1385
        %v1387 = vrot.slane %v1382, %v1386
        %v1393 = vunpack.c.l.b16 %v1378
        %v1394 = vunpack.c.l.b16 %v1379
        %v1395 = vunpack.c.l.b16 %v1380
        %v1396 = vunpack.c.l.b16 %v1381
        %v1397 = vpack.c.b16 %v1394, %v1393
        %v1398 = vpack.c.b16 %v1396, %v1395
        %v1402 = vsel %vm639, %v1377, 0
        %1404 = vmatprep.subr.bf16.mxu0 0
        %1405 = vmatpush1.bf16.msra.mxu0 %v1397
        %1406 = vmatprep.subr.bf16.mxu0 0
        %1407 = vmatpush1.bf16.msra.mxu0 %v1398
        %1408 = vmatprep.subr.bf16.mxu0 0
        %1409 = vmatpush1.bf16.msra.mxu0 0
        %1410 = vmatprep.subr.bf16.mxu0 0
        %1411 = vmatpush1.bf16.msra.mxu0 0
        %1412 = vmatprep.subr.bf16.mxu0 0
        %1413 = vmatpush1.bf16.msra.mxu0 0
        %1414 = vmatprep.subr.bf16.mxu0 0
        %1415 = vmatpush1.bf16.msra.mxu0 0
        %1416 = vmatprep.subr.bf16.mxu0 0
        %1417 = vmatpush1.bf16.msra.mxu0 0
        %1418 = vmatprep.subr.bf16.mxu0 0
        %1419 = vmatpush1.bf16.msra.mxu0 0
        %1420 = vmatprep.subr.bf16.mxu0 0
        %1421 = vmatpush1.bf16.msra.mxu0 0
        %1422 = vmatprep.subr.bf16.mxu0 0
        %1423 = vmatpush1.bf16.msra.mxu0 0
        %1424 = vmatprep.subr.bf16.mxu0 0
        %1425 = vmatpush1.bf16.msra.mxu0 0
        %1426 = vmatprep.subr.bf16.mxu0 0
        %1427 = vmatpush1.bf16.msra.mxu0 0
        %1428 = vmatprep.subr.bf16.mxu0 0
        %1429 = vmatpush1.bf16.msra.mxu0 0
        %1430 = vmatprep.subr.bf16.mxu0 0
        %1431 = vmatpush1.bf16.msra.mxu0 0
        %1432 = vmatprep.subr.bf16.mxu0 0
        %1433 = vmatpush1.bf16.msra.mxu0 0
        %1434 = vmatprep.subr.bf16.mxu0 0
        %1435 = vmatpush1.bf16.msra.mxu0 0
        %1436 = vmatprep.mubr.bf16.mxu0 0
        %1437 = vmatmul.mubr.bf16.gmra.mrb[0].mxu0 %v1402
        %v1438 = vpop.f32.mrb[0].mxu0
        %v1439 = vadd.f32 %v1387, %v1438
        %v1440 = vpop.f32.mrb[0].mxu0
        %v1441 = vpop.f32.mrb[0].mxu0
        %v1442 = vpop.f32.mrb[0].mxu0
        %1443 = vdwg.mxu0
        %v1444 = vmul.f32 %v1439, 0.5
        %v1445 = vmul.f32 %v1439, 0.044715
        %v1446 = vmul.f32 %v1445, %v1439
        %v1447 = vmul.f32 %v1446, %v1439
        %v1448 = vadd.f32 %v1439, %v1447
        %v1449 = vmul.f32 %v1448, 0.7978846
        %v1450 = vtanh.pop %v1449
        %v1451 = vadd.f32 %v1450, 1.0
        %v1452 = vmul.f32 %v1444, %v1451
        %v1453 = vpack.c.bf16 %v1452, %v1452
        %v1454 = vld [vmem:[%s16] sm:$0xf]
        %v1455 = vld [vmem:[%s16 + $0x4] sm:$0xf]
        %v1456 = vld [vmem:[%s16 + $0x8] sm:$0xf]
        %v1457 = vld [vmem:[%s16 + $0xc] sm:$0xf]
        %v1458 = vld [vmem:[%s16 + $0x10] sm:$0xf]
        %v1459 = vld [vmem:[%s16 + $0x14] sm:$0xf]
        %v1460 = vld [vmem:[%s16 + $0x18] sm:$0xf]
        %v1461 = vld [vmem:[%s16 + $0x1c] sm:$0xf]
        %v1462 = vld [vmem:[%s16 + $0x20] sm:$0xf]
        %v1463 = vld [vmem:[%s16 + $0x24] sm:$0xf]
        %v1464 = vld [vmem:[%s16 + $0x28] sm:$0xf]
        %v1465 = vld [vmem:[%s16 + $0x2c] sm:$0xf]
        %v1466 = vld [vmem:[%s16 + $0x30] sm:$0xf]
        %v1467 = vld [vmem:[%s16 + $0x34] sm:$0xf]
        %v1468 = vld [vmem:[%s16 + $0x38] sm:$0xf]
        %v1469 = vld [vmem:[%s16 + $0x3c] sm:$0xf]
        %v1470 = vld [vmem:[%s17] sm:$0x1]
        %v1472 = vlaneseq
        %v1473 = vshrl.u32 %v1472, 7
        %v1474 = vsub.s32 0, %v1473
        %v1475 = vrot.slane %v1470, %v1474
        %v1493 = vunpack.c.l.b16 %v1454
        %v1494 = vunpack.c.l.b16 %v1455
        %v1495 = vunpack.c.l.b16 %v1456
        %v1496 = vunpack.c.l.b16 %v1457
        %v1497 = vunpack.c.l.b16 %v1458
        %v1498 = vunpack.c.l.b16 %v1459
        %v1499 = vunpack.c.l.b16 %v1460
        %v1500 = vunpack.c.l.b16 %v1461
        %v1501 = vunpack.c.l.b16 %v1462
        %v1502 = vunpack.c.l.b16 %v1463
        %v1503 = vunpack.c.l.b16 %v1464
        %v1504 = vunpack.c.l.b16 %v1465
        %v1505 = vunpack.c.l.b16 %v1466
        %v1506 = vunpack.c.l.b16 %v1467
        %v1507 = vunpack.c.l.b16 %v1468
        %v1508 = vunpack.c.l.b16 %v1469
        %v1509 = vpack.c.b16 %v1494, %v1493
        %v1510 = vpack.c.b16 %v1496, %v1495
        %v1511 = vpack.c.b16 %v1498, %v1497
        %v1512 = vpack.c.b16 %v1500, %v1499
        %v1513 = vpack.c.b16 %v1502, %v1501
        %v1514 = vpack.c.b16 %v1504, %v1503
        %v1515 = vpack.c.b16 %v1506, %v1505
        %v1516 = vpack.c.b16 %v1508, %v1507
        %1525 = vmatprep.subr.bf16.mxu0 0
        %1526 = vmatpush1.bf16.msra.mxu0 %v1509
        %1527 = vmatprep.subr.bf16.mxu0 0
        %1528 = vmatpush1.bf16.msra.mxu0 %v1510
        %1529 = vmatprep.subr.bf16.mxu0 0
        %1530 = vmatpush1.bf16.msra.mxu0 %v1511
        %1531 = vmatprep.subr.bf16.mxu0 0
        %1532 = vmatpush1.bf16.msra.mxu0 %v1512
        %1533 = vmatprep.subr.bf16.mxu0 0
        %1534 = vmatpush1.bf16.msra.mxu0 %v1513
        %1535 = vmatprep.subr.bf16.mxu0 0
        %1536 = vmatpush1.bf16.msra.mxu0 %v1514
        %1537 = vmatprep.subr.bf16.mxu0 0
        %1538 = vmatpush1.bf16.msra.mxu0 %v1515
        %1539 = vmatprep.subr.bf16.mxu0 0
        %1540 = vmatpush1.bf16.msra.mxu0 %v1516
        %1541 = vmatprep.subr.bf16.mxu0 0
        %1542 = vmatpush1.bf16.msra.mxu0 0
        %1543 = vmatprep.subr.bf16.mxu0 0
        %1544 = vmatpush1.bf16.msra.mxu0 0
        %1545 = vmatprep.subr.bf16.mxu0 0
        %1546 = vmatpush1.bf16.msra.mxu0 0
        %1547 = vmatprep.subr.bf16.mxu0 0
        %1548 = vmatpush1.bf16.msra.mxu0 0
        %1549 = vmatprep.subr.bf16.mxu0 0
        %1550 = vmatpush1.bf16.msra.mxu0 0
        %1551 = vmatprep.subr.bf16.mxu0 0
        %1552 = vmatpush1.bf16.msra.mxu0 0
        %1553 = vmatprep.subr.bf16.mxu0 0
        %1554 = vmatpush1.bf16.msra.mxu0 0
        %1555 = vmatprep.subr.bf16.mxu0 0
        %1556 = vmatpush1.bf16.msra.mxu0 0
        %1557 = vmatprep.mubr.bf16.mxu0 0
        %1558 = vmatmul.mubr.bf16.gmra.mrb[0].mxu0 %v1453
        %v1559 = vpop.f32.mrb[0].mxu0
        %v1560 = vadd.f32 %v1475, %v1559
        %v1561 = vpop.f32.mrb[0].mxu0
        %v1562 = vpop.f32.mrb[0].mxu0
        %v1563 = vpop.f32.mrb[0].mxu0
        %1564 = vdwg.mxu0
        %v1565 = vadd.f32 %v1347, %v1560
        %1566 = vst.msk [vmem:[%s623] sm:$0xff] %vm639, %v1565
        %s1567 = sand.u32 %s430, 1
        %s1568 = scalar_lea.sflag [#allocation4], %s1567
        %s1569 = sand.u32 %s430, 1
        %s1570 = smul.addr %s1569, 8
        %s1571 = scalar_lea.vmem [#allocation7], %s1570
        %s1572 = sand.u32 %s456, 1
        %s1573 = scalar_lea.sflag [#allocation9], %s1572
        %s1574 = sand.u32 %s456, 1
        %s1575 = smul.addr %s1574, 8
        %s1576 = scalar_lea.vmem [#allocation8], %s1575
        // Predicated region
        $region101: #{tpu_custom_call.1} parent=91 // pred_check
          %p1577 = pneg %p440
        $region102: #{tpu_custom_call.1} parent=91 // pred_check_branch
          %1579 = sbr.rel (%p1577) target = $region104
        $region103: #{tpu_custom_call.1} parent=91 // pred_region
          %s1581 = ssub.s32 128, 128
          %1582 = vsyncadd %s1568, %s1581
          %s1583 = smul.addr %s39, 128
          %s1584 = scalar_lea.hbm %s18, %s1583
          %s1586 = sshll.u32 %s1571, 4
          %s1587 = int_to_ptr.vmem [resolvable:$true] %s1586
          %1589 = dma.vmem_to_hbm [thread:$0]  %s1587, 128, %s1584, %s1568
        $region104: #{tpu_custom_call.1} parent=91 // pred_fallthru
          _
        // Predicated region
        $region105: #{tpu_custom_call.1} parent=91 // pred_check
          %p1590 = pneg %p466
        $region106: #{tpu_custom_call.1} parent=91 // pred_check_branch
          %1592 = sbr.rel (%p1590) target = $region108
        $region107: #{tpu_custom_call.1} parent=91 // pred_region
          %s1594 = ssub.s32 128, 128
          %1595 = vsyncadd %s1573, %s1594
          %s1596 = smul.addr %s39, 128
          %s1597 = scalar_lea.hbm %s19, %s1596
          %s1599 = sshll.u32 %s1576, 4
          %s1600 = int_to_ptr.vmem [resolvable:$true] %s1599
          %1602 = dma.vmem_to_hbm [thread:$0]  %s1600, 128, %s1597, %s1573
        $region108: #{tpu_custom_call.1} parent=91 // pred_fallthru
          _
      $region92: #{tpu_custom_call.1} parent=5 // pred_fallthru
        _
      %p1603 = scmp.le.s32.totalorder 2, %s34
      // Predicated region
      $region109: #{tpu_custom_call.1} parent=5 // pred_check
        %p1604 = pneg %p1603
      $region110: #{tpu_custom_call.1} parent=5 // pred_check_branch
        %1606 = sbr.rel (%p1604) target = $region112
      $region111: #{tpu_custom_call.1} parent=5 // pred_region
        %s1607 = ssub.s32 %s34, 2
        // Predicated region
        $region113: #{tpu_custom_call.1} parent=111 // pred_check
          %p1608 = pneg %p446
        $region114: #{tpu_custom_call.1} parent=111 // pred_check_branch
          %1610 = sbr.rel (%p1608) target = $region116
        $region115: #{tpu_custom_call.1} parent=111 // pred_region
          %s1611 = sand.u32 %s431, 1
          %s1612 = scalar_lea.sflag [#allocation4], %s1611
          %s1613 = sand.u32 %s431, 1
          %s1614 = smul.addr %s1613, 8
          %s1615 = scalar_lea.vmem [#allocation7], %s1614
          %1616 = dma.done %s1612, 128
        $region116: #{tpu_custom_call.1} parent=111 // pred_fallthru
          _
        // Predicated region
        $region117: #{tpu_custom_call.1} parent=111 // pred_check
          %p1617 = pneg %p472
        $region118: #{tpu_custom_call.1} parent=111 // pred_check_branch
          %1619 = sbr.rel (%p1617) target = $region120
        $region119: #{tpu_custom_call.1} parent=111 // pred_region
          %s1620 = sand.u32 %s457, 1
          %s1621 = scalar_lea.sflag [#allocation9], %s1620
          %s1622 = sand.u32 %s457, 1
          %s1623 = smul.addr %s1622, 8
          %s1624 = scalar_lea.vmem [#allocation8], %s1623
          %1625 = dma.done %s1621, 128
        $region120: #{tpu_custom_call.1} parent=111 // pred_fallthru
          _
      $region112: #{tpu_custom_call.1} parent=5 // pred_fallthru
        _
    $region6: #{tpu_custom_call.1} parent=1 // loop_footer
      %s38 = sadd.s32 1, %s34
    $region7: #{tpu_custom_call.1} parent=1 // loop_footer_branch
      %33 = sbr.rel target = $region3
    $region8: #{tpu_custom_call.1} parent=1 // loop_exit
      _
    %1626 = vsyncpa [#allocation3], 1
    %s1627 = scalar_lea.sflag [#allocation3], 1
    %1628 = vsyncpa %s1627, 1
    %1629 = vsyncpa [#allocation6], 1
    %1630 = vsyncpa [#allocation4], 1
    %s1631 = scalar_lea.sflag [#allocation4], 1
    %1632 = vsyncpa %s1631, 1
    %1633 = vsyncpa [#allocation9], 1
    %s1634 = scalar_lea.sflag [#allocation9], 1
    %1635 = vsyncpa %s1634, 1

// kernel: tpu_custom_call.1
$region0: #{tpu_custom_call.1}
  #allocation0 [shape = 'u32[]', space=smem, size = 0x4, offset = 0x4, fixed_abs, tag = 'smem constant byte address 0x4 - core index']
  #allocation1 [shape = 'u32[144,128]{1,0:T(1,128)}', space=vmem, size = 0x12000, scoped, tag = 'internal scratch']
  %s0 = inlined_call_operand.vmem [shape: f32[2,8,32], index: 0, kind: input, shape index: {}]
  %s1 = inlined_call_operand.vmem [shape: f32[8,32], index: 1, kind: input, shape index: {}]
  %s2 = inlined_call_operand.vmem [shape: f32[8,32], index: 2, kind: input, shape index: {}]
  %s3 = inlined_call_operand.vmem [shape: f32[8,32], index: 3, kind: input, shape index: {}]
  %s4 = inlined_call_operand.hbm [shape: f32[8,32], index: 4, kind: input, shape index: {}]
  %s5 = inlined_call_operand.hbm [shape: f32[8,8], index: 5, kind: input, shape index: {}]
  %s6 = inlined_call_operand.vmem [shape: f32[1,32], index: 6, kind: input, shape index: {}]
  %s7 = inlined_call_operand.vmem [shape: f32[1,32], index: 7, kind: input, shape index: {}]
  %s8 = inlined_call_operand.vmem [shape: bf16[32,96], index: 8, kind: input, shape index: {}]
  %s9 = inlined_call_operand.vmem [shape: f32[1,96], index: 9, kind: input, shape index: {}]
  %s10 = inlined_call_operand.vmem [shape: bf16[32,32], index: 10, kind: input, shape index: {}]
  %s11 = inlined_call_operand.vmem [shape: f32[1,32], index: 11, kind: input, shape index: {}]
  %s12 = inlined_call_operand.vmem [shape: f32[1,32], index: 12, kind: input, shape index: {}]
  %s13 = inlined_call_operand.vmem [shape: f32[1,32], index: 13, kind: input, shape index: {}]
  %s14 = inlined_call_operand.vmem [shape: bf16[32,128], index: 14, kind: input, shape index: {}]
  %s15 = inlined_call_operand.vmem [shape: f32[1,128], index: 15, kind: input, shape index: {}]
  %s16 = inlined_call_operand.vmem [shape: bf16[128,32], index: 16, kind: input, shape index: {}]
  %s17 = inlined_call_operand.vmem [shape: f32[1,32], index: 17, kind: input, shape index: {}]
  %s18 = inlined_call_operand.hbm [shape: f32[2,8,32], index: 18, kind: output, shape index: {0}]
  %s19 = inlined_call_operand.hbm [shape: f32[2,8,64], index: 19, kind: output, shape index: {1}]
  %20 = xla_tuple %s18, %s19
  %s21 = sld [smem:[#allocation0]]
  $region121: #{tpu_custom_call.1} parent=0
    _
  %s23 = ssub.s32 1, %s21
  %s24 = scalar_select 0, %s23, %s21
  $region1: #{tpu_custom_call.1} parent=0
    #allocation2 [shape = 'u8[4096]{0}', space=vmem, size = 0x1000, scoped, tag = 'input window, operand 4, single buffered']
    #allocation3 [shape = 's32[2]{0}', space=sflag, size = 0x8, scoped, tag = 'scoped memory for tpu_custom_call.1']
    #allocation4 [shape = 's32[2]{0}', space=sflag, size = 0x8, scoped, tag = 'scoped memory for tpu_custom_call.1']
    #allocation5 [shape = 'u8[4096]{0}', space=vmem, size = 0x1000, scoped, tag = 'input window, operand 5, single buffered']
    #allocation6 [shape = 's32[1]{0}', space=sflag, size = 0x4, scoped, tag = 'scoped memory for tpu_custom_call.1']
    #allocation7 [shape = 'u8[8192]{0}', space=vmem, size = 0x2000, scoped, tag = 'output window, operand 0']
    #allocation8 [shape = 'u8[8192]{0}', space=vmem, size = 0x2000, scoped, tag = 'output window, operand 1']
    #allocation9 [shape = 's32[2]{0}', space=sflag, size = 0x8, scoped, tag = 'scoped memory for tpu_custom_call.1']
    %25 = vsyncpa [#allocation3], 0
    %26 = vsyncpa [#allocation6], 0
    %27 = vsyncpa [#allocation4], 0
    %s28 = scalar_lea.sflag [#allocation4], 1
    %29 = vsyncpa %s28, 0
    %30 = vsyncpa [#allocation9], 0
    %s31 = scalar_lea.sflag [#allocation9], 1
    %32 = vsyncpa %s31, 0
    loop: start=0, step=1, limit=4
    $region2: #{tpu_custom_call.1} parent=1 // loop_pre_header
      _
    $region3: #{tpu_custom_call.1} parent=1 // loop_header
      %s34 = sphi 0, %s38
      %p35 = scmp.ge.s32.totalorder %s34, 4
      %s44 = sphi 0, %s46
      %s47 = sphi 0, %s44
      %s48 = sphi 0, %s47
      %s64 = sphi 0, %s48
      %s68 = sphi 0, %s68
      %s70 = sphi 0, %s68
      %s71 = sphi 0, %s70
      %s85 = sphi 0, %s71
      %s89 = sphi 0, %s89
      %s91 = sphi 0, %s89
      %s92 = sphi 0, %s91
      %s106 = sphi 0, %s92
      %s110 = sphi 0, %s110
      %s112 = sphi 0, %s110
      %s113 = sphi 0, %s112
      %s127 = sphi 0, %s113
      %s131 = sphi 0, %s131
      %s133 = sphi 0, %s131
      %s134 = sphi 0, %s133
      %s148 = sphi 0, %s134
      %s152 = sphi 0, %s152
      %s154 = sphi 0, %s152
      %s155 = sphi 0, %s154
      %s169 = sphi 0, %s155
      %s173 = sphi 0, %s173
      %s175 = sphi 0, %s173
      %s176 = sphi 0, %s175
      %s190 = sphi 0, %s176
      %s194 = sphi 0, %s194
      %s196 = sphi 0, %s194
      %s197 = sphi 0, %s196
      %s211 = sphi 0, %s197
      %s215 = sphi 0, %s215
      %s217 = sphi 0, %s215
      %s218 = sphi 0, %s217
      %s232 = sphi 0, %s218
      %s236 = sphi 0, %s236
      %s238 = sphi 0, %s236
      %s239 = sphi 0, %s238
      %s253 = sphi 0, %s239
      %s257 = sphi 0, %s257
      %s259 = sphi 0, %s257
      %s260 = sphi 0, %s259
      %s274 = sphi 0, %s260
      %s278 = sphi 0, %s278
      %s280 = sphi 0, %s278
      %s281 = sphi 0, %s280
      %s295 = sphi 0, %s281
      %s299 = sphi 0, %s299
      %s301 = sphi 0, %s299
      %s302 = sphi 0, %s301
      %s316 = sphi 0, %s302
      %s320 = sphi 0, %s320
      %s322 = sphi 0, %s320
      %s323 = sphi 0, %s322
      %s337 = sphi 0, %s323
      %s341 = sphi 0, %s341
      %s343 = sphi 0, %s341
      %s344 = sphi 0, %s343
      %s358 = sphi 0, %s344
      %s362 = sphi 0, %s362
      %s364 = sphi 0, %s362
      %s365 = sphi 0, %s364
      %s379 = sphi 0, %s365
      %s383 = sphi 0, %s383
      %s385 = sphi 0, %s383
      %s386 = sphi 0, %s385
      %s400 = sphi 0, %s386
      %s404 = sphi 0, %s404
      %s406 = sphi 0, %s404
      %s407 = sphi 0, %s406
      %s421 = sphi 0, %s407
      %s427 = sphi 0, %s429
      %s430 = sphi 0, %s427
      %s431 = sphi 0, %s430
      %s447 = sphi 0, %s431
      %s453 = sphi 0, %s455
      %s456 = sphi 0, %s453
      %s457 = sphi 0, %s456
      %s473 = sphi 0, %s457
    $region4: #{tpu_custom_call.1} parent=1 // loop_header_branch
      %37 = sbr.rel (%p35) target = $region8
    $region5: #{tpu_custom_call.1} parent=1 // loop_body
      %s39 = ssub.s32 %s34, 1
      %s40 = ssub.s32 %s34, 2
      %s41 = sadd.s32 %s34, 1
      %s42 = ssub.s32 %s34, %s41
      %p43 = scmp.eq.s32.totalorder %s42, 0
      %s45 = sadd.s32 %s44, 1
      %s46 = scalar_select %p43, %s44, %s45
      %p49 = pneg %p43
      %p50 = scmp.eq.s32.totalorder %s34, 1
      %p51 = por %p49, %p50
      %p52 = scmp.ne.s32.totalorder %s44, %s47
      %p53 = scmp.eq.s32.totalorder %s34, 0
      %p54 = por %p52, %p53
      %p55 = scmp.ne.s32.totalorder %s44, %s47
      %p56 = scmp.eq.s32.totalorder %s39, 1
      %p57 = por %p55, %p56
      %p58 = scmp.ne.s32.totalorder %s47, %s48
      %p59 = scmp.eq.s32.totalorder %s39, 0
      %p60 = por %p58, %p59
      %p61 = scmp.ne.s32.totalorder %s47, %s48
      %p62 = scmp.eq.s32.totalorder %s40, 1
      %p63 = por %p61, %p62
      %p65 = scmp.ne.s32.totalorder %s48, %s64
      %p66 = scmp.eq.s32.totalorder %s40, 0
      %p67 = por %p65, %p66
      %s69 = sadd.s32 %s68, 1
      %p72 = scmp.eq.s32.totalorder %s34, 1
      %p73 = scmp.ne.s32.totalorder %s68, %s70
      %p74 = scmp.eq.s32.totalorder %s34, 0
      %p75 = por %p73, %p74
      %p76 = scmp.ne.s32.totalorder %s68, %s70
      %p77 = scmp.eq.s32.totalorder %s39, 1
      %p78 = por %p76, %p77
      %p79 = scmp.ne.s32.totalorder %s70, %s71
      %p80 = scmp.eq.s32.totalorder %s39, 0
      %p81 = por %p79, %p80
      %p82 = scmp.ne.s32.totalorder %s70, %s71
      %p83 = scmp.eq.s32.totalorder %s40, 1
      %p84 = por %p82, %p83
      %p86 = scmp.ne.s32.totalorder %s71, %s85
      %p87 = scmp.eq.s32.totalorder %s40, 0
      %p88 = por %p86, %p87
      %s90 = sadd.s32 %s89, 1
      %p93 = scmp.eq.s32.totalorder %s34, 1
      %p94 = scmp.ne.s32.totalorder %s89, %s91
      %p95 = scmp.eq.s32.totalorder %s34, 0
      %p96 = por %p94, %p95
      %p97 = scmp.ne.s32.totalorder %s89, %s91
      %p98 = scmp.eq.s32.totalorder %s39, 1
      %p99 = por %p97, %p98
      %p100 = scmp.ne.s32.totalorder %s91, %s92
      %p101 = scmp.eq.s32.totalorder %s39, 0
      %p102 = por %p100, %p101
      %p103 = scmp.ne.s32.totalorder %s91, %s92
      %p104 = scmp.eq.s32.totalorder %s40, 1
      %p105 = por %p103, %p104
      %p107 = scmp.ne.s32.totalorder %s92, %s106
      %p108 = scmp.eq.s32.totalorder %s40, 0
      %p109 = por %p107, %p108
      %s111 = sadd.s32 %s110, 1
      %p114 = scmp.eq.s32.totalorder %s34, 1
      %p115 = scmp.ne.s32.totalorder %s110, %s112
      %p116 = scmp.eq.s32.totalorder %s34, 0
      %p117 = por %p115, %p116
      %p118 = scmp.ne.s32.totalorder %s110, %s112
      %p119 = scmp.eq.s32.totalorder %s39, 1
      %p120 = por %p118, %p119
      %p121 = scmp.ne.s32.totalorder %s112, %s113
      %p122 = scmp.eq.s32.totalorder %s39, 0
      %p123 = por %p121, %p122
      %p124 = scmp.ne.s32.totalorder %s112, %s113
      %p125 = scmp.eq.s32.totalorder %s40, 1
      %p126 = por %p124, %p125
      %p128 = scmp.ne.s32.totalorder %s113, %s127
      %p129 = scmp.eq.s32.totalorder %s40, 0
      %p130 = por %p128, %p129
      %s132 = sadd.s32 %s131, 1
      %p135 = scmp.eq.s32.totalorder %s34, 1
      %p136 = scmp.ne.s32.totalorder %s131, %s133
      %p137 = scmp.eq.s32.totalorder %s34, 0
      %p138 = por %p136, %p137
      %p139 = scmp.ne.s32.totalorder %s131, %s133
      %p140 = scmp.eq.s32.totalorder %s39, 1
      %p141 = por %p139, %p140
      %p142 = scmp.ne.s32.totalorder %s133, %s134
      %p143 = scmp.eq.s32.totalorder %s39, 0
      %p144 = por %p142, %p143
      %p145 = scmp.ne.s32.totalorder %s133, %s134
      %p146 = scmp.eq.s32.totalorder %s40, 1
      %p147 = por %p145, %p146
      %p149 = scmp.ne.s32.totalorder %s134, %s148
      %p150 = scmp.eq.s32.totalorder %s40, 0
      %p151 = por %p149, %p150
      %s153 = sadd.s32 %s152, 1
      %p156 = scmp.eq.s32.totalorder %s34, 1
      %p157 = scmp.ne.s32.totalorder %s152, %s154
      %p158 = scmp.eq.s32.totalorder %s34, 0
      %p159 = por %p157, %p158
      %p160 = scmp.ne.s32.totalorder %s152, %s154
      %p161 = scmp.eq.s32.totalorder %s39, 1
      %p162 = por %p160, %p161
      %p163 = scmp.ne.s32.totalorder %s154, %s155
      %p164 = scmp.eq.s32.totalorder %s39, 0
      %p165 = por %p163, %p164
      %p166 = scmp.ne.s32.totalorder %s154, %s155
      %p167 = scmp.eq.s32.totalorder %s40, 1
      %p168 = por %p166, %p167
      %p170 = scmp.ne.s32.totalorder %s155, %s169
      %p171 = scmp.eq.s32.totalorder %s40, 0
      %p172 = por %p170, %p171
      %s174 = sadd.s32 %s173, 1
      %p177 = scmp.eq.s32.totalorder %s34, 1
      %p178 = scmp.ne.s32.totalorder %s173, %s175
      %p179 = scmp.eq.s32.totalorder %s34, 0
      %p180 = por %p178, %p179
      %p181 = scmp.ne.s32.totalorder %s173, %s175
      %p182 = scmp.eq.s32.totalorder %s39, 1
      %p183 = por %p181, %p182
      %p184 = scmp.ne.s32.totalorder %s175, %s176
      %p185 = scmp.eq.s32.totalorder %s39, 0
      %p186 = por %p184, %p185
      %p187 = scmp.ne.s32.totalorder %s175, %s176
      %p188 = scmp.eq.s32.totalorder %s40, 1
      %p189 = por %p187, %p188
      %p191 = scmp.ne.s32.totalorder %s176, %s190
      %p192 = scmp.eq.s32.totalorder %s40, 0
      %p193 = por %p191, %p192
      %s195 = sadd.s32 %s194, 1
      %p198 = scmp.eq.s32.totalorder %s34, 1
      %p199 = scmp.ne.s32.totalorder %s194, %s196
      %p200 = scmp.eq.s32.totalorder %s34, 0
      %p201 = por %p199, %p200
      %p202 = scmp.ne.s32.totalorder %s194, %s196
      %p203 = scmp.eq.s32.totalorder %s39, 1
      %p204 = por %p202, %p203
      %p205 = scmp.ne.s32.totalorder %s196, %s197
      %p206 = scmp.eq.s32.totalorder %s39, 0
      %p207 = por %p205, %p206
      %p208 = scmp.ne.s32.totalorder %s196, %s197
      %p209 = scmp.eq.s32.totalorder %s40, 1
      %p210 = por %p208, %p209
      %p212 = scmp.ne.s32.totalorder %s197, %s211
      %p213 = scmp.eq.s32.totalorder %s40, 0
      %p214 = por %p212, %p213
      %s216 = sadd.s32 %s215, 1
      %p219 = scmp.eq.s32.totalorder %s34, 1
      %p220 = scmp.ne.s32.totalorder %s215, %s217
      %p221 = scmp.eq.s32.totalorder %s34, 0
      %p222 = por %p220, %p221
      %p223 = scmp.ne.s32.totalorder %s215, %s217
      %p224 = scmp.eq.s32.totalorder %s39, 1
      %p225 = por %p223, %p224
      %p226 = scmp.ne.s32.totalorder %s217, %s218
      %p227 = scmp.eq.s32.totalorder %s39, 0
      %p228 = por %p226, %p227
      %p229 = scmp.ne.s32.totalorder %s217, %s218
      %p230 = scmp.eq.s32.totalorder %s40, 1
      %p231 = por %p229, %p230
      %p233 = scmp.ne.s32.totalorder %s218, %s232
      %p234 = scmp.eq.s32.totalorder %s40, 0
      %p235 = por %p233, %p234
      %s237 = sadd.s32 %s236, 1
      %p240 = scmp.eq.s32.totalorder %s34, 1
      %p241 = scmp.ne.s32.totalorder %s236, %s238
      %p242 = scmp.eq.s32.totalorder %s34, 0
      %p243 = por %p241, %p242
      %p244 = scmp.ne.s32.totalorder %s236, %s238
      %p245 = scmp.eq.s32.totalorder %s39, 1
      %p246 = por %p244, %p245
      %p247 = scmp.ne.s32.totalorder %s238, %s239
      %p248 = scmp.eq.s32.totalorder %s39, 0
      %p249 = por %p247, %p248
      %p250 = scmp.ne.s32.totalorder %s238, %s239
      %p251 = scmp.eq.s32.totalorder %s40, 1
      %p252 = por %p250, %p251
      %p254 = scmp.ne.s32.totalorder %s239, %s253
      %p255 = scmp.eq.s32.totalorder %s40, 0
      %p256 = por %p254, %p255
      %s258 = sadd.s32 %s257, 1
      %p261 = scmp.eq.s32.totalorder %s34, 1
      %p262 = scmp.ne.s32.totalorder %s257, %s259
      %p263 = scmp.eq.s32.totalorder %s34, 0
      %p264 = por %p262, %p263
      %p265 = scmp.ne.s32.totalorder %s257, %s259
      %p266 = scmp.eq.s32.totalorder %s39, 1
      %p267 = por %p265, %p266
      %p268 = scmp.ne.s32.totalorder %s259, %s260
      %p269 = scmp.eq.s32.totalorder %s39, 0
      %p270 = por %p268, %p269
      %p271 = scmp.ne.s32.totalorder %s259, %s260
      %p272 = scmp.eq.s32.totalorder %s40, 1
      %p273 = por %p271, %p272
      %p275 = scmp.ne.s32.totalorder %s260, %s274
      %p276 = scmp.eq.s32.totalorder %s40, 0
      %p277 = por %p275, %p276
      %s279 = sadd.s32 %s278, 1
      %p282 = scmp.eq.s32.totalorder %s34, 1
      %p283 = scmp.ne.s32.totalorder %s278, %s280
      %p284 = scmp.eq.s32.totalorder %s34, 0
      %p285 = por %p283, %p284
      %p286 = scmp.ne.s32.totalorder %s278, %s280
      %p287 = scmp.eq.s32.totalorder %s39, 1
      %p288 = por %p286, %p287
      %p289 = scmp.ne.s32.totalorder %s280, %s281
      %p290 = scmp.eq.s32.totalorder %s39, 0
      %p291 = por %p289, %p290
      %p292 = scmp.ne.s32.totalorder %s280, %s281
      %p293 = scmp.eq.s32.totalorder %s40, 1
      %p294 = por %p292, %p293
      %p296 = scmp.ne.s32.totalorder %s281, %s295
      %p297 = scmp.eq.s32.totalorder %s40, 0
      %p298 = por %p296, %p297
      %s300 = sadd.s32 %s299, 1
      %p303 = scmp.eq.s32.totalorder %s34, 1
      %p304 = scmp.ne.s32.totalorder %s299, %s301
      %p305 = scmp.eq.s32.totalorder %s34, 0
      %p306 = por %p304, %p305
      %p307 = scmp.ne.s32.totalorder %s299, %s301
      %p308 = scmp.eq.s32.totalorder %s39, 1
      %p309 = por %p307, %p308
      %p310 = scmp.ne.s32.totalorder %s301, %s302
      %p311 = scmp.eq.s32.totalorder %s39, 0
      %p312 = por %p310, %p311
      %p313 = scmp.ne.s32.totalorder %s301, %s302
      %p314 = scmp.eq.s32.totalorder %s40, 1
      %p315 = por %p313, %p314
      %p317 = scmp.ne.s32.totalorder %s302, %s316
      %p318 = scmp.eq.s32.totalorder %s40, 0
      %p319 = por %p317, %p318
      %s321 = sadd.s32 %s320, 1
      %p324 = scmp.eq.s32.totalorder %s34, 1
      %p325 = scmp.ne.s32.totalorder %s320, %s322
      %p326 = scmp.eq.s32.totalorder %s34, 0
      %p327 = por %p325, %p326
      %p328 = scmp.ne.s32.totalorder %s320, %s322
      %p329 = scmp.eq.s32.totalorder %s39, 1
      %p330 = por %p328, %p329
      %p331 = scmp.ne.s32.totalorder %s322, %s323
      %p332 = scmp.eq.s32.totalorder %s39, 0
      %p333 = por %p331, %p332
      %p334 = scmp.ne.s32.totalorder %s322, %s323
      %p335 = scmp.eq.s32.totalorder %s40, 1
      %p336 = por %p334, %p335
      %p338 = scmp.ne.s32.totalorder %s323, %s337
      %p339 = scmp.eq.s32.totalorder %s40, 0
      %p340 = por %p338, %p339
      %s342 = sadd.s32 %s341, 1
      %p345 = scmp.eq.s32.totalorder %s34, 1
      %p346 = scmp.ne.s32.totalorder %s341, %s343
      %p347 = scmp.eq.s32.totalorder %s34, 0
      %p348 = por %p346, %p347
      %p349 = scmp.ne.s32.totalorder %s341, %s343
      %p350 = scmp.eq.s32.totalorder %s39, 1
      %p351 = por %p349, %p350
      %p352 = scmp.ne.s32.totalorder %s343, %s344
      %p353 = scmp.eq.s32.totalorder %s39, 0
      %p354 = por %p352, %p353
      %p355 = scmp.ne.s32.totalorder %s343, %s344
      %p356 = scmp.eq.s32.totalorder %s40, 1
      %p357 = por %p355, %p356
      %p359 = scmp.ne.s32.totalorder %s344, %s358
      %p360 = scmp.eq.s32.totalorder %s40, 0
      %p361 = por %p359, %p360
      %s363 = sadd.s32 %s362, 1
      %p366 = scmp.eq.s32.totalorder %s34, 1
      %p367 = scmp.ne.s32.totalorder %s362, %s364
      %p368 = scmp.eq.s32.totalorder %s34, 0
      %p369 = por %p367, %p368
      %p370 = scmp.ne.s32.totalorder %s362, %s364
      %p371 = scmp.eq.s32.totalorder %s39, 1
      %p372 = por %p370, %p371
      %p373 = scmp.ne.s32.totalorder %s364, %s365
      %p374 = scmp.eq.s32.totalorder %s39, 0
      %p375 = por %p373, %p374
      %p376 = scmp.ne.s32.totalorder %s364, %s365
      %p377 = scmp.eq.s32.totalorder %s40, 1
      %p378 = por %p376, %p377
      %p380 = scmp.ne.s32.totalorder %s365, %s379
      %p381 = scmp.eq.s32.totalorder %s40, 0
      %p382 = por %p380, %p381
      %s384 = sadd.s32 %s383, 1
      %p387 = scmp.eq.s32.totalorder %s34, 1
      %p388 = scmp.ne.s32.totalorder %s383, %s385
      %p389 = scmp.eq.s32.totalorder %s34, 0
      %p390 = por %p388, %p389
      %p391 = scmp.ne.s32.totalorder %s383, %s385
      %p392 = scmp.eq.s32.totalorder %s39, 1
      %p393 = por %p391, %p392
      %p394 = scmp.ne.s32.totalorder %s385, %s386
      %p395 = scmp.eq.s32.totalorder %s39, 0
      %p396 = por %p394, %p395
      %p397 = scmp.ne.s32.totalorder %s385, %s386
      %p398 = scmp.eq.s32.totalorder %s40, 1
      %p399 = por %p397, %p398
      %p401 = scmp.ne.s32.totalorder %s386, %s400
      %p402 = scmp.eq.s32.totalorder %s40, 0
      %p403 = por %p401, %p402
      %s405 = sadd.s32 %s404, 1
      %p408 = scmp.eq.s32.totalorder %s34, 1
      %p409 = scmp.ne.s32.totalorder %s404, %s406
      %p410 = scmp.eq.s32.totalorder %s34, 0
      %p411 = por %p409, %p410
      %p412 = scmp.ne.s32.totalorder %s404, %s406
      %p413 = scmp.eq.s32.totalorder %s39, 1
      %p414 = por %p412, %p413
      %p415 = scmp.ne.s32.totalorder %s406, %s407
      %p416 = scmp.eq.s32.totalorder %s39, 0
      %p417 = por %p415, %p416
      %p418 = scmp.ne.s32.totalorder %s406, %s407
      %p419 = scmp.eq.s32.totalorder %s40, 1
      %p420 = por %p418, %p419
      %p422 = scmp.ne.s32.totalorder %s407, %s421
      %p423 = scmp.eq.s32.totalorder %s40, 0
      %p424 = por %p422, %p423
      %s425 = ssub.s32 %s34, %s41
      %p426 = scmp.eq.s32.totalorder %s425, 0
      %s428 = sadd.s32 %s427, 1
      %s429 = scalar_select %p426, %s427, %s428
      %p432 = pneg %p426
      %p433 = scmp.eq.s32.totalorder %s34, 1
      %p434 = por %p432, %p433
      %p435 = scmp.ne.s32.totalorder %s427, %s430
      %p436 = scmp.eq.s32.totalorder %s34, 0
      %p437 = por %p435, %p436
      %p438 = scmp.ne.s32.totalorder %s427, %s430
      %p439 = scmp.eq.s32.totalorder %s39, 1
      %p440 = por %p438, %p439
      %p441 = scmp.ne.s32.totalorder %s430, %s431
      %p442 = scmp.eq.s32.totalorder %s39, 0
      %p443 = por %p441, %p442
      %p444 = scmp.ne.s32.totalorder %s430, %s431
      %p445 = scmp.eq.s32.totalorder %s40, 1
      %p446 = por %p444, %p445
      %p448 = scmp.ne.s32.totalorder %s431, %s447
      %p449 = scmp.eq.s32.totalorder %s40, 0
      %p450 = por %p448, %p449
      %s451 = ssub.s32 %s34, %s41
      %p452 = scmp.eq.s32.totalorder %s451, 0
      %s454 = sadd.s32 %s453, 1
      %s455 = scalar_select %p452, %s453, %s454
      %p458 = pneg %p452
      %p459 = scmp.eq.s32.totalorder %s34, 1
      %p460 = por %p458, %p459
      %p461 = scmp.ne.s32.totalorder %s453, %s456
      %p462 = scmp.eq.s32.totalorder %s34, 0
      %p463 = por %p461, %p462
      %p464 = scmp.ne.s32.totalorder %s453, %s456
      %p465 = scmp.eq.s32.totalorder %s39, 1
      %p466 = por %p464, %p465
      %p467 = scmp.ne.s32.totalorder %s456, %s457
      %p468 = scmp.eq.s32.totalorder %s39, 0
      %p469 = por %p467, %p468
      %p470 = scmp.ne.s32.totalorder %s456, %s457
      %p471 = scmp.eq.s32.totalorder %s40, 1
      %p472 = por %p470, %p471
      %p474 = scmp.ne.s32.totalorder %s457, %s473
      %p475 = scmp.eq.s32.totalorder %s40, 0
      %p476 = por %p474, %p475
      %p477 = scmp.le.s32.totalorder 1, %s34
      %p478 = scmp.lt.s32.totalorder %s34, 3
      %p479 = pnand %p477, %p478
      %p480 = pneg %p479
      // Predicated region
      $region9: #{tpu_custom_call.1} parent=5 // pred_check
        _
      $region10: #{tpu_custom_call.1} parent=5 // pred_check_branch
        %482 = sbr.rel (%p479) target = $region12
      $region11: #{tpu_custom_call.1} parent=5 // pred_region
        %s483 = ssub.s32 %s34, 1
        // Predicated region
        $region13: #{tpu_custom_call.1} parent=11 // pred_check
          %p484 = pneg %p81
        $region14: #{tpu_custom_call.1} parent=11 // pred_check_branch
          %486 = sbr.rel (%p484) target = $region16
        $region15: #{tpu_custom_call.1} parent=11 // pred_region
          _
        $region16: #{tpu_custom_call.1} parent=11 // pred_fallthru
          _
        // Predicated region
        $region17: #{tpu_custom_call.1} parent=11 // pred_check
          %p487 = pneg %p102
        $region18: #{tpu_custom_call.1} parent=11 // pred_check_branch
          %489 = sbr.rel (%p487) target = $region20
        $region19: #{tpu_custom_call.1} parent=11 // pred_region
          _
        $region20: #{tpu_custom_call.1} parent=11 // pred_fallthru
          _
        // Predicated region
        $region21: #{tpu_custom_call.1} parent=11 // pred_check
          %p490 = pneg %p123
        $region22: #{tpu_custom_call.1} parent=11 // pred_check_branch
          %492 = sbr.rel (%p490) target = $region24
        $region23: #{tpu_custom_call.1} parent=11 // pred_region
          _
        $region24: #{tpu_custom_call.1} parent=11 // pred_fallthru
          _
        // Predicated region
        $region25: #{tpu_custom_call.1} parent=11 // pred_check
          %p493 = pneg %p144
        $region26: #{tpu_custom_call.1} parent=11 // pred_check_branch
          %495 = sbr.rel (%p493) target = $region28
        $region27: #{tpu_custom_call.1} parent=11 // pred_region
          %s497 = ssub.s32 128, 128
          %498 = vsyncadd [#allocation3], %s497
          %s500 = sshll.u32 [#allocation2], 4
          %s501 = int_to_ptr.vmem [resolvable:$true] %s500
          %503 = dma.hbm_to_vmem [thread:$0]  %s4, 128, %s501, [#allocation3]
        $region28: #{tpu_custom_call.1} parent=11 // pred_fallthru
          _
        // Predicated region
        $region29: #{tpu_custom_call.1} parent=11 // pred_check
          %p504 = pneg %p165
        $region30: #{tpu_custom_call.1} parent=11 // pred_check_branch
          %506 = sbr.rel (%p504) target = $region32
        $region31: #{tpu_custom_call.1} parent=11 // pred_region
          %s508 = ssub.s32 128, 128
          %509 = vsyncadd [#allocation6], %s508
          %s511 = sshll.u32 [#allocation5], 4
          %s512 = int_to_ptr.vmem [resolvable:$true] %s511
          %514 = dma.hbm_to_vmem [thread:$0]  %s5, 128, %s512, [#allocation6]
        $region32: #{tpu_custom_call.1} parent=11 // pred_fallthru
          _
        // Predicated region
        $region33: #{tpu_custom_call.1} parent=11 // pred_check
          %p515 = pneg %p186
        $region34: #{tpu_custom_call.1} parent=11 // pred_check_branch
          %517 = sbr.rel (%p515) target = $region36
        $region35: #{tpu_custom_call.1} parent=11 // pred_region
          _
        $region36: #{tpu_custom_call.1} parent=11 // pred_fallthru
          _
        // Predicated region
        $region37: #{tpu_custom_call.1} parent=11 // pred_check
          %p518 = pneg %p207
        $region38: #{tpu_custom_call.1} parent=11 // pred_check_branch
          %520 = sbr.rel (%p518) target = $region40
        $region39: #{tpu_custom_call.1} parent=11 // pred_region
          _
        $region40: #{tpu_custom_call.1} parent=11 // pred_fallthru
          _
        // Predicated region
        $region41: #{tpu_custom_call.1} parent=11 // pred_check
          %p521 = pneg %p228
        $region42: #{tpu_custom_call.1} parent=11 // pred_check_branch
          %523 = sbr.rel (%p521) target = $region44
        $region43: #{tpu_custom_call.1} parent=11 // pred_region
          _
        $region44: #{tpu_custom_call.1} parent=11 // pred_fallthru
          _
        // Predicated region
        $region45: #{tpu_custom_call.1} parent=11 // pred_check
          %p524 = pneg %p249
        $region46: #{tpu_custom_call.1} parent=11 // pred_check_branch
          %526 = sbr.rel (%p524) target = $region48
        $region47: #{tpu_custom_call.1} parent=11 // pred_region
          _
        $region48: #{tpu_custom_call.1} parent=11 // pred_fallthru
          _
        // Predicated region
        $region49: #{tpu_custom_call.1} parent=11 // pred_check
          %p527 = pneg %p270
        $region50: #{tpu_custom_call.1} parent=11 // pred_check_branch
          %529 = sbr.rel (%p527) target = $region52
        $region51: #{tpu_custom_call.1} parent=11 // pred_region
          _
        $region52: #{tpu_custom_call.1} parent=11 // pred_fallthru
          _
        // Predicated region
        $region53: #{tpu_custom_call.1} parent=11 // pred_check
          %p530 = pneg %p291
        $region54: #{tpu_custom_call.1} parent=11 // pred_check_branch
          %532 = sbr.rel (%p530) target = $region56
        $region55: #{tpu_custom_call.1} parent=11 // pred_region
          _
        $region56: #{tpu_custom_call.1} parent=11 // pred_fallthru
          _
        // Predicated region
        $region57: #{tpu_custom_call.1} parent=11 // pred_check
          %p533 = pneg %p312
        $region58: #{tpu_custom_call.1} parent=11 // pred_check_branch
          %535 = sbr.rel (%p533) target = $region60
        $region59: #{tpu_custom_call.1} parent=11 // pred_region
          _
        $region60: #{tpu_custom_call.1} parent=11 // pred_fallthru
          _
        // Predicated region
        $region61: #{tpu_custom_call.1} parent=11 // pred_check
          %p536 = pneg %p333
        $region62: #{tpu_custom_call.1} parent=11 // pred_check_branch
          %538 = sbr.rel (%p536) target = $region64
        $region63: #{tpu_custom_call.1} parent=11 // pred_region
          _
        $region64: #{tpu_custom_call.1} parent=11 // pred_fallthru
          _
        // Predicated region
        $region65: #{tpu_custom_call.1} parent=11 // pred_check
          %p539 = pneg %p354
        $region66: #{tpu_custom_call.1} parent=11 // pred_check_branch
          %541 = sbr.rel (%p539) target = $region68
        $region67: #{tpu_custom_call.1} parent=11 // pred_region
          _
        $region68: #{tpu_custom_call.1} parent=11 // pred_fallthru
          _
        // Predicated region
        $region69: #{tpu_custom_call.1} parent=11 // pred_check
          %p542 = pneg %p375
        $region70: #{tpu_custom_call.1} parent=11 // pred_check_branch
          %544 = sbr.rel (%p542) target = $region72
        $region71: #{tpu_custom_call.1} parent=11 // pred_region
          _
        $region72: #{tpu_custom_call.1} parent=11 // pred_fallthru
          _
        // Predicated region
        $region73: #{tpu_custom_call.1} parent=11 // pred_check
          %p545 = pneg %p396
        $region74: #{tpu_custom_call.1} parent=11 // pred_check_branch
          %547 = sbr.rel (%p545) target = $region76
        $region75: #{tpu_custom_call.1} parent=11 // pred_region
          _
        $region76: #{tpu_custom_call.1} parent=11 // pred_fallthru
          _
        // Predicated region
        $region77: #{tpu_custom_call.1} parent=11 // pred_check
          %p548 = pneg %p417
        $region78: #{tpu_custom_call.1} parent=11 // pred_check_branch
          %550 = sbr.rel (%p548) target = $region80
        $region79: #{tpu_custom_call.1} parent=11 // pred_region
          _
        $region80: #{tpu_custom_call.1} parent=11 // pred_fallthru
          _
      $region12: #{tpu_custom_call.1} parent=5 // pred_fallthru
        _
      %p551 = scmp.lt.s32.totalorder %s34, 2
      // Predicated region
      $region81: #{tpu_custom_call.1} parent=5 // pred_check
        %p552 = pneg %p551
      $region82: #{tpu_custom_call.1} parent=5 // pred_check_branch
        %554 = sbr.rel (%p552) target = $region84
      $region83: #{tpu_custom_call.1} parent=5 // pred_region
        // Predicated region
        $region85: #{tpu_custom_call.1} parent=83 // pred_check
          %p555 = pneg %p54
        $region86: #{tpu_custom_call.1} parent=83 // pred_check_branch
          %557 = sbr.rel (%p555) target = $region88
        $region87: #{tpu_custom_call.1} parent=83 // pred_region
          %p558 = scmp.lt.s32.totalorder %s34, 1
          %s559 = scalar_select %p558, %s34, 1
          %s560 = smul.addr %s559, 8
          %s561 = scalar_lea.vmem %s0, %s560
        $region88: #{tpu_custom_call.1} parent=83 // pred_fallthru
          _
      $region84: #{tpu_custom_call.1} parent=5 // pred_fallthru
        _
      %p562 = scmp.le.s32.totalorder 1, %s34
      %p563 = scmp.lt.s32.totalorder %s34, 3
      %p564 = pnand %p562, %p563
      %p565 = pneg %p564
      // Predicated region
      $region89: #{tpu_custom_call.1} parent=5 // pred_check
        _
      $region90: #{tpu_custom_call.1} parent=5 // pred_check_branch
        %567 = sbr.rel (%p564) target = $region92
      $region91: #{tpu_custom_call.1} parent=5 // pred_region
        %s568 = ssub.s32 %s34, 1
        // Predicated region
        $region93: #{tpu_custom_call.1} parent=91 // pred_check
          %p569 = pneg %p144
        $region94: #{tpu_custom_call.1} parent=91 // pred_check_branch
          %571 = sbr.rel (%p569) target = $region96
        $region95: #{tpu_custom_call.1} parent=91 // pred_region
          %572 = dma.done [#allocation3], 128
        $region96: #{tpu_custom_call.1} parent=91 // pred_fallthru
          _
        // Predicated region
        $region97: #{tpu_custom_call.1} parent=91 // pred_check
          %p573 = pneg %p165
        $region98: #{tpu_custom_call.1} parent=91 // pred_check_branch
          %575 = sbr.rel (%p573) target = $region100
        $region99: #{tpu_custom_call.1} parent=91 // pred_region
          %576 = dma.done [#allocation6], 128
        $region100: #{tpu_custom_call.1} parent=91 // pred_fallthru
          _
        %p577 = scmp.lt.s32.totalorder %s39, 1
        %s578 = scalar_select %p577, %s39, 1
        %s579 = smul.addr %s578, 8
        %s580 = scalar_lea.vmem %s0, %s579
        %p581 = pneg %p60
        %p582 = pneg %p57
        %p583 = pneg %p81
        %p584 = pneg %p78
        %p585 = pneg %p102
        %p586 = pneg %p99
        %p587 = pneg %p123
        %p588 = pneg %p120
        %p589 = pneg %p144
        %p590 = pneg %p141
        %p591 = pneg %p165
        %p592 = pneg %p162
        %p593 = pneg %p186
        %p594 = pneg %p183
        %p595 = pneg %p207
        %p596 = pneg %p204
        %p597 = pneg %p228
        %p598 = pneg %p225
        %p599 = pneg %p249
        %p600 = pneg %p246
        %p601 = pneg %p270
        %p602 = pneg %p267
        %p603 = pneg %p291
        %p604 = pneg %p288
        %p605 = pneg %p312
        %p606 = pneg %p309
        %p607 = pneg %p333
        %p608 = pneg %p330
        %p609 = pneg %p354
        %p610 = pneg %p351
        %p611 = pneg %p375
        %p612 = pneg %p372
        %p613 = pneg %p396
        %p614 = pneg %p393
        %p615 = pneg %p417
        %p616 = pneg %p414
        %p617 = pneg %p443
        %p618 = pneg %p440
        %s619 = sand.u32 %s430, 1
        %s620 = scalar_lea.sflag [#allocation4], %s619
        %s621 = sand.u32 %s430, 1
        %s622 = smul.addr %s621, 8
        %s623 = scalar_lea.vmem [#allocation7], %s622
        %p624 = pneg %p469
        %p625 = pneg %p466
        %s626 = sand.u32 %s456, 1
        %s627 = scalar_lea.sflag [#allocation9], %s626
        %s628 = sand.u32 %s456, 1
        %s629 = smul.addr %s628, 8
        %s630 = scalar_lea.vmem [#allocation8], %s629
        %p631 = scmp.lt.s32.totalorder %s39, 1
        %s632 = scalar_select %p631, %s39, 1
        %s633 = smul.addr %s632, 8
        %s634 = scalar_lea.vmem %s0, %s633
        %v636 = vld [vmem:[%s634] sm:$0xff]
        %v637 = vld [vmem:[%s6] sm:$0x1]
        %v638 = vld [vmem:[%s7] sm:$0x1]
        %vm639 = vcmask 261120
        %v640 = vsel %vm639, %v636, 0.0
        %641 = vadd.xlane.f32.xlu0 %v640
        %v642 = vpop.xlane.xlu0 %641
        %v643 = vrcp.pop 32.0
        %v644 = vmul.f32 %v642, %v643
        %v645 = vsub.f32 %v636, %v644
        %v646 = vmul.f32 %v645, %v645
        %v647 = vsel %vm639, %v646, 0.0
        %648 = vadd.xlane.f32.xlu0 %v647
        %v649 = vpop.xlane.xlu0 %648
        %v650 = vmul.f32 %v649, %v643
        %v652 = vlaneseq
        %v653 = vshrl.u32 %v652, 7
        %v654 = vsub.s32 0, %v653
        %v655 = vrot.slane %v637, %v654
        %v657 = vmul.f32 %v655, %v645
        %v658 = vadd.f32 %v650, 1e-12
        %v659 = vrcp.pop %v658
        %v660 = vmul.f32 %v657, %v659
        %v662 = vlaneseq
        %v663 = vshrl.u32 %v662, 7
        %v664 = vsub.s32 0, %v663
        %v665 = vrot.slane %v638, %v664
        %v667 = vadd.f32 %v660, %v665
        %v668 = vpack.c.bf16 %v667, %v667
        %v669 = vld [vmem:[%s8] sm:$0xf]
        %v670 = vld [vmem:[%s8 + $0x4] sm:$0xf]
        %v671 = vld [vmem:[%s8 + $0x8] sm:$0xf]
        %v672 = vld [vmem:[%s8 + $0xc] sm:$0xf]
        %v673 = vld [vmem:[%s9] sm:$0x1]
        %v675 = vlaneseq
        %v676 = vshrl.u32 %v675, 7
        %v677 = vsub.s32 0, %v676
        %v678 = vrot.slane %v673, %v677
        %v684 = vunpack.c.l.b16 %v669
        %v685 = vunpack.c.l.b16 %v670
        %v686 = vunpack.c.l.b16 %v671
        %v687 = vunpack.c.l.b16 %v672
        %v688 = vpack.c.b16 %v685, %v684
        %v689 = vpack.c.b16 %v687, %v686
        %v693 = vsel %vm639, %v668, 0
        %695 = vmatprep.subr.bf16.mxu0 0
        %696 = vmatpush1.bf16.msra.mxu0 %v688
        %697 = vmatprep.subr.bf16.mxu0 0
        %698 = vmatpush1.bf16.msra.mxu0 %v689
        %699 = vmatprep.subr.bf16.mxu0 0
        %700 = vmatpush1.bf16.msra.mxu0 0
        %701 = vmatprep.subr.bf16.mxu0 0
        %702 = vmatpush1.bf16.msra.mxu0 0
        %703 = vmatprep.subr.bf16.mxu0 0
        %704 = vmatpush1.bf16.msra.mxu0 0
        %705 = vmatprep.subr.bf16.mxu0 0
        %706 = vmatpush1.bf16.msra.mxu0 0
        %707 = vmatprep.subr.bf16.mxu0 0
        %708 = vmatpush1.bf16.msra.mxu0 0
        %709 = vmatprep.subr.bf16.mxu0 0
        %710 = vmatpush1.bf16.msra.mxu0 0
        %711 = vmatprep.subr.bf16.mxu0 0
        %712 = vmatpush1.bf16.msra.mxu0 0
        %713 = vmatprep.subr.bf16.mxu0 0
        %714 = vmatpush1.bf16.msra.mxu0 0
        %715 = vmatprep.subr.bf16.mxu0 0
        %716 = vmatpush1.bf16.msra.mxu0 0
        %717 = vmatprep.subr.bf16.mxu0 0
        %718 = vmatpush1.bf16.msra.mxu0 0
        %719 = vmatprep.subr.bf16.mxu0 0
        %720 = vmatpush1.bf16.msra.mxu0 0
        %721 = vmatprep.subr.bf16.mxu0 0
        %722 = vmatpush1.bf16.msra.mxu0 0
        %723 = vmatprep.subr.bf16.mxu0 0
        %724 = vmatpush1.bf16.msra.mxu0 0
        %725 = vmatprep.subr.bf16.mxu0 0
        %726 = vmatpush1.bf16.msra.mxu0 0
        %727 = vmatprep.mubr.bf16.mxu0 0
        %728 = vmatmul.mubr.bf16.gmra.mrb[0].mxu0 %v693
        %v729 = vpop.f32.mrb[0].mxu0
        %v730 = vadd.f32 %v678, %v729
        %v731 = vpop.f32.mrb[0].mxu0
        %v732 = vpop.f32.mrb[0].mxu0
        %v733 = vpop.f32.mrb[0].mxu0
        %734 = vdwg.mxu0
        %736 = vrot.lane.b32.xlu0 %v730, 96
        %v737 = vpop.permute.xlu0 %736
        %vm739 = vcmask 523264
        %740 = vst.msk [vmem:[%s630] sm:$0xff] %vm739, %v737
        %v741 = vlaneseq
        %v742 = vand.u32 %v741, 127
        %vm743 = vcmp.lt.s32.totalorder %v742, 0
        %v744 = vsub.s32 0, %v742
        %v745 = vsel %vm743, %v744, %v742
        %v746 = vshrl.u32 %v745, 1
        %v747 = vand.u32 %v745, 1
        %v748 = vsub.s32 0, %v747
        %v749 = vsel %vm743, %v748, %v747
        %vm750 = vcmp.ne.s32.totalorder %v749, 0
        %vm751 = vcmp.lt.s32.totalorder %v749, 0
        %vm752 = vmand %vm751, %vm750
        %v753 = vadd.s32 %v749, 2
        %v754 = vsel %vm752, %v753, %v749
        %vm755 = vcmp.eq.s32.totalorder %v754, 0
        %v756 = vld [vmem:[%s1] sm:$0xff]
        %v757 = vld [vmem:[%s2] sm:$0xff]
        %758 = vrot.lane.b32.xlu0 %v730, 127
        %v759 = vpop.permute.xlu0 %758
        %761 = vrot.lane.b32.xlu0 %v730, 31
        %v762 = vpop.permute.xlu0 %761
        %vm764 = vcmask 252928
        %v765 = vsel %vm764, %v759, %v762
        %766 = vrot.lane.b32.xlu0 %v730, 97
        %v767 = vpop.permute.xlu0 %766
        %769 = vrot.lane.b32.xlu0 %v730, 1
        %v770 = vpop.permute.xlu0 %769
        %vm772 = vcmask 7168
        %v773 = vsel %vm772, %v767, %v770
        %v774 = vsel %vm755, 1, 0
        %vm775 = vcmp.eq.s32.totalorder %v774, 1
        %v776 = vsel %vm775, %v765, %v773
        %v777 = vmul.f32 %v730, %v756
        %v778 = vmul.f32 %v776, %v757
        %v779 = vadd.f32 %v777, %v778
        %v780 = vld [vmem:[%s3] sm:$0xff]
        %v781 = vld [vmem:[#allocation2] sm:$0xff]
        %782 = vrot.lane.b32.xlu0 %v730, 95
        %v783 = vpop.permute.xlu0 %782
        %v785 = vsel %vm764, %v783, %v759
        %786 = vrot.lane.b32.xlu0 %v730, 65
        %v787 = vpop.permute.xlu0 %786
        %v789 = vsel %vm772, %v787, %v767
        %v790 = vsel %vm775, %v785, %v789
        %792 = vrot.lane.b32.xlu0 %v780, 32
        %v793 = vpop.permute.xlu0 %792
        %v795 = vmul.f32 %v730, %v793
        %v796 = vmul.f32 %v790, %v781
        %798 = vrot.lane.b32.xlu0 %v796, 32
        %v799 = vpop.permute.xlu0 %798
        %v801 = vadd.f32 %v795, %v799
        %v802 = vld [vmem:[#allocation5] sm:$0xff]
        %v803 = vpack.c.bf16 %v779, %v779
        %v804 = vpack.c.bf16 %v801, %v801
        %v805 = vpack.c.bf16 %v730, %v730
        %807 = vrot.lane.b32.xlu0 %v804, 96
        %v808 = vpop.permute.xlu0 %807
        %vm809 = vcmask 64512
        %v811 = vsel %vm809, %v803, 0
        %v814 = vsel %vm809, %v808, 0
        %816 = vmatprep.subr.bf16.mxu0 0
        %817 = vmatpush1.bf16.xpose.msra.mxu0 %v814
        %818 = vmatprep.subr.bf16.mxu0 0
        %819 = vmatpush1.bf16.xpose.msra.mxu0 0
        %820 = vmatprep.subr.bf16.mxu0 0
        %821 = vmatpush1.bf16.xpose.msra.mxu0 0
        %822 = vmatprep.subr.bf16.mxu0 0
        %823 = vmatpush1.bf16.xpose.msra.mxu0 0
        %824 = vmatprep.subr.bf16.mxu0 0
        %825 = vmatpush1.bf16.xpose.msra.mxu0 0
        %826 = vmatprep.subr.bf16.mxu0 0
        %827 = vmatpush1.bf16.xpose.msra.mxu0 0
        %828 = vmatprep.subr.bf16.mxu0 0
        %829 = vmatpush1.bf16.xpose.msra.mxu0 0
        %830 = vmatprep.subr.bf16.mxu0 0
        %831 = vmatpush1.bf16.xpose.msra.mxu0 0
        %832 = vmatprep.subr.bf16.mxu0 0
        %833 = vmatpush1.bf16.xpose.msra.mxu0 0
        %834 = vmatprep.subr.bf16.mxu0 0
        %835 = vmatpush1.bf16.xpose.msra.mxu0 0
        %836 = vmatprep.subr.bf16.mxu0 0
        %837 = vmatpush1.bf16.xpose.msra.mxu0 0
        %838 = vmatprep.subr.bf16.mxu0 0
        %839 = vmatpush1.bf16.xpose.msra.mxu0 0
        %840 = vmatprep.subr.bf16.mxu0 0
        %841 = vmatpush1.bf16.xpose.msra.mxu0 0
        %842 = vmatprep.subr.bf16.mxu0 0
        %843 = vmatpush1.bf16.xpose.msra.mxu0 0
        %844 = vmatprep.subr.bf16.mxu0 0
        %845 = vmatpush1.bf16.xpose.msra.mxu0 0
        %846 = vmatprep.subr.bf16.mxu0 0
        %847 = vmatpush1.bf16.xpose.msra.mxu0 0
        %848 = vmatprep.mubr.bf16.mxu0 0
        %849 = vmatmul.mubr.bf16.gmra.mrb[0].mxu0 %v811
        %v850 = vpop.f32.mrb[0].mxu0
        %v851 = vadd.f32 0.0, %v850
        %v852 = vpop.f32.mrb[0].mxu0
        %v853 = vpop.f32.mrb[0].mxu0
        %v854 = vpop.f32.mrb[0].mxu0
        %855 = vdwg.mxu0
        %v856 = vmul.f32 %v851, 0.35355338
        %v857 = vadd.f32 %v856, %v802
        %v858 = vsel %vm809, %v857, -inf
        %859 = vmax.xlane.f32.xlu0 %v858
        %v860 = vpop.xlane.xlu0 %859
        %v861 = vsub.f32 %v857, %v860
        %v862 = vmul.f32 %v861, 1.442695
        %v863 = vpow.pop %v862
        %v864 = vsel %vm809, %v863, 0.0
        %865 = vadd.xlane.f32.xlu0 %v864
        %v866 = vpop.xlane.xlu0 %865
        %v867 = vrcp.pop %v866
        %v868 = vmul.f32 %v863, %v867
        %v869 = vpack.c.bf16 %v868, %v868
        %871 = vrot.lane.b32.xlu0 %v805, 64
        %v872 = vpop.permute.xlu0 %871
        %v874 = vsel %vm809, %v869, 0
        %vm876 = vcmask 1043456
        %v878 = vsel %vm876, %v872, 0
        %880 = vmatprep.subr.bf16.mxu0 0
        %881 = vmatpush1.bf16.msra.mxu0 %v878
        %882 = vmatprep.subr.bf16.mxu0 0
        %883 = vmatpush1.bf16.msra.mxu0 0
        %884 = vmatprep.subr.bf16.mxu0 0
        %885 = vmatpush1.bf16.msra.mxu0 0
        %886 = vmatprep.subr.bf16.mxu0 0
        %887 = vmatpush1.bf16.msra.mxu0 0
        %888 = vmatprep.subr.bf16.mxu0 0
        %889 = vmatpush1.bf16.msra.mxu0 0
        %890 = vmatprep.subr.bf16.mxu0 0
        %891 = vmatpush1.bf16.msra.mxu0 0
        %892 = vmatprep.subr.bf16.mxu0 0
        %893 = vmatpush1.bf16.msra.mxu0 0
        %894 = vmatprep.subr.bf16.mxu0 0
        %895 = vmatpush1.bf16.msra.mxu0 0
        %896 = vmatprep.subr.bf16.mxu0 0
        %897 = vmatpush1.bf16.msra.mxu0 0
        %898 = vmatprep.subr.bf16.mxu0 0
        %899 = vmatpush1.bf16.msra.mxu0 0
        %900 = vmatprep.subr.bf16.mxu0 0
        %901 = vmatpush1.bf16.msra.mxu0 0
        %902 = vmatprep.subr.bf16.mxu0 0
        %903 = vmatpush1.bf16.msra.mxu0 0
        %904 = vmatprep.subr.bf16.mxu0 0
        %905 = vmatpush1.bf16.msra.mxu0 0
        %906 = vmatprep.subr.bf16.mxu0 0
        %907 = vmatpush1.bf16.msra.mxu0 0
        %908 = vmatprep.subr.bf16.mxu0 0
        %909 = vmatpush1.bf16.msra.mxu0 0
        %910 = vmatprep.subr.bf16.mxu0 0
        %911 = vmatpush1.bf16.msra.mxu0 0
        %912 = vmatprep.mubr.bf16.mxu0 0
        %913 = vmatmul.mubr.bf16.gmra.mrb[0].mxu0 %v874
        %v914 = vpop.f32.mrb[0].mxu0
        %v915 = vadd.f32 0.0, %v914
        %v916 = vpop.f32.mrb[0].mxu0
        %v917 = vpop.f32.mrb[0].mxu0
        %v918 = vpop.f32.mrb[0].mxu0
        %919 = vdwg.mxu0
        %v920 = vpack.c.bf16 %v915, %v915
        %922 = vrot.lane.b32.xlu0 %v803, 120
        %v923 = vpop.permute.xlu0 %922
        %924 = vrot.lane.b32.xlu0 %v804, 88
        %v925 = vpop.permute.xlu0 %924
        %v927 = vsel %vm809, %v923, 0
        %v930 = vsel %vm809, %v925, 0
        %932 = vmatprep.subr.bf16.mxu0 0
        %933 = vmatpush1.bf16.xpose.msra.mxu0 %v930
        %934 = vmatprep.subr.bf16.mxu0 0
        %935 = vmatpush1.bf16.xpose.msra.mxu0 0
        %936 = vmatprep.subr.bf16.mxu0 0
        %937 = vmatpush1.bf16.xpose.msra.mxu0 0
        %938 = vmatprep.subr.bf16.mxu0 0
        %939 = vmatpush1.bf16.xpose.msra.mxu0 0
        %940 = vmatprep.subr.bf16.mxu0 0
        %941 = vmatpush1.bf16.xpose.msra.mxu0 0
        %942 = vmatprep.subr.bf16.mxu0 0
        %943 = vmatpush1.bf16.xpose.msra.mxu0 0
        %944 = vmatprep.subr.bf16.mxu0 0
        %945 = vmatpush1.bf16.xpose.msra.mxu0 0
        %946 = vmatprep.subr.bf16.mxu0 0
        %947 = vmatpush1.bf16.xpose.msra.mxu0 0
        %948 = vmatprep.subr.bf16.mxu0 0
        %949 = vmatpush1.bf16.xpose.msra.mxu0 0
        %950 = vmatprep.subr.bf16.mxu0 0
        %951 = vmatpush1.bf16.xpose.msra.mxu0 0
        %952 = vmatprep.subr.bf16.mxu0 0
        %953 = vmatpush1.bf16.xpose.msra.mxu0 0
        %954 = vmatprep.subr.bf16.mxu0 0
        %955 = vmatpush1.bf16.xpose.msra.mxu0 0
        %956 = vmatprep.subr.bf16.mxu0 0
        %957 = vmatpush1.bf16.xpose.msra.mxu0 0
        %958 = vmatprep.subr.bf16.mxu0 0
        %959 = vmatpush1.bf16.xpose.msra.mxu0 0
        %960 = vmatprep.subr.bf16.mxu0 0
        %961 = vmatpush1.bf16.xpose.msra.mxu0 0
        %962 = vmatprep.subr.bf16.mxu0 0
        %963 = vmatpush1.bf16.xpose.msra.mxu0 0
        %964 = vmatprep.mubr.bf16.mxu0 0
        %965 = vmatmul.mubr.bf16.gmra.mrb[0].mxu0 %v927
        %v966 = vpop.f32.mrb[0].mxu0
        %v967 = vadd.f32 0.0, %v966
        %v968 = vpop.f32.mrb[0].mxu0
        %v969 = vpop.f32.mrb[0].mxu0
        %v970 = vpop.f32.mrb[0].mxu0
        %971 = vdwg.mxu0
        %v972 = vmul.f32 %v967, 0.35355338
        %v973 = vadd.f32 %v972, %v802
        %v974 = vsel %vm809, %v973, -inf
        %975 = vmax.xlane.f32.xlu0 %v974
        %v976 = vpop.xlane.xlu0 %975
        %v977 = vsub.f32 %v973, %v976
        %v978 = vmul.f32 %v977, 1.442695
        %v979 = vpow.pop %v978
        %v980 = vsel %vm809, %v979, 0.0
        %981 = vadd.xlane.f32.xlu0 %v980
        %v982 = vpop.xlane.xlu0 %981
        %v983 = vrcp.pop %v982
        %v984 = vmul.f32 %v979, %v983
        %v985 = vpack.c.bf16 %v984, %v984
        %986 = vrot.lane.b32.xlu0 %v805, 56
        %v987 = vpop.permute.xlu0 %986
        %v989 = vsel %vm809, %v985, 0
        %v992 = vsel %vm876, %v987, 0
        %994 = vmatprep.subr.bf16.mxu0 0
        %995 = vmatpush1.bf16.msra.mxu0 %v992
        %996 = vmatprep.subr.bf16.mxu0 0
        %997 = vmatpush1.bf16.msra.mxu0 0
        %998 = vmatprep.subr.bf16.mxu0 0
        %999 = vmatpush1.bf16.msra.mxu0 0
        %1000 = vmatprep.subr.bf16.mxu0 0
        %1001 = vmatpush1.bf16.msra.mxu0 0
        %1002 = vmatprep.subr.bf16.mxu0 0
        %1003 = vmatpush1.bf16.msra.mxu0 0
        %1004 = vmatprep.subr.bf16.mxu0 0
        %1005 = vmatpush1.bf16.msra.mxu0 0
        %1006 = vmatprep.subr.bf16.mxu0 0
        %1007 = vmatpush1.bf16.msra.mxu0 0
        %1008 = vmatprep.subr.bf16.mxu0 0
        %1009 = vmatpush1.bf16.msra.mxu0 0
        %1010 = vmatprep.subr.bf16.mxu0 0
        %1011 = vmatpush1.bf16.msra.mxu0 0
        %1012 = vmatprep.subr.bf16.mxu0 0
        %1013 = vmatpush1.bf16.msra.mxu0 0
        %1014 = vmatprep.subr.bf16.mxu0 0
        %1015 = vmatpush1.bf16.msra.mxu0 0
        %1016 = vmatprep.subr.bf16.mxu0 0
        %1017 = vmatpush1.bf16.msra.mxu0 0
        %1018 = vmatprep.subr.bf16.mxu0 0
        %1019 = vmatpush1.bf16.msra.mxu0 0
        %1020 = vmatprep.subr.bf16.mxu0 0
        %1021 = vmatpush1.bf16.msra.mxu0 0
        %1022 = vmatprep.subr.bf16.mxu0 0
        %1023 = vmatpush1.bf16.msra.mxu0 0
        %1024 = vmatprep.subr.bf16.mxu0 0
        %1025 = vmatpush1.bf16.msra.mxu0 0
        %1026 = vmatprep.mubr.bf16.mxu0 0
        %1027 = vmatmul.mubr.bf16.gmra.mrb[0].mxu0 %v989
        %v1028 = vpop.f32.mrb[0].mxu0
        %v1029 = vadd.f32 0.0, %v1028
        %v1030 = vpop.f32.mrb[0].mxu0
        %v1031 = vpop.f32.mrb[0].mxu0
        %v1032 = vpop.f32.mrb[0].mxu0
        %1033 = vdwg.mxu0
        %v1034 = vpack.c.bf16 %v1029, %v1029
        %1035 = vrot.lane.b32.xlu0 %v803, 112
        %v1036 = vpop.permute.xlu0 %1035
        %1037 = vrot.lane.b32.xlu0 %v804, 80
        %v1038 = vpop.permute.xlu0 %1037
        %v1040 = vsel %vm809, %v1036, 0
        %v1043 = vsel %vm809, %v1038, 0
        %1045 = vmatprep.subr.bf16.mxu0 0
        %1046 = vmatpush1.bf16.xpose.msra.mxu0 %v1043
        %1047 = vmatprep.subr.bf16.mxu0 0
        %1048 = vmatpush1.bf16.xpose.msra.mxu0 0
        %1049 = vmatprep.subr.bf16.mxu0 0
        %1050 = vmatpush1.bf16.xpose.msra.mxu0 0
        %1051 = vmatprep.subr.bf16.mxu0 0
        %1052 = vmatpush1.bf16.xpose.msra.mxu0 0
        %1053 = vmatprep.subr.bf16.mxu0 0
        %1054 = vmatpush1.bf16.xpose.msra.mxu0 0
        %1055 = vmatprep.subr.bf16.mxu0 0
        %1056 = vmatpush1.bf16.xpose.msra.mxu0 0
        %1057 = vmatprep.subr.bf16.mxu0 0
        %1058 = vmatpush1.bf16.xpose.msra.mxu0 0
        %1059 = vmatprep.subr.bf16.mxu0 0
        %1060 = vmatpush1.bf16.xpose.msra.mxu0 0
        %1061 = vmatprep.subr.bf16.mxu0 0
        %1062 = vmatpush1.bf16.xpose.msra.mxu0 0
        %1063 = vmatprep.subr.bf16.mxu0 0
        %1064 = vmatpush1.bf16.xpose.msra.mxu0 0
        %1065 = vmatprep.subr.bf16.mxu0 0
        %1066 = vmatpush1.bf16.xpose.msra.mxu0 0
        %1067 = vmatprep.subr.bf16.mxu0 0
        %1068 = vmatpush1.bf16.xpose.msra.mxu0 0
        %1069 = vmatprep.subr.bf16.mxu0 0
        %1070 = vmatpush1.bf16.xpose.msra.mxu0 0
        %1071 = vmatprep.subr.bf16.mxu0 0
        %1072 = vmatpush1.bf16.xpose.msra.mxu0 0
        %1073 = vmatprep.subr.bf16.mxu0 0
        %1074 = vmatpush1.bf16.xpose.msra.mxu0 0
        %1075 = vmatprep.subr.bf16.mxu0 0
        %1076 = vmatpush1.bf16.xpose.msra.mxu0 0
        %1077 = vmatprep.mubr.bf16.mxu0 0
        %1078 = vmatmul.mubr.bf16.gmra.mrb[0].mxu0 %v1040
        %v1079 = vpop.f32.mrb[0].mxu0
        %v1080 = vadd.f32 0.0, %v1079
        %v1081 = vpop.f32.mrb[0].mxu0
        %v1082 = vpop.f32.mrb[0].mxu0
        %v1083 = vpop.f32.mrb[0].mxu0
        %1084 = vdwg.mxu0
        %v1085 = vmul.f32 %v1080, 0.35355338
        %v1086 = vadd.f32 %v1085, %v802
        %v1087 = vsel %vm809, %v1086, -inf
        %1088 = vmax.xlane.f32.xlu0 %v1087
        %v1089 = vpop.xlane.xlu0 %1088
        %v1090 = vsub.f32 %v1086, %v1089
        %v1091 = vmul.f32 %v1090, 1.442695
        %v1092 = vpow.pop %v1091
        %v1093 = vsel %vm809, %v1092, 0.0
        %1094 = vadd.xlane.f32.xlu0 %v1093
        %v1095 = vpop.xlane.xlu0 %1094
        %v1096 = vrcp.pop %v1095
        %v1097 = vmul.f32 %v1092, %v1096
        %v1098 = vpack.c.bf16 %v1097, %v1097
        %1099 = vrot.lane.b32.xlu0 %v805, 48
        %v1100 = vpop.permute.xlu0 %1099
        %v1102 = vsel %vm809, %v1098, 0
        %v1105 = vsel %vm876, %v1100, 0
        %1107 = vmatprep.subr.bf16.mxu0 0
        %1108 = vmatpush1.bf16.msra.mxu0 %v1105
        %1109 = vmatprep.subr.bf16.mxu0 0
        %1110 = vmatpush1.bf16.msra.mxu0 0
        %1111 = vmatprep.subr.bf16.mxu0 0
        %1112 = vmatpush1.bf16.msra.mxu0 0
        %1113 = vmatprep.subr.bf16.mxu0 0
        %1114 = vmatpush1.bf16.msra.mxu0 0
        %1115 = vmatprep.subr.bf16.mxu0 0
        %1116 = vmatpush1.bf16.msra.mxu0 0
        %1117 = vmatprep.subr.bf16.mxu0 0
        %1118 = vmatpush1.bf16.msra.mxu0 0
        %1119 = vmatprep.subr.bf16.mxu0 0
        %1120 = vmatpush1.bf16.msra.mxu0 0
        %1121 = vmatprep.subr.bf16.mxu0 0
        %1122 = vmatpush1.bf16.msra.mxu0 0
        %1123 = vmatprep.subr.bf16.mxu0 0
        %1124 = vmatpush1.bf16.msra.mxu0 0
        %1125 = vmatprep.subr.bf16.mxu0 0
        %1126 = vmatpush1.bf16.msra.mxu0 0
        %1127 = vmatprep.subr.bf16.mxu0 0
        %1128 = vmatpush1.bf16.msra.mxu0 0
        %1129 = vmatprep.subr.bf16.mxu0 0
        %1130 = vmatpush1.bf16.msra.mxu0 0
        %1131 = vmatprep.subr.bf16.mxu0 0
        %1132 = vmatpush1.bf16.msra.mxu0 0
        %1133 = vmatprep.subr.bf16.mxu0 0
        %1134 = vmatpush1.bf16.msra.mxu0 0
        %1135 = vmatprep.subr.bf16.mxu0 0
        %1136 = vmatpush1.bf16.msra.mxu0 0
        %1137 = vmatprep.subr.bf16.mxu0 0
        %1138 = vmatpush1.bf16.msra.mxu0 0
        %1139 = vmatprep.mubr.bf16.mxu0 0
        %1140 = vmatmul.mubr.bf16.gmra.mrb[0].mxu0 %v1102
        %v1141 = vpop.f32.mrb[0].mxu0
        %v1142 = vadd.f32 0.0, %v1141
        %v1143 = vpop.f32.mrb[0].mxu0
        %v1144 = vpop.f32.mrb[0].mxu0
        %v1145 = vpop.f32.mrb[0].mxu0
        %1146 = vdwg.mxu0
        %v1147 = vpack.c.bf16 %v1142, %v1142
        %1148 = vrot.lane.b32.xlu0 %v803, 104
        %v1149 = vpop.permute.xlu0 %1148
        %1150 = vrot.lane.b32.xlu0 %v804, 72
        %v1151 = vpop.permute.xlu0 %1150
        %v1153 = vsel %vm809, %v1149, 0
        %v1156 = vsel %vm809, %v1151, 0
        %1158 = vmatprep.subr.bf16.mxu0 0
        %1159 = vmatpush1.bf16.xpose.msra.mxu0 %v1156
        %1160 = vmatprep.subr.bf16.mxu0 0
        %1161 = vmatpush1.bf16.xpose.msra.mxu0 0
        %1162 = vmatprep.subr.bf16.mxu0 0
        %1163 = vmatpush1.bf16.xpose.msra.mxu0 0
        %1164 = vmatprep.subr.bf16.mxu0 0
        %1165 = vmatpush1.bf16.xpose.msra.mxu0 0
        %1166 = vmatprep.subr.bf16.mxu0 0
        %1167 = vmatpush1.bf16.xpose.msra.mxu0 0
        %1168 = vmatprep.subr.bf16.mxu0 0
        %1169 = vmatpush1.bf16.xpose.msra.mxu0 0
        %1170 = vmatprep.subr.bf16.mxu0 0
        %1171 = vmatpush1.bf16.xpose.msra.mxu0 0
        %1172 = vmatprep.subr.bf16.mxu0 0
        %1173 = vmatpush1.bf16.xpose.msra.mxu0 0
        %1174 = vmatprep.subr.bf16.mxu0 0
        %1175 = vmatpush1.bf16.xpose.msra.mxu0 0
        %1176 = vmatprep.subr.bf16.mxu0 0
        %1177 = vmatpush1.bf16.xpose.msra.mxu0 0
        %1178 = vmatprep.subr.bf16.mxu0 0
        %1179 = vmatpush1.bf16.xpose.msra.mxu0 0
        %1180 = vmatprep.subr.bf16.mxu0 0
        %1181 = vmatpush1.bf16.xpose.msra.mxu0 0
        %1182 = vmatprep.subr.bf16.mxu0 0
        %1183 = vmatpush1.bf16.xpose.msra.mxu0 0
        %1184 = vmatprep.subr.bf16.mxu0 0
        %1185 = vmatpush1.bf16.xpose.msra.mxu0 0
        %1186 = vmatprep.subr.bf16.mxu0 0
        %1187 = vmatpush1.bf16.xpose.msra.mxu0 0
        %1188 = vmatprep.subr.bf16.mxu0 0
        %1189 = vmatpush1.bf16.xpose.msra.mxu0 0
        %1190 = vmatprep.mubr.bf16.mxu0 0
        %1191 = vmatmul.mubr.bf16.gmra.mrb[0].mxu0 %v1153
        %v1192 = vpop.f32.mrb[0].mxu0
        %v1193 = vadd.f32 0.0, %v1192
        %v1194 = vpop.f32.mrb[0].mxu0
        %v1195 = vpop.f32.mrb[0].mxu0
        %v1196 = vpop.f32.mrb[0].mxu0
        %1197 = vdwg.mxu0
        %v1198 = vmul.f32 %v1193, 0.35355338
        %v1199 = vadd.f32 %v1198, %v802
        %v1200 = vsel %vm809, %v1199, -inf
        %1201 = vmax.xlane.f32.xlu0 %v1200
        %v1202 = vpop.xlane.xlu0 %1201
        %v1203 = vsub.f32 %v1199, %v1202
        %v1204 = vmul.f32 %v1203, 1.442695
        %v1205 = vpow.pop %v1204
        %v1206 = vsel %vm809, %v1205, 0.0
        %1207 = vadd.xlane.f32.xlu0 %v1206
        %v1208 = vpop.xlane.xlu0 %1207
        %v1209 = vrcp.pop %v1208
        %v1210 = vmul.f32 %v1205, %v1209
        %v1211 = vpack.c.bf16 %v1210, %v1210
        %1212 = vrot.lane.b32.xlu0 %v805, 40
        %v1213 = vpop.permute.xlu0 %1212
        %v1215 = vsel %vm809, %v1211, 0
        %v1218 = vsel %vm876, %v1213, 0
        %1220 = vmatprep.subr.bf16.mxu0 0
        %1221 = vmatpush1.bf16.msra.mxu0 %v1218
        %1222 = vmatprep.subr.bf16.mxu0 0
        %1223 = vmatpush1.bf16.msra.mxu0 0
        %1224 = vmatprep.subr.bf16.mxu0 0
        %1225 = vmatpush1.bf16.msra.mxu0 0
        %1226 = vmatprep.subr.bf16.mxu0 0
        %1227 = vmatpush1.bf16.msra.mxu0 0
        %1228 = vmatprep.subr.bf16.mxu0 0
        %1229 = vmatpush1.bf16.msra.mxu0 0
        %1230 = vmatprep.subr.bf16.mxu0 0
        %1231 = vmatpush1.bf16.msra.mxu0 0
        %1232 = vmatprep.subr.bf16.mxu0 0
        %1233 = vmatpush1.bf16.msra.mxu0 0
        %1234 = vmatprep.subr.bf16.mxu0 0
        %1235 = vmatpush1.bf16.msra.mxu0 0
        %1236 = vmatprep.subr.bf16.mxu0 0
        %1237 = vmatpush1.bf16.msra.mxu0 0
        %1238 = vmatprep.subr.bf16.mxu0 0
        %1239 = vmatpush1.bf16.msra.mxu0 0
        %1240 = vmatprep.subr.bf16.mxu0 0
        %1241 = vmatpush1.bf16.msra.mxu0 0
        %1242 = vmatprep.subr.bf16.mxu0 0
        %1243 = vmatpush1.bf16.msra.mxu0 0
        %1244 = vmatprep.subr.bf16.mxu0 0
        %1245 = vmatpush1.bf16.msra.mxu0 0
        %1246 = vmatprep.subr.bf16.mxu0 0
        %1247 = vmatpush1.bf16.msra.mxu0 0
        %1248 = vmatprep.subr.bf16.mxu0 0
        %1249 = vmatpush1.bf16.msra.mxu0 0
        %1250 = vmatprep.subr.bf16.mxu0 0
        %1251 = vmatpush1.bf16.msra.mxu0 0
        %1252 = vmatprep.mubr.bf16.mxu0 0
        %1253 = vmatmul.mubr.bf16.gmra.mrb[0].mxu0 %v1215
        %v1254 = vpop.f32.mrb[0].mxu0
        %v1255 = vadd.f32 0.0, %v1254
        %v1256 = vpop.f32.mrb[0].mxu0
        %v1257 = vpop.f32.mrb[0].mxu0
        %v1258 = vpop.f32.mrb[0].mxu0
        %1259 = vdwg.mxu0
        %v1260 = vpack.c.bf16 %v1255, %v1255
        %1262 = vrot.lane.b32.xlu0 %v1034, 8
        %v1263 = vpop.permute.xlu0 %1262
        %1265 = vrot.lane.b32.xlu0 %v1147, 16
        %v1266 = vpop.permute.xlu0 %1265
        %1268 = vrot.lane.b32.xlu0 %v1260, 24
        %v1269 = vpop.permute.xlu0 %1268
        %v1272 = vsel %vm809, %v920, %v1263
        %vm1273 = vcmask 130048
        %v1275 = vsel %vm1273, %v1272, %v1266
        %vm1276 = vcmask 195584
        %v1278 = vsel %vm1276, %v1275, %v1269
        %v1279 = vld [vmem:[%s10] sm:$0xf]
        %v1280 = vld [vmem:[%s10 + $0x4] sm:$0xf]
        %v1281 = vld [vmem:[%s10 + $0x8] sm:$0xf]
        %v1282 = vld [vmem:[%s10 + $0xc] sm:$0xf]
        %v1283 = vld [vmem:[%s11] sm:$0x1]
        %v1285 = vlaneseq
        %v1286 = vshrl.u32 %v1285, 7
        %v1287 = vsub.s32 0, %v1286
        %v1288 = vrot.slane %v1283, %v1287
        %v1294 = vunpack.c.l.b16 %v1279
        %v1295 = vunpack.c.l.b16 %v1280
        %v1296 = vunpack.c.l.b16 %v1281
        %v1297 = vunpack.c.l.b16 %v1282
        %v1298 = vpack.c.b16 %v1295, %v1294
        %v1299 = vpack.c.b16 %v1297, %v1296
        %v1302 = vsel %vm639, %v1278, 0
        %1304 = vmatprep.subr.bf16.mxu0 0
        %1305 = vmatpush1.bf16.msra.mxu0 %v1298
        %1306 = vmatprep.subr.bf16.mxu0 0
        %1307 = vmatpush1.bf16.msra.mxu0 %v1299
        %1308 = vmatprep.subr.bf16.mxu0 0
        %1309 = vmatpush1.bf16.msra.mxu0 0
        %1310 = vmatprep.subr.bf16.mxu0 0
        %1311 = vmatpush1.bf16.msra.mxu0 0
        %1312 = vmatprep.subr.bf16.mxu0 0
        %1313 = vmatpush1.bf16.msra.mxu0 0
        %1314 = vmatprep.subr.bf16.mxu0 0
        %1315 = vmatpush1.bf16.msra.mxu0 0
        %1316 = vmatprep.subr.bf16.mxu0 0
        %1317 = vmatpush1.bf16.msra.mxu0 0
        %1318 = vmatprep.subr.bf16.mxu0 0
        %1319 = vmatpush1.bf16.msra.mxu0 0
        %1320 = vmatprep.subr.bf16.mxu0 0
        %1321 = vmatpush1.bf16.msra.mxu0 0
        %1322 = vmatprep.subr.bf16.mxu0 0
        %1323 = vmatpush1.bf16.msra.mxu0 0
        %1324 = vmatprep.subr.bf16.mxu0 0
        %1325 = vmatpush1.bf16.msra.mxu0 0
        %1326 = vmatprep.subr.bf16.mxu0 0
        %1327 = vmatpush1.bf16.msra.mxu0 0
        %1328 = vmatprep.subr.bf16.mxu0 0
        %1329 = vmatpush1.bf16.msra.mxu0 0
        %1330 = vmatprep.subr.bf16.mxu0 0
        %1331 = vmatpush1.bf16.msra.mxu0 0
        %1332 = vmatprep.subr.bf16.mxu0 0
        %1333 = vmatpush1.bf16.msra.mxu0 0
        %1334 = vmatprep.subr.bf16.mxu0 0
        %1335 = vmatpush1.bf16.msra.mxu0 0
        %1336 = vmatprep.mubr.bf16.mxu0 0
        %1337 = vmatmul.mubr.bf16.gmra.mrb[0].mxu0 %v1302
        %v1338 = vpop.f32.mrb[0].mxu0
        %v1339 = vadd.f32 %v1288, %v1338
        %v1340 = vpop.f32.mrb[0].mxu0
        %v1341 = vpop.f32.mrb[0].mxu0
        %v1342 = vpop.f32.mrb[0].mxu0
        %1343 = vdwg.mxu0
        %v1344 = vadd.f32 %v636, %v1339
        %v1345 = vld [vmem:[%s12] sm:$0x1]
        %v1346 = vld [vmem:[%s13] sm:$0x1]
        %v1347 = vsel %vm639, %v1344, 0.0
        %1348 = vadd.xlane.f32.xlu0 %v1347
        %v1349 = vpop.xlane.xlu0 %1348
        %v1350 = vmul.f32 %v1349, %v643
        %v1351 = vsub.f32 %v1344, %v1350
        %v1352 = vmul.f32 %v1351, %v1351
        %v1353 = vsel %vm639, %v1352, 0.0
        %1354 = vadd.xlane.f32.xlu0 %v1353
        %v1355 = vpop.xlane.xlu0 %1354
        %v1356 = vmul.f32 %v1355, %v643
        %v1358 = vlaneseq
        %v1359 = vshrl.u32 %v1358, 7
        %v1360 = vsub.s32 0, %v1359
        %v1361 = vrot.slane %v1345, %v1360
        %v1363 = vmul.f32 %v1361, %v1351
        %v1364 = vadd.f32 %v1356, 1e-12
        %v1365 = vrcp.pop %v1364
        %v1366 = vmul.f32 %v1363, %v1365
        %v1368 = vlaneseq
        %v1369 = vshrl.u32 %v1368, 7
        %v1370 = vsub.s32 0, %v1369
        %v1371 = vrot.slane %v1346, %v1370
        %v1373 = vadd.f32 %v1366, %v1371
        %v1374 = vpack.c.bf16 %v1373, %v1373
        %v1375 = vld [vmem:[%s14] sm:$0xf]
        %v1376 = vld [vmem:[%s14 + $0x4] sm:$0xf]
        %v1377 = vld [vmem:[%s14 + $0x8] sm:$0xf]
        %v1378 = vld [vmem:[%s14 + $0xc] sm:$0xf]
        %v1379 = vld [vmem:[%s15] sm:$0x1]
        %v1381 = vlaneseq
        %v1382 = vshrl.u32 %v1381, 7
        %v1383 = vsub.s32 0, %v1382
        %v1384 = vrot.slane %v1379, %v1383
        %v1390 = vunpack.c.l.b16 %v1375
        %v1391 = vunpack.c.l.b16 %v1376
        %v1392 = vunpack.c.l.b16 %v1377
        %v1393 = vunpack.c.l.b16 %v1378
        %v1394 = vpack.c.b16 %v1391, %v1390
        %v1395 = vpack.c.b16 %v1393, %v1392
        %v1399 = vsel %vm639, %v1374, 0
        %1401 = vmatprep.subr.bf16.mxu0 0
        %1402 = vmatpush1.bf16.msra.mxu0 %v1394
        %1403 = vmatprep.subr.bf16.mxu0 0
        %1404 = vmatpush1.bf16.msra.mxu0 %v1395
        %1405 = vmatprep.subr.bf16.mxu0 0
        %1406 = vmatpush1.bf16.msra.mxu0 0
        %1407 = vmatprep.subr.bf16.mxu0 0
        %1408 = vmatpush1.bf16.msra.mxu0 0
        %1409 = vmatprep.subr.bf16.mxu0 0
        %1410 = vmatpush1.bf16.msra.mxu0 0
        %1411 = vmatprep.subr.bf16.mxu0 0
        %1412 = vmatpush1.bf16.msra.mxu0 0
        %1413 = vmatprep.subr.bf16.mxu0 0
        %1414 = vmatpush1.bf16.msra.mxu0 0
        %1415 = vmatprep.subr.bf16.mxu0 0
        %1416 = vmatpush1.bf16.msra.mxu0 0
        %1417 = vmatprep.subr.bf16.mxu0 0
        %1418 = vmatpush1.bf16.msra.mxu0 0
        %1419 = vmatprep.subr.bf16.mxu0 0
        %1420 = vmatpush1.bf16.msra.mxu0 0
        %1421 = vmatprep.subr.bf16.mxu0 0
        %1422 = vmatpush1.bf16.msra.mxu0 0
        %1423 = vmatprep.subr.bf16.mxu0 0
        %1424 = vmatpush1.bf16.msra.mxu0 0
        %1425 = vmatprep.subr.bf16.mxu0 0
        %1426 = vmatpush1.bf16.msra.mxu0 0
        %1427 = vmatprep.subr.bf16.mxu0 0
        %1428 = vmatpush1.bf16.msra.mxu0 0
        %1429 = vmatprep.subr.bf16.mxu0 0
        %1430 = vmatpush1.bf16.msra.mxu0 0
        %1431 = vmatprep.subr.bf16.mxu0 0
        %1432 = vmatpush1.bf16.msra.mxu0 0
        %1433 = vmatprep.mubr.bf16.mxu0 0
        %1434 = vmatmul.mubr.bf16.gmra.mrb[0].mxu0 %v1399
        %v1435 = vpop.f32.mrb[0].mxu0
        %v1436 = vadd.f32 %v1384, %v1435
        %v1437 = vpop.f32.mrb[0].mxu0
        %v1438 = vpop.f32.mrb[0].mxu0
        %v1439 = vpop.f32.mrb[0].mxu0
        %1440 = vdwg.mxu0
        %v1441 = vmul.f32 %v1436, 0.5
        %v1442 = vmul.f32 %v1436, 0.044715
        %v1443 = vmul.f32 %v1442, %v1436
        %v1444 = vmul.f32 %v1443, %v1436
        %v1445 = vadd.f32 %v1436, %v1444
        %v1446 = vmul.f32 %v1445, 0.7978846
        %v1447 = vtanh.pop %v1446
        %v1448 = vadd.f32 %v1447, 1.0
        %v1449 = vmul.f32 %v1441, %v1448
        %v1450 = vpack.c.bf16 %v1449, %v1449
        %v1451 = vld [vmem:[%s16] sm:$0xf]
        %v1452 = vld [vmem:[%s16 + $0x4] sm:$0xf]
        %v1453 = vld [vmem:[%s16 + $0x8] sm:$0xf]
        %v1454 = vld [vmem:[%s16 + $0xc] sm:$0xf]
        %v1455 = vld [vmem:[%s16 + $0x10] sm:$0xf]
        %v1456 = vld [vmem:[%s16 + $0x14] sm:$0xf]
        %v1457 = vld [vmem:[%s16 + $0x18] sm:$0xf]
        %v1458 = vld [vmem:[%s16 + $0x1c] sm:$0xf]
        %v1459 = vld [vmem:[%s16 + $0x20] sm:$0xf]
        %v1460 = vld [vmem:[%s16 + $0x24] sm:$0xf]
        %v1461 = vld [vmem:[%s16 + $0x28] sm:$0xf]
        %v1462 = vld [vmem:[%s16 + $0x2c] sm:$0xf]
        %v1463 = vld [vmem:[%s16 + $0x30] sm:$0xf]
        %v1464 = vld [vmem:[%s16 + $0x34] sm:$0xf]
        %v1465 = vld [vmem:[%s16 + $0x38] sm:$0xf]
        %v1466 = vld [vmem:[%s16 + $0x3c] sm:$0xf]
        %v1467 = vld [vmem:[%s17] sm:$0x1]
        %v1469 = vlaneseq
        %v1470 = vshrl.u32 %v1469, 7
        %v1471 = vsub.s32 0, %v1470
        %v1472 = vrot.slane %v1467, %v1471
        %v1490 = vunpack.c.l.b16 %v1451
        %v1491 = vunpack.c.l.b16 %v1452
        %v1492 = vunpack.c.l.b16 %v1453
        %v1493 = vunpack.c.l.b16 %v1454
        %v1494 = vunpack.c.l.b16 %v1455
        %v1495 = vunpack.c.l.b16 %v1456
        %v1496 = vunpack.c.l.b16 %v1457
        %v1497 = vunpack.c.l.b16 %v1458
        %v1498 = vunpack.c.l.b16 %v1459
        %v1499 = vunpack.c.l.b16 %v1460
        %v1500 = vunpack.c.l.b16 %v1461
        %v1501 = vunpack.c.l.b16 %v1462
        %v1502 = vunpack.c.l.b16 %v1463
        %v1503 = vunpack.c.l.b16 %v1464
        %v1504 = vunpack.c.l.b16 %v1465
        %v1505 = vunpack.c.l.b16 %v1466
        %v1506 = vpack.c.b16 %v1491, %v1490
        %v1507 = vpack.c.b16 %v1493, %v1492
        %v1508 = vpack.c.b16 %v1495, %v1494
        %v1509 = vpack.c.b16 %v1497, %v1496
        %v1510 = vpack.c.b16 %v1499, %v1498
        %v1511 = vpack.c.b16 %v1501, %v1500
        %v1512 = vpack.c.b16 %v1503, %v1502
        %v1513 = vpack.c.b16 %v1505, %v1504
        %1522 = vmatprep.subr.bf16.mxu0 0
        %1523 = vmatpush1.bf16.msra.mxu0 %v1506
        %1524 = vmatprep.subr.bf16.mxu0 0
        %1525 = vmatpush1.bf16.msra.mxu0 %v1507
        %1526 = vmatprep.subr.bf16.mxu0 0
        %1527 = vmatpush1.bf16.msra.mxu0 %v1508
        %1528 = vmatprep.subr.bf16.mxu0 0
        %1529 = vmatpush1.bf16.msra.mxu0 %v1509
        %1530 = vmatprep.subr.bf16.mxu0 0
        %1531 = vmatpush1.bf16.msra.mxu0 %v1510
        %1532 = vmatprep.subr.bf16.mxu0 0
        %1533 = vmatpush1.bf16.msra.mxu0 %v1511
        %1534 = vmatprep.subr.bf16.mxu0 0
        %1535 = vmatpush1.bf16.msra.mxu0 %v1512
        %1536 = vmatprep.subr.bf16.mxu0 0
        %1537 = vmatpush1.bf16.msra.mxu0 %v1513
        %1538 = vmatprep.subr.bf16.mxu0 0
        %1539 = vmatpush1.bf16.msra.mxu0 0
        %1540 = vmatprep.subr.bf16.mxu0 0
        %1541 = vmatpush1.bf16.msra.mxu0 0
        %1542 = vmatprep.subr.bf16.mxu0 0
        %1543 = vmatpush1.bf16.msra.mxu0 0
        %1544 = vmatprep.subr.bf16.mxu0 0
        %1545 = vmatpush1.bf16.msra.mxu0 0
        %1546 = vmatprep.subr.bf16.mxu0 0
        %1547 = vmatpush1.bf16.msra.mxu0 0
        %1548 = vmatprep.subr.bf16.mxu0 0
        %1549 = vmatpush1.bf16.msra.mxu0 0
        %1550 = vmatprep.subr.bf16.mxu0 0
        %1551 = vmatpush1.bf16.msra.mxu0 0
        %1552 = vmatprep.subr.bf16.mxu0 0
        %1553 = vmatpush1.bf16.msra.mxu0 0
        %1554 = vmatprep.mubr.bf16.mxu0 0
        %1555 = vmatmul.mubr.bf16.gmra.mrb[0].mxu0 %v1450
        %v1556 = vpop.f32.mrb[0].mxu0
        %v1557 = vadd.f32 %v1472, %v1556
        %v1558 = vpop.f32.mrb[0].mxu0
        %v1559 = vpop.f32.mrb[0].mxu0
        %v1560 = vpop.f32.mrb[0].mxu0
        %1561 = vdwg.mxu0
        %v1562 = vadd.f32 %v1344, %v1557
        %1563 = vst.msk [vmem:[%s623] sm:$0xff] %vm639, %v1562
        %s1564 = sand.u32 %s430, 1
        %s1565 = scalar_lea.sflag [#allocation4], %s1564
        %s1566 = sand.u32 %s430, 1
        %s1567 = smul.addr %s1566, 8
        %s1568 = scalar_lea.vmem [#allocation7], %s1567
        %s1569 = sand.u32 %s456, 1
        %s1570 = scalar_lea.sflag [#allocation9], %s1569
        %s1571 = sand.u32 %s456, 1
        %s1572 = smul.addr %s1571, 8
        %s1573 = scalar_lea.vmem [#allocation8], %s1572
        // Predicated region
        $region101: #{tpu_custom_call.1} parent=91 // pred_check
          %p1574 = pneg %p440
        $region102: #{tpu_custom_call.1} parent=91 // pred_check_branch
          %1576 = sbr.rel (%p1574) target = $region104
        $region103: #{tpu_custom_call.1} parent=91 // pred_region
          %s1578 = ssub.s32 128, 128
          %1579 = vsyncadd %s1565, %s1578
          %s1580 = smul.addr %s39, 128
          %s1581 = scalar_lea.hbm %s18, %s1580
          %s1583 = sshll.u32 %s1568, 4
          %s1584 = int_to_ptr.vmem [resolvable:$true] %s1583
          %1586 = dma.vmem_to_hbm [thread:$0]  %s1584, 128, %s1581, %s1565
        $region104: #{tpu_custom_call.1} parent=91 // pred_fallthru
          _
        // Predicated region
        $region105: #{tpu_custom_call.1} parent=91 // pred_check
          %p1587 = pneg %p466
        $region106: #{tpu_custom_call.1} parent=91 // pred_check_branch
          %1589 = sbr.rel (%p1587) target = $region108
        $region107: #{tpu_custom_call.1} parent=91 // pred_region
          %s1591 = ssub.s32 128, 128
          %1592 = vsyncadd %s1570, %s1591
          %s1593 = smul.addr %s39, 128
          %s1594 = scalar_lea.hbm %s19, %s1593
          %s1596 = sshll.u32 %s1573, 4
          %s1597 = int_to_ptr.vmem [resolvable:$true] %s1596
          %1599 = dma.vmem_to_hbm [thread:$0]  %s1597, 128, %s1594, %s1570
        $region108: #{tpu_custom_call.1} parent=91 // pred_fallthru
          _
      $region92: #{tpu_custom_call.1} parent=5 // pred_fallthru
        _
      %p1600 = scmp.le.s32.totalorder 2, %s34
      // Predicated region
      $region109: #{tpu_custom_call.1} parent=5 // pred_check
        %p1601 = pneg %p1600
      $region110: #{tpu_custom_call.1} parent=5 // pred_check_branch
        %1603 = sbr.rel (%p1601) target = $region112
      $region111: #{tpu_custom_call.1} parent=5 // pred_region
        %s1604 = ssub.s32 %s34, 2
        // Predicated region
        $region113: #{tpu_custom_call.1} parent=111 // pred_check
          %p1605 = pneg %p446
        $region114: #{tpu_custom_call.1} parent=111 // pred_check_branch
          %1607 = sbr.rel (%p1605) target = $region116
        $region115: #{tpu_custom_call.1} parent=111 // pred_region
          %s1608 = sand.u32 %s431, 1
          %s1609 = scalar_lea.sflag [#allocation4], %s1608
          %s1610 = sand.u32 %s431, 1
          %s1611 = smul.addr %s1610, 8
          %s1612 = scalar_lea.vmem [#allocation7], %s1611
          %1613 = dma.done %s1609, 128
        $region116: #{tpu_custom_call.1} parent=111 // pred_fallthru
          _
        // Predicated region
        $region117: #{tpu_custom_call.1} parent=111 // pred_check
          %p1614 = pneg %p472
        $region118: #{tpu_custom_call.1} parent=111 // pred_check_branch
          %1616 = sbr.rel (%p1614) target = $region120
        $region119: #{tpu_custom_call.1} parent=111 // pred_region
          %s1617 = sand.u32 %s457, 1
          %s1618 = scalar_lea.sflag [#allocation9], %s1617
          %s1619 = sand.u32 %s457, 1
          %s1620 = smul.addr %s1619, 8
          %s1621 = scalar_lea.vmem [#allocation8], %s1620
          %1622 = dma.done %s1618, 128
        $region120: #{tpu_custom_call.1} parent=111 // pred_fallthru
          _
      $region112: #{tpu_custom_call.1} parent=5 // pred_fallthru
        _
    $region6: #{tpu_custom_call.1} parent=1 // loop_footer
      %s38 = sadd.s32 1, %s34
    $region7: #{tpu_custom_call.1} parent=1 // loop_footer_branch
      %33 = sbr.rel target = $region3
    $region8: #{tpu_custom_call.1} parent=1 // loop_exit
      _
    %1623 = vsyncpa [#allocation3], 1
    %s1624 = scalar_lea.sflag [#allocation3], 1
    %1625 = vsyncpa %s1624, 1
    %1626 = vsyncpa [#allocation6], 1
    %1627 = vsyncpa [#allocation4], 1
    %s1628 = scalar_lea.sflag [#allocation4], 1
    %1629 = vsyncpa %s1628, 1
    %1630 = vsyncpa [#allocation9], 1
    %s1631 = scalar_lea.sflag [#allocation9], 1
    %1632 = vsyncpa %s1631, 1

</llo_original>
